<compile_context>
chip_gen: v5e
topology: v5e:2x2
jax: 0.10.0
libtpu: 0.0.40
codegen_flags: <defaults>
</compile_context>

<pallas_src>
import functools
import math

import jax
import jax.numpy as jnp
from jax.experimental import pallas as pl
from jax.experimental.pallas import tpu as pltpu


def _layernorm(x, w, b, eps=1e-5):
    mu = jnp.mean(x, axis=-1, keepdims=True)
    xc = x - mu
    var = jnp.mean(xc * xc, axis=-1, keepdims=True)
    return xc * jax.lax.rsqrt(var + eps) * w + b


def _erf_poly(x):
    # Abramowitz & Stegun 7.1.26 rational approximation, |err| <= 1.5e-7.
    # Built only from exp / mul / add / where, which lower cleanly in Mosaic.
    a1, a2, a3, a4, a5 = 0.254829592, -0.284496736, 1.421413741, -1.453152027, 1.061405429
    p = 0.3275911
    ax = jnp.abs(x)
    t = 1.0 / (1.0 + p * ax)
    poly = ((((a5 * t + a4) * t + a3) * t + a2) * t + a1) * t
    y = 1.0 - poly * jnp.exp(-ax * ax)
    return jnp.where(x >= 0, y, -y)


def _gelu_erf_kernel(x):
    # erf-form GELU (matches torch.nn.functional.gelu default) using the polynomial erf.
    return 0.5 * x * (1.0 + _erf_poly(x * 0.7071067811865476))


def _gelu_erf_ref(x):
    return 0.5 * x * (1.0 + jax.lax.erf(x * 0.7071067811865476))


def block_kernel(x_ref,
                 ln1_w_ref, ln1_b_ref,
                 w_q_ref, b_q_ref,
                 w_k_ref, b_k_ref,
                 w_v_ref, b_v_ref,
                 w_aproj_ref, b_aproj_ref,
                 ln2_w_ref, ln2_b_ref,
                 w_fc_ref, b_fc_ref,
                 w_mproj_ref, b_mproj_ref,
                 o_ref,
                 hln_sc, k_sc, v_sc,
                 *, n_head, q_block):
    qi = pl.program_id(1)
    T = x_ref.shape[1]
    C = x_ref.shape[2]
    hd = C // n_head
    scale = 1.0 / math.sqrt(hd)
    f32, bf16 = jnp.float32, jnp.bfloat16

    # ---- once per batch element: LN1 over whole sequence + K/V projections ----
    @pl.when(qi == 0)
    def _():
        xf = x_ref[0]                                               # (T, C) f32
        hf = _layernorm(xf, ln1_w_ref[0], ln1_b_ref[0]).astype(bf16)
        hln_sc[...] = hf                                            # cached post-LN1 acts
        k2d = jnp.dot(hf, w_k_ref[...], preferred_element_type=f32) + b_k_ref[0]
        k_sc[...] = k2d.astype(bf16)                                # lane-dense store
        v2d = jnp.dot(hf, w_v_ref[...], preferred_element_type=f32) + b_v_ref[0]
        v_sc[...] = v2d.astype(bf16)

    # ---- query-row tile ----
    row0 = pl.multiple_of(qi * q_block, q_block)
    xq = x_ref[0, pl.ds(row0, q_block), :]                          # (TQ, C) f32 residual
    hq = hln_sc[pl.ds(row0, q_block), :]                            # (TQ, C) bf16 cached LN1
    q2d = jnp.dot(hq, w_q_ref[...], preferred_element_type=f32) + b_q_ref[0]
    q2d = q2d * scale                                               # fold 1/sqrt(hd) into q

    # ---- attention + output projection, unrolled over heads ----
    # Each per-head dot is the same MXU work the batched einsum would lower to; fusing the
    # head merge into the w_aproj matmul keeps the output lane-dense (no vst.msk stores).
    nt_dims = (((1,), (1,)), ((), ()))                              # q @ k^T (NT matmul)
    att = jnp.zeros((q_block, C), dtype=f32)
    for h in range(n_head):
        q_h = q2d[:, h * hd:(h + 1) * hd].astype(bf16)              # (TQ, hd)
        k_h = k_sc[:, h * hd:(h + 1) * hd]                          # (T, hd) bf16
        v_h = v_sc[:, h * hd:(h + 1) * hd]                          # (T, hd) bf16
        s = jax.lax.dot_general(q_h, k_h, nt_dims,
                                preferred_element_type=f32)         # (TQ, T) f32
        s = s - jnp.max(s, axis=-1, keepdims=True)
        p = jnp.exp(s)
        # approx reciprocal: ~1e-3 rel err, acceptable for inference (documented above).
        p = p * pl.reciprocal(jnp.sum(p, axis=-1, keepdims=True), approx=True)
        # TODO(synk): attention dropout skipped (identity at inference / p = 0).
        y_h = jnp.dot(p.astype(bf16), v_h, preferred_element_type=f32)      # (TQ, hd)
        att = att + jnp.dot(y_h.astype(bf16), w_aproj_ref[h],
                            preferred_element_type=f32)                     # (TQ, C)
    att = att + b_aproj_ref[0]

    x1 = xq + att                                                   # f32 residual

    # ---- MLP branch ----
    h2 = _layernorm(x1, ln2_w_ref[0], ln2_b_ref[0]).astype(bf16)
    ff = jnp.dot(h2, w_fc_ref[...], preferred_element_type=f32) + b_fc_ref[0]
    ff = _gelu_erf_kernel(ff).astype(bf16)
    ff = jnp.dot(ff, w_mproj_ref[...], preferred_element_type=f32) + b_mproj_ref[0]
    # TODO(synk): MLP / residual dropout skipped (identity at inference / p = 0).

    o_ref[0] = x1 + ff


def _vmem_limit_bytes():
    # Generation-aware: ~48 MiB on v7x (64 MiB physical), ~96 MiB on v5e/v6e (128 MiB).
    try:
        cap = int(pltpu.get_tpu_info().vmem_capacity_bytes)
    except Exception:
        cap = 128 * 1024 * 1024
    return max(32 * 1024 * 1024, int(cap * 0.75))


def transformer_block(x, params, n_head, q_block=None):
    B, T, C = x.shape
    assert C % n_head == 0
    hd = C // n_head
    assert hd % 8 == 0
    if q_block is None:
        # 256 fills the 256-wide v6e/v7x MXU M-dim; pass q_block=128 explicitly on v5e.
        q_block = min(T, 256)
    q_block = min(q_block, T)
    assert T % q_block == 0
    assert q_block % 16 == 0 or q_block == T   # bf16 sublane packing

    f32, bf16 = jnp.float32, jnp.bfloat16
    w_attn = params["w_attn"]
    b_attn = params["b_attn"]

    # Weights bf16 (MXU-rated, half weight residency); biases / LN params f32.
    # QKV weights pre-split, w_aproj pre-reshaped head-major -> no in-kernel ref slicing.
    param_list = [
        params["ln1_w"].astype(f32), params["ln1_b"].astype(f32),
        w_attn[:, :C].astype(bf16),        b_attn[:, :C].astype(f32),
        w_attn[:, C:2 * C].astype(bf16),   b_attn[:, C:2 * C].astype(f32),
        w_attn[:, 2 * C:].astype(bf16),    b_attn[:, 2 * C:].astype(f32),
        params["w_aproj"].astype(bf16).reshape(n_head, hd, C),
        params["b_aproj"].astype(f32),
        params["ln2_w"].astype(f32), params["ln2_b"].astype(f32),
        params["w_fc"].astype(bf16), params["b_fc"].astype(f32),
        params["w_mproj"].astype(bf16), params["b_mproj"].astype(f32),
    ]

    # NOTE: the x -> output alias is only safe because x's BlockSpec index is constant
    # over the qi axis (fetched once per batch element, never re-DMA'd after the output
    # rows of the same batch element are written back).  Do not tile x over qi.
    in_specs = [pl.BlockSpec((1, T, C), lambda b, qi: (b, 0, 0))]
    for p in param_list:
        zeros = (0,) * p.ndim
        in_specs.append(pl.BlockSpec(p.shape, lambda b, qi, _z=zeros: _z))

    grid = (B, T // q_block)

    return pl.pallas_call(
        functools.partial(block_kernel, n_head=n_head, q_block=q_block),
        out_shape=jax.ShapeDtypeStruct((B, T, C), f32),
        grid_spec=pltpu.PrefetchScalarGridSpec(
            num_scalar_prefetch=0,
            grid=grid,
            in_specs=in_specs,
            out_specs=pl.BlockSpec((1, q_block, C), lambda b, qi: (b, qi, 0)),
            scratch_shapes=[
                pltpu.VMEM((T, C), bf16),   # cached post-LN1 activations
                pltpu.VMEM((T, C), bf16),   # K (per batch element)
                pltpu.VMEM((T, C), bf16),   # V (per batch element)
            ],
        ),
        input_output_aliases={0: 0},
        compiler_params=pltpu.CompilerParams(
            # Batch axis "parallel": shards across v7x's 2 TensorCores when B >= 2
            # (single-core v5e/v6e unaffected).  qi is a sequential ("arbitrary") loop
            # because K/V/LN1 scratch is reused across query tiles of the same batch.
            dimension_semantics=("parallel", "arbitrary"),
            vmem_limit_bytes=_vmem_limit_bytes(),
        ),
    )(x.astype(f32), *param_list)


def reference_block(x, params, n_head):
    """Pure-JAX f32 reference mirroring the PyTorch forward (dropout = identity)."""
    B, T, C = x.shape
    hd = C // n_head
    h = _layernorm(x, params["ln1_w"][0], params["ln1_b"][0])
    qkv = h @ params["w_attn"] + params["b_attn"][0]
    q, k, v = jnp.split(qkv, 3, axis=-1)
    q = q.reshape(B, T, n_head, hd).transpose(0, 2, 1, 3)
    k = k.reshape(B, T, n_head, hd).transpose(0, 2, 1, 3)
    v = v.reshape(B, T, n_head, hd).transpose(0, 2, 1, 3)
    att = (q @ jnp.swapaxes(k, -2, -1)) / jnp.sqrt(jnp.float32(hd))
    att = jax.nn.softmax(att, axis=-1)
    y = (att @ v).transpose(0, 2, 1, 3).reshape(B, T, C)
    y = y @ params["w_aproj"] + params["b_aproj"][0]
    x1 = x + y
    h2 = _layernorm(x1, params["ln2_w"][0], params["ln2_b"][0])
    ff = _gelu_erf_ref(h2 @ params["w_fc"] + params["b_fc"][0])
    ff = ff @ params["w_mproj"] + params["b_mproj"][0]
    return x1 + ff


def init_params(key, n_embd):
    C = n_embd
    ks = jax.random.split(key, 8)
    s = 0.02
    return {
        "ln1_w": jnp.ones((1, C), jnp.float32),
        "ln1_b": jnp.zeros((1, C), jnp.float32),
        "w_attn": s * jax.random.normal(ks[0], (C, 3 * C), jnp.float32),
        "b_attn": s * jax.random.normal(ks[1], (1, 3 * C), jnp.float32),
        "w_aproj": s * jax.random.normal(ks[2], (C, C), jnp.float32),
        "b_aproj": s * jax.random.normal(ks[3], (1, C), jnp.float32),
        "ln2_w": jnp.ones((1, C), jnp.float32),
        "ln2_b": jnp.zeros((1, C), jnp.float32),
        "w_fc": s * jax.random.normal(ks[4], (C, 4 * C), jnp.float32),
        "b_fc": s * jax.random.normal(ks[5], (1, 4 * C), jnp.float32),
        "w_mproj": s * jax.random.normal(ks[6], (4 * C, C), jnp.float32),
        "b_mproj": s * jax.random.normal(ks[7], (1, C), jnp.float32),
    }


if __name__ == "__main__":
    # small but non-trivial: 2 batch elements, 2 query tiles each, 4 heads (hd=32).
    B, T, C, n_head = 2, 128, 128, 4

    key = jax.random.PRNGKey(0)
    kx, kp = jax.random.split(key)
    x = jax.random.normal(kx, (B, T, C), jnp.float32)
    params = init_params(kp, C)

    # Compute the reference BEFORE the kernel: the pallas_call aliases x's buffer into
    # the output (input_output_aliases={0: 0}), which may donate/invalidate x.
    ref = jax.block_until_ready(reference_block(x, params, n_head))

    out = transformer_block(x, params, n_head, q_block=64)
    out = jax.block_until_ready(out)

    assert out.shape == (B, T, C)
    assert bool(jnp.all(jnp.isfinite(out)))
    err = float(jnp.max(jnp.abs(out - ref)))
    assert err < 2e-2, f"max abs err vs f32 reference: {err}"

    print("KERNEL_OK")
</pallas_src>

<mosaic_0001>
module attributes {stable_mosaic.version = 11 : i64} {
  func.func @block_kernel(%arg0: i32, %arg1: i32, %arg2: memref<1x128x128xf32, #tpu.memory_space<vmem>>, %arg3: memref<1x128xf32, #tpu.memory_space<vmem>>, %arg4: memref<1x128xf32, #tpu.memory_space<vmem>>, %arg5: memref<128x128xbf16, #tpu.memory_space<vmem>>, %arg6: memref<1x128xf32, #tpu.memory_space<vmem>>, %arg7: memref<128x128xbf16, #tpu.memory_space<vmem>>, %arg8: memref<1x128xf32, #tpu.memory_space<vmem>>, %arg9: memref<128x128xbf16, #tpu.memory_space<vmem>>, %arg10: memref<1x128xf32, #tpu.memory_space<vmem>>, %arg11: memref<4x32x128xbf16, #tpu.memory_space<vmem>>, %arg12: memref<1x128xf32, #tpu.memory_space<vmem>>, %arg13: memref<1x128xf32, #tpu.memory_space<vmem>>, %arg14: memref<1x128xf32, #tpu.memory_space<vmem>>, %arg15: memref<128x512xbf16, #tpu.memory_space<vmem>>, %arg16: memref<1x512xf32, #tpu.memory_space<vmem>>, %arg17: memref<512x128xbf16, #tpu.memory_space<vmem>>, %arg18: memref<1x128xf32, #tpu.memory_space<vmem>>, %arg19: memref<1x64x128xf32, #tpu.memory_space<vmem>>, %arg20: memref<128x128xbf16, #tpu.memory_space<vmem>>, %arg21: memref<128x128xbf16, #tpu.memory_space<vmem>>, %arg22: memref<128x128xbf16, #tpu.memory_space<vmem>>) attributes {dimension_semantics = [#tpu.dimension_semantics<parallel>, #tpu.dimension_semantics<arbitrary>], iteration_bounds = array<i64: 2, 2>, scalar_prefetch = 0 : i64, scratch_operands = 3 : i64, tpu.core_type = #tpu.core_type<tc>, window_params = [{transform_indices = @transform_0, window_bounds = array<i64: 1, 128, 128>}, {pipeline_mode = #tpu.pipeline_mode<synchronous>, transform_indices = @transform_1, window_bounds = array<i64: 1, 128>}, {pipeline_mode = #tpu.pipeline_mode<synchronous>, transform_indices = @transform_2, window_bounds = array<i64: 1, 128>}, {pipeline_mode = #tpu.pipeline_mode<synchronous>, transform_indices = @transform_3, window_bounds = array<i64: 128, 128>}, {pipeline_mode = #tpu.pipeline_mode<synchronous>, transform_indices = @transform_4, window_bounds = array<i64: 1, 128>}, {pipeline_mode = #tpu.pipeline_mode<synchronous>, transform_indices = @transform_5, window_bounds = array<i64: 128, 128>}, {pipeline_mode = #tpu.pipeline_mode<synchronous>, transform_indices = @transform_6, window_bounds = array<i64: 1, 128>}, {pipeline_mode = #tpu.pipeline_mode<synchronous>, transform_indices = @transform_7, window_bounds = array<i64: 128, 128>}, {pipeline_mode = #tpu.pipeline_mode<synchronous>, transform_indices = @transform_8, window_bounds = array<i64: 1, 128>}, {pipeline_mode = #tpu.pipeline_mode<synchronous>, transform_indices = @transform_9, window_bounds = array<i64: 4, 32, 128>}, {pipeline_mode = #tpu.pipeline_mode<synchronous>, transform_indices = @transform_10, window_bounds = array<i64: 1, 128>}, {pipeline_mode = #tpu.pipeline_mode<synchronous>, transform_indices = @transform_11, window_bounds = array<i64: 1, 128>}, {pipeline_mode = #tpu.pipeline_mode<synchronous>, transform_indices = @transform_12, window_bounds = array<i64: 1, 128>}, {pipeline_mode = #tpu.pipeline_mode<synchronous>, transform_indices = @transform_13, window_bounds = array<i64: 128, 512>}, {pipeline_mode = #tpu.pipeline_mode<synchronous>, transform_indices = @transform_14, window_bounds = array<i64: 1, 512>}, {pipeline_mode = #tpu.pipeline_mode<synchronous>, transform_indices = @transform_15, window_bounds = array<i64: 512, 128>}, {pipeline_mode = #tpu.pipeline_mode<synchronous>, transform_indices = @transform_16, window_bounds = array<i64: 1, 128>}, {transform_indices = @transform_17, window_bounds = array<i64: 1, 64, 128>}]} {
    %c0_i32 = arith.constant 0 : i32
    %0 = arith.cmpi eq, %arg1, %c0_i32 : i32
    %1 = arith.extui %0 : i1 to i32
    %c0_i32_0 = arith.constant 0 : i32
    %2 = arith.cmpi ne, %1, %c0_i32_0 : i32
    scf.if %2 {
      %c0_90 = arith.constant 0 : index
      %c0_91 = arith.constant 0 : index
      %c0_92 = arith.constant 0 : index
      %200 = vector.load %arg2[%c0_90, %c0_91, %c0_92] : memref<1x128x128xf32, #tpu.memory_space<vmem>>, vector<1x128x128xf32>
      %201 = vector.shape_cast %200 : vector<1x128x128xf32> to vector<128x128xf32>
      %c0_93 = arith.constant 0 : index
      %c0_94 = arith.constant 0 : index
      %202 = vector.load %arg3[%c0_93, %c0_94] : memref<1x128xf32, #tpu.memory_space<vmem>>, vector<1x128xf32>
      %203 = vector.shape_cast %202 : vector<1x128xf32> to vector<128xf32>
      %c0_95 = arith.constant 0 : index
      %c0_96 = arith.constant 0 : index
      %204 = vector.load %arg4[%c0_95, %c0_96] : memref<1x128xf32, #tpu.memory_space<vmem>>, vector<1x128xf32>
      %205 = vector.shape_cast %204 : vector<1x128xf32> to vector<128xf32>
      %cst_97 = arith.constant dense<0.000000e+00> : vector<128xf32>
      %206 = vector.multi_reduction <add>, %201, %cst_97 [1] : vector<128x128xf32> to vector<128xf32>
      %207 = vector.shape_cast %206 : vector<128xf32> to vector<128x1xf32>
      %cst_98 = arith.constant 1.280000e+02 : f32
      %208 = vector.broadcast %cst_98 : f32 to vector<128x1xf32>
      %209 = arith.divf %207, %208 : vector<128x1xf32>
      %210 = vector.broadcast %209 : vector<128x1xf32> to vector<128x128xf32>
      %211 = arith.subf %201, %210 : vector<128x128xf32>
      %212 = arith.mulf %211, %211 : vector<128x128xf32>
      %cst_99 = arith.constant dense<0.000000e+00> : vector<128xf32>
      %213 = vector.multi_reduction <add>, %212, %cst_99 [1] : vector<128x128xf32> to vector<128xf32>
      %214 = vector.shape_cast %213 : vector<128xf32> to vector<128x1xf32>
      %cst_100 = arith.constant 1.280000e+02 : f32
      %215 = vector.broadcast %cst_100 : f32 to vector<128x1xf32>
      %216 = arith.divf %214, %215 : vector<128x1xf32>
      %cst_101 = arith.constant 9.99999974E-6 : f32
      %217 = vector.broadcast %cst_101 : f32 to vector<128x1xf32>
      %218 = arith.addf %216, %217 : vector<128x1xf32>
      %219 = math.rsqrt %218 : vector<128x1xf32>
      %220 = vector.broadcast %219 : vector<128x1xf32> to vector<128x128xf32>
      %221 = arith.mulf %211, %220 : vector<128x128xf32>
      %222 = vector.shape_cast %203 : vector<128xf32> to vector<1x128xf32>
      %223 = vector.broadcast %222 : vector<1x128xf32> to vector<128x128xf32>
      %224 = arith.mulf %221, %223 : vector<128x128xf32>
      %225 = vector.shape_cast %205 : vector<128xf32> to vector<1x128xf32>
      %226 = vector.broadcast %225 : vector<1x128xf32> to vector<128x128xf32>
      %227 = arith.addf %224, %226 : vector<128x128xf32>
      %228 = arith.truncf %227 : vector<128x128xf32> to vector<128x128xbf16>
      %c0_102 = arith.constant 0 : index
      %c0_103 = arith.constant 0 : index
      %229 = vector.load %arg20[%c0_102, %c0_103] : memref<128x128xbf16, #tpu.memory_space<vmem>>, vector<128x128xbf16>
      tpu.vector_store %arg20[%c0_102, %c0_103], %228 {strides = array<i32>} : memref<128x128xbf16, #tpu.memory_space<vmem>>, vector<128x128xbf16>,
      %c0_104 = arith.constant 0 : index
      %c0_105 = arith.constant 0 : index
      %230 = vector.load %arg7[%c0_104, %c0_105] : memref<128x128xbf16, #tpu.memory_space<vmem>>, vector<128x128xbf16>
      %cst_106 = arith.constant dense<0.000000e+00> : vector<128x128xf32>
      %231 = tpu.matmul %228, %230, %cst_106 {dimension_numbers = #tpu.dot_dimension_numbers<[1], [0], [0], [1], [0, 0, 1, 1], [], []>} : vector<128x128xbf16>, vector<128x128xbf16>, vector<128x128xf32> -> vector<128x128xf32>
      %c0_107 = arith.constant 0 : index
      %c0_108 = arith.constant 0 : index
      %232 = vector.load %arg8[%c0_107, %c0_108] : memref<1x128xf32, #tpu.memory_space<vmem>>, vector<1x128xf32>
      %233 = vector.shape_cast %232 : vector<1x128xf32> to vector<128xf32>
      %234 = vector.shape_cast %233 : vector<128xf32> to vector<1x128xf32>
      %235 = vector.broadcast %234 : vector<1x128xf32> to vector<128x128xf32>
      %236 = arith.addf %231, %235 : vector<128x128xf32>
      %237 = arith.truncf %236 : vector<128x128xf32> to vector<128x128xbf16>
      %c0_109 = arith.constant 0 : index
      %c0_110 = arith.constant 0 : index
      %238 = vector.load %arg21[%c0_109, %c0_110] : memref<128x128xbf16, #tpu.memory_space<vmem>>, vector<128x128xbf16>
      tpu.vector_store %arg21[%c0_109, %c0_110], %237 {strides = array<i32>} : memref<128x128xbf16, #tpu.memory_space<vmem>>, vector<128x128xbf16>,
      %c0_111 = arith.constant 0 : index
      %c0_112 = arith.constant 0 : index
      %239 = vector.load %arg9[%c0_111, %c0_112] : memref<128x128xbf16, #tpu.memory_space<vmem>>, vector<128x128xbf16>
      %cst_113 = arith.constant dense<0.000000e+00> : vector<128x128xf32>
      %240 = tpu.matmul %228, %239, %cst_113 {dimension_numbers = #tpu.dot_dimension_numbers<[1], [0], [0], [1], [0, 0, 1, 1], [], []>} : vector<128x128xbf16>, vector<128x128xbf16>, vector<128x128xf32> -> vector<128x128xf32>
      %c0_114 = arith.constant 0 : index
      %c0_115 = arith.constant 0 : index
      %241 = vector.load %arg10[%c0_114, %c0_115] : memref<1x128xf32, #tpu.memory_space<vmem>>, vector<1x128xf32>
      %242 = vector.shape_cast %241 : vector<1x128xf32> to vector<128xf32>
      %243 = vector.shape_cast %242 : vector<128xf32> to vector<1x128xf32>
      %244 = vector.broadcast %243 : vector<1x128xf32> to vector<128x128xf32>
      %245 = arith.addf %240, %244 : vector<128x128xf32>
      %246 = arith.truncf %245 : vector<128x128xf32> to vector<128x128xbf16>
      %c0_116 = arith.constant 0 : index
      %c0_117 = arith.constant 0 : index
      %247 = vector.load %arg22[%c0_116, %c0_117] : memref<128x128xbf16, #tpu.memory_space<vmem>>, vector<128x128xbf16>
      tpu.vector_store %arg22[%c0_116, %c0_117], %246 {strides = array<i32>} : memref<128x128xbf16, #tpu.memory_space<vmem>>, vector<128x128xbf16>,
    } else {
    }
    %c64_i32 = arith.constant 64 : i32
    %3 = arith.muli %arg1, %c64_i32 : i32
    %4 = tpu.assume_multiple %3, 64 : i32
    %c0 = arith.constant 0 : index
    %5 = arith.index_cast %4 : i32 to index
    %c0_1 = arith.constant 0 : index
    %6 = vector.load %arg2[%c0, %5, %c0_1] : memref<1x128x128xf32, #tpu.memory_space<vmem>>, vector<1x64x128xf32>
    %7 = vector.shape_cast %6 : vector<1x64x128xf32> to vector<64x128xf32>
    %8 = arith.index_cast %4 : i32 to index
    %c0_2 = arith.constant 0 : index
    %9 = vector.load %arg20[%8, %c0_2] : memref<128x128xbf16, #tpu.memory_space<vmem>>, vector<64x128xbf16>
    %c0_3 = arith.constant 0 : index
    %c0_4 = arith.constant 0 : index
    %10 = vector.load %arg5[%c0_3, %c0_4] : memref<128x128xbf16, #tpu.memory_space<vmem>>, vector<128x128xbf16>
    %cst = arith.constant dense<0.000000e+00> : vector<64x128xf32>
    %11 = tpu.matmul %9, %10, %cst {dimension_numbers = #tpu.dot_dimension_numbers<[1], [0], [0], [1], [0, 0, 1, 1], [], []>} : vector<64x128xbf16>, vector<128x128xbf16>, vector<64x128xf32> -> vector<64x128xf32>
    %c0_5 = arith.constant 0 : index
    %c0_6 = arith.constant 0 : index
    %12 = vector.load %arg6[%c0_5, %c0_6] : memref<1x128xf32, #tpu.memory_space<vmem>>, vector<1x128xf32>
    %13 = vector.shape_cast %12 : vector<1x128xf32> to vector<128xf32>
    %14 = vector.shape_cast %13 : vector<128xf32> to vector<1x128xf32>
    %15 = vector.broadcast %14 : vector<1x128xf32> to vector<64x128xf32>
    %16 = arith.addf %11, %15 : vector<64x128xf32>
    %cst_7 = arith.constant 0.176776692 : f32
    %17 = vector.broadcast %cst_7 : f32 to vector<64x128xf32>
    %18 = arith.mulf %16, %17 : vector<64x128xf32>
    %cst_8 = arith.constant 0.000000e+00 : f32
    %19 = vector.broadcast %cst_8 : f32 to vector<64x128xf32>
    %20 = vector.extract_strided_slice %18 {offsets = [0, 0], sizes = [64, 32], strides = [1, 1]} : vector<64x128xf32> to vector<64x32xf32>
    %21 = arith.truncf %20 : vector<64x32xf32> to vector<64x32xbf16>
    %c0_9 = arith.constant 0 : index
    %c0_10 = arith.constant 0 : index
    %22 = vector.load %arg21[%c0_9, %c0_10] : memref<128x128xbf16, #tpu.memory_space<vmem>>, vector<128x32xbf16>
    %c0_11 = arith.constant 0 : index
    %c0_12 = arith.constant 0 : index
    %23 = vector.load %arg22[%c0_11, %c0_12] : memref<128x128xbf16, #tpu.memory_space<vmem>>, vector<128x32xbf16>
    %cst_13 = arith.constant dense<0.000000e+00> : vector<64x128xf32>
    %24 = tpu.matmul %21, %22, %cst_13 {dimension_numbers = #tpu.dot_dimension_numbers<[1], [1], [0], [0], [0, 0, 1, 0], [], []>} : vector<64x32xbf16>, vector<128x32xbf16>, vector<64x128xf32> -> vector<64x128xf32>
    %cst_14 = arith.constant dense<0xFF800000> : vector<64xf32>
    %25 = vector.multi_reduction <maximumf>, %24, %cst_14 [1] : vector<64x128xf32> to vector<64xf32>
    %26 = vector.shape_cast %25 : vector<64xf32> to vector<64x1xf32>
    %27 = vector.broadcast %26 : vector<64x1xf32> to vector<64x128xf32>
    %28 = arith.subf %24, %27 : vector<64x128xf32>
    %29 = math.exp %28 : vector<64x128xf32>
    %cst_15 = arith.constant dense<0.000000e+00> : vector<64xf32>
    %30 = vector.multi_reduction <add>, %29, %cst_15 [1] : vector<64x128xf32> to vector<64xf32>
    %31 = vector.shape_cast %30 : vector<64xf32> to vector<64x1xf32>
    %32 = tpu.reciprocal %31 {approx = true} : vector<64x1xf32> -> vector<64x1xf32>
    %33 = vector.broadcast %32 : vector<64x1xf32> to vector<64x128xf32>
    %34 = arith.mulf %29, %33 : vector<64x128xf32>
    %35 = arith.truncf %34 : vector<64x128xf32> to vector<64x128xbf16>
    %cst_16 = arith.constant dense<0.000000e+00> : vector<64x32xf32>
    %36 = tpu.matmul %35, %23, %cst_16 {dimension_numbers = #tpu.dot_dimension_numbers<[1], [0], [0], [1], [0, 0, 1, 1], [], []>} : vector<64x128xbf16>, vector<128x32xbf16>, vector<64x32xf32> -> vector<64x32xf32>
    %37 = arith.truncf %36 : vector<64x32xf32> to vector<64x32xbf16>
    %c0_17 = arith.constant 0 : index
    %c0_18 = arith.constant 0 : index
    %c0_19 = arith.constant 0 : index
    %38 = vector.load %arg11[%c0_17, %c0_18, %c0_19] : memref<4x32x128xbf16, #tpu.memory_space<vmem>>, vector<1x32x128xbf16>
    %39 = vector.shape_cast %38 : vector<1x32x128xbf16> to vector<32x128xbf16>
    %cst_20 = arith.constant dense<0.000000e+00> : vector<64x128xf32>
    %40 = tpu.matmul %37, %39, %cst_20 {dimension_numbers = #tpu.dot_dimension_numbers<[1], [0], [0], [1], [0, 0, 1, 1], [], []>} : vector<64x32xbf16>, vector<32x128xbf16>, vector<64x128xf32> -> vector<64x128xf32>
    %41 = arith.addf %19, %40 : vector<64x128xf32>
    %42 = vector.extract_strided_slice %18 {offsets = [0, 32], sizes = [64, 32], strides = [1, 1]} : vector<64x128xf32> to vector<64x32xf32>
    %43 = arith.truncf %42 : vector<64x32xf32> to vector<64x32xbf16>
    %c0_21 = arith.constant 0 : index
    %c32 = arith.constant 32 : index
    %44 = vector.load %arg21[%c0_21, %c32] : memref<128x128xbf16, #tpu.memory_space<vmem>>, vector<128x32xbf16>
    %c0_22 = arith.constant 0 : index
    %c32_23 = arith.constant 32 : index
    %45 = vector.load %arg22[%c0_22, %c32_23] : memref<128x128xbf16, #tpu.memory_space<vmem>>, vector<128x32xbf16>
    %cst_24 = arith.constant dense<0.000000e+00> : vector<64x128xf32>
    %46 = tpu.matmul %43, %44, %cst_24 {dimension_numbers = #tpu.dot_dimension_numbers<[1], [1], [0], [0], [0, 0, 1, 0], [], []>} : vector<64x32xbf16>, vector<128x32xbf16>, vector<64x128xf32> -> vector<64x128xf32>
    %cst_25 = arith.constant dense<0xFF800000> : vector<64xf32>
    %47 = vector.multi_reduction <maximumf>, %46, %cst_25 [1] : vector<64x128xf32> to vector<64xf32>
    %48 = vector.shape_cast %47 : vector<64xf32> to vector<64x1xf32>
    %49 = vector.broadcast %48 : vector<64x1xf32> to vector<64x128xf32>
    %50 = arith.subf %46, %49 : vector<64x128xf32>
    %51 = math.exp %50 : vector<64x128xf32>
    %cst_26 = arith.constant dense<0.000000e+00> : vector<64xf32>
    %52 = vector.multi_reduction <add>, %51, %cst_26 [1] : vector<64x128xf32> to vector<64xf32>
    %53 = vector.shape_cast %52 : vector<64xf32> to vector<64x1xf32>
    %54 = tpu.reciprocal %53 {approx = true} : vector<64x1xf32> -> vector<64x1xf32>
    %55 = vector.broadcast %54 : vector<64x1xf32> to vector<64x128xf32>
    %56 = arith.mulf %51, %55 : vector<64x128xf32>
    %57 = arith.truncf %56 : vector<64x128xf32> to vector<64x128xbf16>
    %cst_27 = arith.constant dense<0.000000e+00> : vector<64x32xf32>
    %58 = tpu.matmul %57, %45, %cst_27 {dimension_numbers = #tpu.dot_dimension_numbers<[1], [0], [0], [1], [0, 0, 1, 1], [], []>} : vector<64x128xbf16>, vector<128x32xbf16>, vector<64x32xf32> -> vector<64x32xf32>
    %59 = arith.truncf %58 : vector<64x32xf32> to vector<64x32xbf16>
    %c1 = arith.constant 1 : index
    %c0_28 = arith.constant 0 : index
    %c0_29 = arith.constant 0 : index
    %60 = vector.load %arg11[%c1, %c0_28, %c0_29] : memref<4x32x128xbf16, #tpu.memory_space<vmem>>, vector<1x32x128xbf16>
    %61 = vector.shape_cast %60 : vector<1x32x128xbf16> to vector<32x128xbf16>
    %cst_30 = arith.constant dense<0.000000e+00> : vector<64x128xf32>
    %62 = tpu.matmul %59, %61, %cst_30 {dimension_numbers = #tpu.dot_dimension_numbers<[1], [0], [0], [1], [0, 0, 1, 1], [], []>} : vector<64x32xbf16>, vector<32x128xbf16>, vector<64x128xf32> -> vector<64x128xf32>
    %63 = arith.addf %41, %62 : vector<64x128xf32>
    %64 = vector.extract_strided_slice %18 {offsets = [0, 64], sizes = [64, 32], strides = [1, 1]} : vector<64x128xf32> to vector<64x32xf32>
    %65 = arith.truncf %64 : vector<64x32xf32> to vector<64x32xbf16>
    %c0_31 = arith.constant 0 : index
    %c64 = arith.constant 64 : index
    %66 = vector.load %arg21[%c0_31, %c64] : memref<128x128xbf16, #tpu.memory_space<vmem>>, vector<128x32xbf16>
    %c0_32 = arith.constant 0 : index
    %c64_33 = arith.constant 64 : index
    %67 = vector.load %arg22[%c0_32, %c64_33] : memref<128x128xbf16, #tpu.memory_space<vmem>>, vector<128x32xbf16>
    %cst_34 = arith.constant dense<0.000000e+00> : vector<64x128xf32>
    %68 = tpu.matmul %65, %66, %cst_34 {dimension_numbers = #tpu.dot_dimension_numbers<[1], [1], [0], [0], [0, 0, 1, 0], [], []>} : vector<64x32xbf16>, vector<128x32xbf16>, vector<64x128xf32> -> vector<64x128xf32>
    %cst_35 = arith.constant dense<0xFF800000> : vector<64xf32>
    %69 = vector.multi_reduction <maximumf>, %68, %cst_35 [1] : vector<64x128xf32> to vector<64xf32>
    %70 = vector.shape_cast %69 : vector<64xf32> to vector<64x1xf32>
    %71 = vector.broadcast %70 : vector<64x1xf32> to vector<64x128xf32>
    %72 = arith.subf %68, %71 : vector<64x128xf32>
    %73 = math.exp %72 : vector<64x128xf32>
    %cst_36 = arith.constant dense<0.000000e+00> : vector<64xf32>
    %74 = vector.multi_reduction <add>, %73, %cst_36 [1] : vector<64x128xf32> to vector<64xf32>
    %75 = vector.shape_cast %74 : vector<64xf32> to vector<64x1xf32>
    %76 = tpu.reciprocal %75 {approx = true} : vector<64x1xf32> -> vector<64x1xf32>
    %77 = vector.broadcast %76 : vector<64x1xf32> to vector<64x128xf32>
    %78 = arith.mulf %73, %77 : vector<64x128xf32>
    %79 = arith.truncf %78 : vector<64x128xf32> to vector<64x128xbf16>
    %cst_37 = arith.constant dense<0.000000e+00> : vector<64x32xf32>
    %80 = tpu.matmul %79, %67, %cst_37 {dimension_numbers = #tpu.dot_dimension_numbers<[1], [0], [0], [1], [0, 0, 1, 1], [], []>} : vector<64x128xbf16>, vector<128x32xbf16>, vector<64x32xf32> -> vector<64x32xf32>
    %81 = arith.truncf %80 : vector<64x32xf32> to vector<64x32xbf16>
    %c2 = arith.constant 2 : index
    %c0_38 = arith.constant 0 : index
    %c0_39 = arith.constant 0 : index
    %82 = vector.load %arg11[%c2, %c0_38, %c0_39] : memref<4x32x128xbf16, #tpu.memory_space<vmem>>, vector<1x32x128xbf16>
    %83 = vector.shape_cast %82 : vector<1x32x128xbf16> to vector<32x128xbf16>
    %cst_40 = arith.constant dense<0.000000e+00> : vector<64x128xf32>
    %84 = tpu.matmul %81, %83, %cst_40 {dimension_numbers = #tpu.dot_dimension_numbers<[1], [0], [0], [1], [0, 0, 1, 1], [], []>} : vector<64x32xbf16>, vector<32x128xbf16>, vector<64x128xf32> -> vector<64x128xf32>
    %85 = arith.addf %63, %84 : vector<64x128xf32>
    %86 = vector.extract_strided_slice %18 {offsets = [0, 96], sizes = [64, 32], strides = [1, 1]} : vector<64x128xf32> to vector<64x32xf32>
    %87 = arith.truncf %86 : vector<64x32xf32> to vector<64x32xbf16>
    %c0_41 = arith.constant 0 : index
    %c96 = arith.constant 96 : index
    %88 = vector.load %arg21[%c0_41, %c96] : memref<128x128xbf16, #tpu.memory_space<vmem>>, vector<128x32xbf16>
    %c0_42 = arith.constant 0 : index
    %c96_43 = arith.constant 96 : index
    %89 = vector.load %arg22[%c0_42, %c96_43] : memref<128x128xbf16, #tpu.memory_space<vmem>>, vector<128x32xbf16>
    %cst_44 = arith.constant dense<0.000000e+00> : vector<64x128xf32>
    %90 = tpu.matmul %87, %88, %cst_44 {dimension_numbers = #tpu.dot_dimension_numbers<[1], [1], [0], [0], [0, 0, 1, 0], [], []>} : vector<64x32xbf16>, vector<128x32xbf16>, vector<64x128xf32> -> vector<64x128xf32>
    %cst_45 = arith.constant dense<0xFF800000> : vector<64xf32>
    %91 = vector.multi_reduction <maximumf>, %90, %cst_45 [1] : vector<64x128xf32> to vector<64xf32>
    %92 = vector.shape_cast %91 : vector<64xf32> to vector<64x1xf32>
    %93 = vector.broadcast %92 : vector<64x1xf32> to vector<64x128xf32>
    %94 = arith.subf %90, %93 : vector<64x128xf32>
    %95 = math.exp %94 : vector<64x128xf32>
    %cst_46 = arith.constant dense<0.000000e+00> : vector<64xf32>
    %96 = vector.multi_reduction <add>, %95, %cst_46 [1] : vector<64x128xf32> to vector<64xf32>
    %97 = vector.shape_cast %96 : vector<64xf32> to vector<64x1xf32>
    %98 = tpu.reciprocal %97 {approx = true} : vector<64x1xf32> -> vector<64x1xf32>
    %99 = vector.broadcast %98 : vector<64x1xf32> to vector<64x128xf32>
    %100 = arith.mulf %95, %99 : vector<64x128xf32>
    %101 = arith.truncf %100 : vector<64x128xf32> to vector<64x128xbf16>
    %cst_47 = arith.constant dense<0.000000e+00> : vector<64x32xf32>
    %102 = tpu.matmul %101, %89, %cst_47 {dimension_numbers = #tpu.dot_dimension_numbers<[1], [0], [0], [1], [0, 0, 1, 1], [], []>} : vector<64x128xbf16>, vector<128x32xbf16>, vector<64x32xf32> -> vector<64x32xf32>
    %103 = arith.truncf %102 : vector<64x32xf32> to vector<64x32xbf16>
    %c3 = arith.constant 3 : index
    %c0_48 = arith.constant 0 : index
    %c0_49 = arith.constant 0 : index
    %104 = vector.load %arg11[%c3, %c0_48, %c0_49] : memref<4x32x128xbf16, #tpu.memory_space<vmem>>, vector<1x32x128xbf16>
    %105 = vector.shape_cast %104 : vector<1x32x128xbf16> to vector<32x128xbf16>
    %cst_50 = arith.constant dense<0.000000e+00> : vector<64x128xf32>
    %106 = tpu.matmul %103, %105, %cst_50 {dimension_numbers = #tpu.dot_dimension_numbers<[1], [0], [0], [1], [0, 0, 1, 1], [], []>} : vector<64x32xbf16>, vector<32x128xbf16>, vector<64x128xf32> -> vector<64x128xf32>
    %107 = arith.addf %85, %106 : vector<64x128xf32>
    %c0_51 = arith.constant 0 : index
    %c0_52 = arith.constant 0 : index
    %108 = vector.load %arg12[%c0_51, %c0_52] : memref<1x128xf32, #tpu.memory_space<vmem>>, vector<1x128xf32>
    %109 = vector.shape_cast %108 : vector<1x128xf32> to vector<128xf32>
    %110 = vector.shape_cast %109 : vector<128xf32> to vector<1x128xf32>
    %111 = vector.broadcast %110 : vector<1x128xf32> to vector<64x128xf32>
    %112 = arith.addf %107, %111 : vector<64x128xf32>
    %113 = arith.addf %7, %112 : vector<64x128xf32>
    %c0_53 = arith.constant 0 : index
    %c0_54 = arith.constant 0 : index
    %114 = vector.load %arg13[%c0_53, %c0_54] : memref<1x128xf32, #tpu.memory_space<vmem>>, vector<1x128xf32>
    %115 = vector.shape_cast %114 : vector<1x128xf32> to vector<128xf32>
    %c0_55 = arith.constant 0 : index
    %c0_56 = arith.constant 0 : index
    %116 = vector.load %arg14[%c0_55, %c0_56] : memref<1x128xf32, #tpu.memory_space<vmem>>, vector<1x128xf32>
    %117 = vector.shape_cast %116 : vector<1x128xf32> to vector<128xf32>
    %cst_57 = arith.constant dense<0.000000e+00> : vector<64xf32>
    %118 = vector.multi_reduction <add>, %113, %cst_57 [1] : vector<64x128xf32> to vector<64xf32>
    %119 = vector.shape_cast %118 : vector<64xf32> to vector<64x1xf32>
    %cst_58 = arith.constant 1.280000e+02 : f32
    %120 = vector.broadcast %cst_58 : f32 to vector<64x1xf32>
    %121 = arith.divf %119, %120 : vector<64x1xf32>
    %122 = vector.broadcast %121 : vector<64x1xf32> to vector<64x128xf32>
    %123 = arith.subf %113, %122 : vector<64x128xf32>
    %124 = arith.mulf %123, %123 : vector<64x128xf32>
    %cst_59 = arith.constant dense<0.000000e+00> : vector<64xf32>
    %125 = vector.multi_reduction <add>, %124, %cst_59 [1] : vector<64x128xf32> to vector<64xf32>
    %126 = vector.shape_cast %125 : vector<64xf32> to vector<64x1xf32>
    %cst_60 = arith.constant 1.280000e+02 : f32
    %127 = vector.broadcast %cst_60 : f32 to vector<64x1xf32>
    %128 = arith.divf %126, %127 : vector<64x1xf32>
    %cst_61 = arith.constant 9.99999974E-6 : f32
    %129 = vector.broadcast %cst_61 : f32 to vector<64x1xf32>
    %130 = arith.addf %128, %129 : vector<64x1xf32>
    %131 = math.rsqrt %130 : vector<64x1xf32>
    %132 = vector.broadcast %131 : vector<64x1xf32> to vector<64x128xf32>
    %133 = arith.mulf %123, %132 : vector<64x128xf32>
    %134 = vector.shape_cast %115 : vector<128xf32> to vector<1x128xf32>
    %135 = vector.broadcast %134 : vector<1x128xf32> to vector<64x128xf32>
    %136 = arith.mulf %133, %135 : vector<64x128xf32>
    %137 = vector.shape_cast %117 : vector<128xf32> to vector<1x128xf32>
    %138 = vector.broadcast %137 : vector<1x128xf32> to vector<64x128xf32>
    %139 = arith.addf %136, %138 : vector<64x128xf32>
    %140 = arith.truncf %139 : vector<64x128xf32> to vector<64x128xbf16>
    %c0_62 = arith.constant 0 : index
    %c0_63 = arith.constant 0 : index
    %141 = vector.load %arg15[%c0_62, %c0_63] : memref<128x512xbf16, #tpu.memory_space<vmem>>, vector<128x512xbf16>
    %cst_64 = arith.constant dense<0.000000e+00> : vector<64x512xf32>
    %142 = tpu.matmul %140, %141, %cst_64 {dimension_numbers = #tpu.dot_dimension_numbers<[1], [0], [0], [1], [0, 0, 1, 1], [], []>} : vector<64x128xbf16>, vector<128x512xbf16>, vector<64x512xf32> -> vector<64x512xf32>
    %c0_65 = arith.constant 0 : index
    %c0_66 = arith.constant 0 : index
    %143 = vector.load %arg16[%c0_65, %c0_66] : memref<1x512xf32, #tpu.memory_space<vmem>>, vector<1x512xf32>
    %144 = vector.shape_cast %143 : vector<1x512xf32> to vector<512xf32>
    %145 = vector.shape_cast %144 : vector<512xf32> to vector<1x512xf32>
    %146 = vector.broadcast %145 : vector<1x512xf32> to vector<64x512xf32>
    %147 = arith.addf %142, %146 : vector<64x512xf32>
    %cst_67 = arith.constant 5.000000e-01 : f32
    %148 = vector.broadcast %cst_67 : f32 to vector<64x512xf32>
    %149 = arith.mulf %148, %147 : vector<64x512xf32>
    %cst_68 = arith.constant 0.707106769 : f32
    %150 = vector.broadcast %cst_68 : f32 to vector<64x512xf32>
    %151 = arith.mulf %147, %150 : vector<64x512xf32>
    %152 = math.absf %151 : vector<64x512xf32>
    %cst_69 = arith.constant 0.327591091 : f32
    %153 = vector.broadcast %cst_69 : f32 to vector<64x512xf32>
    %154 = arith.mulf %153, %152 : vector<64x512xf32>
    %cst_70 = arith.constant 1.000000e+00 : f32
    %155 = vector.broadcast %cst_70 : f32 to vector<64x512xf32>
    %156 = arith.addf %155, %154 : vector<64x512xf32>
    %cst_71 = arith.constant 1.000000e+00 : f32
    %157 = vector.broadcast %cst_71 : f32 to vector<64x512xf32>
    %158 = arith.divf %157, %156 : vector<64x512xf32>
    %cst_72 = arith.constant 1.06140542 : f32
    %159 = vector.broadcast %cst_72 : f32 to vector<64x512xf32>
    %160 = arith.mulf %159, %158 : vector<64x512xf32>
    %cst_73 = arith.constant -1.45315206 : f32
    %161 = vector.broadcast %cst_73 : f32 to vector<64x512xf32>
    %162 = arith.addf %160, %161 : vector<64x512xf32>
    %163 = arith.mulf %162, %158 : vector<64x512xf32>
    %cst_74 = arith.constant 1.42141378 : f32
    %164 = vector.broadcast %cst_74 : f32 to vector<64x512xf32>
    %165 = arith.addf %163, %164 : vector<64x512xf32>
    %166 = arith.mulf %165, %158 : vector<64x512xf32>
    %cst_75 = arith.constant -0.284496725 : f32
    %167 = vector.broadcast %cst_75 : f32 to vector<64x512xf32>
    %168 = arith.addf %166, %167 : vector<64x512xf32>
    %169 = arith.mulf %168, %158 : vector<64x512xf32>
    %cst_76 = arith.constant 0.254829586 : f32
    %170 = vector.broadcast %cst_76 : f32 to vector<64x512xf32>
    %171 = arith.addf %169, %170 : vector<64x512xf32>
    %172 = arith.mulf %171, %158 : vector<64x512xf32>
    %cst_77 = arith.constant 0.000000e+00 : f32
    %173 = vector.broadcast %cst_77 : f32 to vector<64x512xf32>
    %174 = arith.subf %173, %152 : vector<64x512xf32>
    %175 = arith.mulf %174, %152 : vector<64x512xf32>
    %176 = math.exp %175 : vector<64x512xf32>
    %177 = arith.mulf %172, %176 : vector<64x512xf32>
    %cst_78 = arith.constant 1.000000e+00 : f32
    %178 = vector.broadcast %cst_78 : f32 to vector<64x512xf32>
    %179 = arith.subf %178, %177 : vector<64x512xf32>
    %cst_79 = arith.constant 0.000000e+00 : f32
    %180 = vector.broadcast %cst_79 : f32 to vector<64x512xf32>
    %181 = arith.cmpf oge, %151, %180 : vector<64x512xf32>
    %cst_80 = arith.constant 0.000000e+00 : f32
    %182 = vector.broadcast %cst_80 : f32 to vector<64x512xf32>
    %183 = arith.subf %182, %179 : vector<64x512xf32>
    %184 = arith.select %181, %179, %183 : vector<64x512xi1>, vector<64x512xf32>
    %cst_81 = arith.constant 1.000000e+00 : f32
    %185 = vector.broadcast %cst_81 : f32 to vector<64x512xf32>
    %186 = arith.addf %185, %184 : vector<64x512xf32>
    %187 = arith.mulf %149, %186 : vector<64x512xf32>
    %188 = arith.truncf %187 : vector<64x512xf32> to vector<64x512xbf16>
    %c0_82 = arith.constant 0 : index
    %c0_83 = arith.constant 0 : index
    %189 = vector.load %arg17[%c0_82, %c0_83] : memref<512x128xbf16, #tpu.memory_space<vmem>>, vector<512x128xbf16>
    %cst_84 = arith.constant dense<0.000000e+00> : vector<64x128xf32>
    %190 = tpu.matmul %188, %189, %cst_84 {dimension_numbers = #tpu.dot_dimension_numbers<[1], [0], [0], [1], [0, 0, 1, 1], [], []>} : vector<64x512xbf16>, vector<512x128xbf16>, vector<64x128xf32> -> vector<64x128xf32>
    %c0_85 = arith.constant 0 : index
    %c0_86 = arith.constant 0 : index
    %191 = vector.load %arg18[%c0_85, %c0_86] : memref<1x128xf32, #tpu.memory_space<vmem>>, vector<1x128xf32>
    %192 = vector.shape_cast %191 : vector<1x128xf32> to vector<128xf32>
    %193 = vector.shape_cast %192 : vector<128xf32> to vector<1x128xf32>
    %194 = vector.broadcast %193 : vector<1x128xf32> to vector<64x128xf32>
    %195 = arith.addf %190, %194 : vector<64x128xf32>
    %196 = arith.addf %113, %195 : vector<64x128xf32>
    %c0_87 = arith.constant 0 : index
    %c0_88 = arith.constant 0 : index
    %c0_89 = arith.constant 0 : index
    %197 = vector.load %arg19[%c0_87, %c0_88, %c0_89] : memref<1x64x128xf32, #tpu.memory_space<vmem>>, vector<1x64x128xf32>
    %198 = vector.shape_cast %197 : vector<1x64x128xf32> to vector<64x128xf32>
    %199 = vector.shape_cast %196 : vector<64x128xf32> to vector<1x64x128xf32>
    tpu.vector_store %arg19[%c0_87, %c0_88, %c0_89], %199 {strides = array<i32>} : memref<1x64x128xf32, #tpu.memory_space<vmem>>, vector<1x64x128xf32>,
    return
  }
  func.func @transform_0(%arg0: i32, %arg1: i32) -> (i32, i32, i32) {
    %c0_i32 = arith.constant 0 : i32
    %c0_i32_0 = arith.constant 0 : i32
    %c0_i32_1 = arith.constant 0 : i32
    return %arg0, %c0_i32, %c0_i32_0 : i32, i32, i32
  }
  func.func @transform_1(%arg0: i32, %arg1: i32) -> (i32, i32) {
    %c0_i32 = arith.constant 0 : i32
    %c0_i32_0 = arith.constant 0 : i32
    %c0_i32_1 = arith.constant 0 : i32
    return %c0_i32, %c0_i32_0 : i32, i32
  }
  func.func @transform_2(%arg0: i32, %arg1: i32) -> (i32, i32) {
    %c0_i32 = arith.constant 0 : i32
    %c0_i32_0 = arith.constant 0 : i32
    %c0_i32_1 = arith.constant 0 : i32
    return %c0_i32, %c0_i32_0 : i32, i32
  }
  func.func @transform_3(%arg0: i32, %arg1: i32) -> (i32, i32) {
    %c0_i32 = arith.constant 0 : i32
    %c0_i32_0 = arith.constant 0 : i32
    %c0_i32_1 = arith.constant 0 : i32
    return %c0_i32, %c0_i32_0 : i32, i32
  }
  func.func @transform_4(%arg0: i32, %arg1: i32) -> (i32, i32) {
    %c0_i32 = arith.constant 0 : i32
    %c0_i32_0 = arith.constant 0 : i32
    %c0_i32_1 = arith.constant 0 : i32
    return %c0_i32, %c0_i32_0 : i32, i32
  }
  func.func @transform_5(%arg0: i32, %arg1: i32) -> (i32, i32) {
    %c0_i32 = arith.constant 0 : i32
    %c0_i32_0 = arith.constant 0 : i32
    %c0_i32_1 = arith.constant 0 : i32
    return %c0_i32, %c0_i32_0 : i32, i32
  }
  func.func @transform_6(%arg0: i32, %arg1: i32) -> (i32, i32) {
    %c0_i32 = arith.constant 0 : i32
    %c0_i32_0 = arith.constant 0 : i32
    %c0_i32_1 = arith.constant 0 : i32
    return %c0_i32, %c0_i32_0 : i32, i32
  }
  func.func @transform_7(%arg0: i32, %arg1: i32) -> (i32, i32) {
    %c0_i32 = arith.constant 0 : i32
    %c0_i32_0 = arith.constant 0 : i32
    %c0_i32_1 = arith.constant 0 : i32
    return %c0_i32, %c0_i32_0 : i32, i32
  }
  func.func @transform_8(%arg0: i32, %arg1: i32) -> (i32, i32) {
    %c0_i32 = arith.constant 0 : i32
    %c0_i32_0 = arith.constant 0 : i32
    %c0_i32_1 = arith.constant 0 : i32
    return %c0_i32, %c0_i32_0 : i32, i32
  }
  func.func @transform_9(%arg0: i32, %arg1: i32) -> (i32, i32, i32) {
    %c0_i32 = arith.constant 0 : i32
    %c0_i32_0 = arith.constant 0 : i32
    %c0_i32_1 = arith.constant 0 : i32
    %c0_i32_2 = arith.constant 0 : i32
    return %c0_i32, %c0_i32_0, %c0_i32_1 : i32, i32, i32
  }
  func.func @transform_10(%arg0: i32, %arg1: i32) -> (i32, i32) {
    %c0_i32 = arith.constant 0 : i32
    %c0_i32_0 = arith.constant 0 : i32
    %c0_i32_1 = arith.constant 0 : i32
    return %c0_i32, %c0_i32_0 : i32, i32
  }
  func.func @transform_11(%arg0: i32, %arg1: i32) -> (i32, i32) {
    %c0_i32 = arith.constant 0 : i32
    %c0_i32_0 = arith.constant 0 : i32
    %c0_i32_1 = arith.constant 0 : i32
    return %c0_i32, %c0_i32_0 : i32, i32
  }
  func.func @transform_12(%arg0: i32, %arg1: i32) -> (i32, i32) {
    %c0_i32 = arith.constant 0 : i32
    %c0_i32_0 = arith.constant 0 : i32
    %c0_i32_1 = arith.constant 0 : i32
    return %c0_i32, %c0_i32_0 : i32, i32
  }
  func.func @transform_13(%arg0: i32, %arg1: i32) -> (i32, i32) {
    %c0_i32 = arith.constant 0 : i32
    %c0_i32_0 = arith.constant 0 : i32
    %c0_i32_1 = arith.constant 0 : i32
    return %c0_i32, %c0_i32_0 : i32, i32
  }
  func.func @transform_14(%arg0: i32, %arg1: i32) -> (i32, i32) {
    %c0_i32 = arith.constant 0 : i32
    %c0_i32_0 = arith.constant 0 : i32
    %c0_i32_1 = arith.constant 0 : i32
    return %c0_i32, %c0_i32_0 : i32, i32
  }
  func.func @transform_15(%arg0: i32, %arg1: i32) -> (i32, i32) {
    %c0_i32 = arith.constant 0 : i32
    %c0_i32_0 = arith.constant 0 : i32
    %c0_i32_1 = arith.constant 0 : i32
    return %c0_i32, %c0_i32_0 : i32, i32
  }
  func.func @transform_16(%arg0: i32, %arg1: i32) -> (i32, i32) {
    %c0_i32 = arith.constant 0 : i32
    %c0_i32_0 = arith.constant 0 : i32
    %c0_i32_1 = arith.constant 0 : i32
    return %c0_i32, %c0_i32_0 : i32, i32
  }
  func.func @transform_17(%arg0: i32, %arg1: i32) -> (i32, i32, i32) {
    %c0_i32 = arith.constant 0 : i32
    %c0_i32_0 = arith.constant 0 : i32
    return %arg0, %arg1, %c0_i32 : i32, i32, i32
  }
}

</mosaic_0001>

<llo_original>
// kernel: tpu_custom_call.1
$region0: #{tpu_custom_call.1}
  #allocation0 [shape = 'u32[]', space=smem, size = 0x4, offset = 0x4, fixed_abs, tag = 'smem constant byte address 0x4 - core index']
  #allocation1 [shape = 'u32[72,128]{1,0:T(1,128)}', space=vmem, size = 0x9000, scoped, tag = 'internal scratch']
  #allocation2 [shape = 'bf16[128,128]{1,0:T(8,128)(2,1)}', space=vmem, size = 0x8000, scoped, tag = 'scratch operand']
  #allocation3 [shape = 'bf16[128,128]{1,0:T(8,128)(2,1)}', space=vmem, size = 0x8000, scoped, tag = 'scratch operand']
  #allocation4 [shape = 'bf16[128,128]{1,0:T(8,128)(2,1)}', space=vmem, size = 0x8000, scoped, tag = 'scratch operand']
  %s0 = inlined_call_operand.hbm [shape: f32[2,128,128], index: 0, kind: input, shape index: {}, may-alias: {0,17}]
  %s1 = inlined_call_operand.hbm [shape: f32[1,128], index: 1, kind: input, shape index: {}]
  %s2 = inlined_call_operand.hbm [shape: f32[1,128], index: 2, kind: input, shape index: {}]
  %s3 = inlined_call_operand.hbm [shape: bf16[128,128], index: 3, kind: input, shape index: {}]
  %s4 = inlined_call_operand.hbm [shape: f32[1,128], index: 4, kind: input, shape index: {}]
  %s5 = inlined_call_operand.hbm [shape: bf16[128,128], index: 5, kind: input, shape index: {}]
  %s6 = inlined_call_operand.vmem [shape: f32[1,128], index: 6, kind: input, shape index: {}]
  %s7 = inlined_call_operand.hbm [shape: bf16[128,128], index: 7, kind: input, shape index: {}]
  %s8 = inlined_call_operand.hbm [shape: f32[1,128], index: 8, kind: input, shape index: {}]
  %s9 = inlined_call_operand.hbm [shape: bf16[4,32,128], index: 9, kind: input, shape index: {}]
  %s10 = inlined_call_operand.hbm [shape: f32[1,128], index: 10, kind: input, shape index: {}]
  %s11 = inlined_call_operand.hbm [shape: f32[1,128], index: 11, kind: input, shape index: {}]
  %s12 = inlined_call_operand.vmem [shape: f32[1,128], index: 12, kind: input, shape index: {}]
  %s13 = inlined_call_operand.vmem [shape: bf16[128,512], index: 13, kind: input, shape index: {}]
  %s14 = inlined_call_operand.vmem [shape: f32[1,512], index: 14, kind: input, shape index: {}]
  %s15 = inlined_call_operand.vmem [shape: bf16[512,128], index: 15, kind: input, shape index: {}]
  %s16 = inlined_call_operand.vmem [shape: f32[1,128], index: 16, kind: input, shape index: {}]
  %s17 = inlined_call_operand.hbm [shape: f32[2,128,128], index: 17, kind: output, shape index: {}, may-alias: {0,17}]
  %s18 = sld [smem:[#allocation0]]
  $region149: #{tpu_custom_call.1} parent=0
    _
  %s20 = ssub.s32 1, %s18
  %s21 = scalar_select 0, %s20, %s18
  $region1: #{tpu_custom_call.1} parent=0
    #allocation5 [shape = 'u8[131072]{0}', space=vmem, size = 0x20000, scoped, tag = 'input window, operand 0']
    #allocation6 [shape = 's32[2]{0}', space=sflag, size = 0x8, scoped, tag = 'scoped memory for tpu_custom_call.1']
    #allocation7 [shape = 's32[2]{0}', space=sflag, size = 0x8, scoped, tag = 'scoped memory for tpu_custom_call.1']
    #allocation8 [shape = 'u8[512]{0}', space=vmem, size = 0x400, scoped, tag = 'input window, operand 1, single buffered']
    #allocation9 [shape = 's32[1]{0}', space=sflag, size = 0x4, scoped, tag = 'scoped memory for tpu_custom_call.1']
    #allocation10 [shape = 'u8[512]{0}', space=vmem, size = 0x400, scoped, tag = 'input window, operand 2, single buffered']
    #allocation11 [shape = 'u8[32768]{0}', space=vmem, size = 0x8000, scoped, tag = 'input window, operand 3, single buffered']
    #allocation12 [shape = 's32[1]{0}', space=sflag, size = 0x4, scoped, tag = 'scoped memory for tpu_custom_call.1']
    #allocation13 [shape = 'u8[512]{0}', space=vmem, size = 0x400, scoped, tag = 'input window, operand 4, single buffered']
    #allocation14 [shape = 'u8[32768]{0}', space=vmem, size = 0x8000, scoped, tag = 'input window, operand 5, single buffered']
    #allocation15 [shape = 's32[1]{0}', space=sflag, size = 0x4, scoped, tag = 'scoped memory for tpu_custom_call.1']
    #allocation16 [shape = 'u8[32768]{0}', space=vmem, size = 0x8000, scoped, tag = 'input window, operand 7, single buffered']
    #allocation17 [shape = 'u8[512]{0}', space=vmem, size = 0x400, scoped, tag = 'input window, operand 8, single buffered']
    #allocation18 [shape = 's32[1]{0}', space=sflag, size = 0x4, scoped, tag = 'scoped memory for tpu_custom_call.1']
    #allocation19 [shape = 'u8[32768]{0}', space=vmem, size = 0x8000, scoped, tag = 'input window, operand 9, single buffered']
    #allocation20 [shape = 'u8[512]{0}', space=vmem, size = 0x400, scoped, tag = 'input window, operand 10, single buffered']
    #allocation21 [shape = 's32[1]{0}', space=sflag, size = 0x4, scoped, tag = 'scoped memory for tpu_custom_call.1']
    #allocation22 [shape = 'u8[512]{0}', space=vmem, size = 0x400, scoped, tag = 'input window, operand 11, single buffered']
    #allocation23 [shape = 'u8[65536]{0}', space=vmem, size = 0x10000, scoped, tag = 'output window, operand 0']
    %22 = vsyncpa [#allocation6], 0
    %s23 = scalar_lea.sflag [#allocation6], 1
    %24 = vsyncpa %s23, 0
    %25 = vsyncpa [#allocation9], 0
    %26 = vsyncpa [#allocation12], 0
    %27 = vsyncpa [#allocation15], 0
    %28 = vsyncpa [#allocation18], 0
    %29 = vsyncpa [#allocation21], 0
    %30 = vsyncpa [#allocation7], 0
    %s31 = scalar_lea.sflag [#allocation7], 1
    %32 = vsyncpa %s31, 0
    loop: start=0, step=1, limit=6
    $region2: #{tpu_custom_call.1} parent=1 // loop_pre_header
      _
    $region3: #{tpu_custom_call.1} parent=1 // loop_header
      %s34 = sphi 0, %s38
      %p35 = scmp.ge.s32.totalorder %s34, 6
      %s41 = sphi 0, %s53
      %s42 = sphi 0, %s49
      %s43 = sphi 0, %s41
      %s44 = sphi 0, %s42
      %s45 = sphi 0, %s43
      %s46 = sphi 0, %s44
      %s56 = sphi 0, %s58
      %s59 = sphi 0, %s56
      %s60 = sphi 0, %s59
      %s76 = sphi 0, %s60
      %s80 = sphi 0, %s80
      %s82 = sphi 0, %s80
      %s83 = sphi 0, %s82
      %s97 = sphi 0, %s83
      %s101 = sphi 0, %s101
      %s103 = sphi 0, %s101
      %s104 = sphi 0, %s103
      %s118 = sphi 0, %s104
      %s122 = sphi 0, %s122
      %s124 = sphi 0, %s122
      %s125 = sphi 0, %s124
      %s139 = sphi 0, %s125
      %s143 = sphi 0, %s143
      %s145 = sphi 0, %s143
      %s146 = sphi 0, %s145
      %s160 = sphi 0, %s146
      %s164 = sphi 0, %s164
      %s166 = sphi 0, %s164
      %s167 = sphi 0, %s166
      %s181 = sphi 0, %s167
      %s185 = sphi 0, %s185
      %s187 = sphi 0, %s185
      %s188 = sphi 0, %s187
      %s202 = sphi 0, %s188
      %s206 = sphi 0, %s206
      %s208 = sphi 0, %s206
      %s209 = sphi 0, %s208
      %s223 = sphi 0, %s209
      %s227 = sphi 0, %s227
      %s229 = sphi 0, %s227
      %s230 = sphi 0, %s229
      %s244 = sphi 0, %s230
      %s248 = sphi 0, %s248
      %s250 = sphi 0, %s248
      %s251 = sphi 0, %s250
      %s265 = sphi 0, %s251
      %s269 = sphi 0, %s269
      %s271 = sphi 0, %s269
      %s272 = sphi 0, %s271
      %s286 = sphi 0, %s272
      %s290 = sphi 0, %s290
      %s292 = sphi 0, %s290
      %s293 = sphi 0, %s292
      %s307 = sphi 0, %s293
      %s311 = sphi 0, %s311
      %s313 = sphi 0, %s311
      %s314 = sphi 0, %s313
      %s328 = sphi 0, %s314
      %s332 = sphi 0, %s332
      %s334 = sphi 0, %s332
      %s335 = sphi 0, %s334
      %s349 = sphi 0, %s335
      %s353 = sphi 0, %s353
      %s355 = sphi 0, %s353
      %s356 = sphi 0, %s355
      %s370 = sphi 0, %s356
      %s374 = sphi 0, %s374
      %s376 = sphi 0, %s374
      %s377 = sphi 0, %s376
      %s391 = sphi 0, %s377
      %s395 = sphi 0, %s395
      %s397 = sphi 0, %s395
      %s398 = sphi 0, %s397
      %s412 = sphi 0, %s398
      %s420 = sphi 0, %s422
      %s423 = sphi 0, %s420
      %s424 = sphi 0, %s423
      %s440 = sphi 0, %s424
    $region4: #{tpu_custom_call.1} parent=1 // loop_header_branch
      %37 = sbr.rel (%p35) target = $region8
    $region5: #{tpu_custom_call.1} parent=1 // loop_body
      %s39 = ssub.s32 %s34, 1
      %s40 = ssub.s32 %s34, 2
      %s47 = sadd.s32 1, %s42
      %p48 = scmp.ge.s32.totalorder %s47, 2
      %s49 = scalar_select %p48, 0, %s47
      %s50 = sadd.s32 1, %s41
      %s51 = scalar_select %p48, %s50, %s41
      %p52 = scmp.ge.s32.totalorder %s51, 2
      %s53 = scalar_select %p52, 0, %s51
      %s54 = ssub.s32 %s41, %s53
      %p55 = scmp.eq.s32.totalorder %s54, 0
      %s57 = sadd.s32 %s56, 1
      %s58 = scalar_select %p55, %s56, %s57
      %p61 = pneg %p55
      %p62 = scmp.eq.s32.totalorder %s34, 3
      %p63 = por %p61, %p62
      %p64 = scmp.ne.s32.totalorder %s56, %s59
      %p65 = scmp.eq.s32.totalorder %s34, 0
      %p66 = por %p64, %p65
      %p67 = scmp.ne.s32.totalorder %s56, %s59
      %p68 = scmp.eq.s32.totalorder %s39, 3
      %p69 = por %p67, %p68
      %p70 = scmp.ne.s32.totalorder %s59, %s60
      %p71 = scmp.eq.s32.totalorder %s39, 0
      %p72 = por %p70, %p71
      %p73 = scmp.ne.s32.totalorder %s59, %s60
      %p74 = scmp.eq.s32.totalorder %s40, 3
      %p75 = por %p73, %p74
      %p77 = scmp.ne.s32.totalorder %s60, %s76
      %p78 = scmp.eq.s32.totalorder %s40, 0
      %p79 = por %p77, %p78
      %s81 = sadd.s32 %s80, 1
      %p84 = scmp.eq.s32.totalorder %s34, 3
      %p85 = scmp.ne.s32.totalorder %s80, %s82
      %p86 = scmp.eq.s32.totalorder %s34, 0
      %p87 = por %p85, %p86
      %p88 = scmp.ne.s32.totalorder %s80, %s82
      %p89 = scmp.eq.s32.totalorder %s39, 3
      %p90 = por %p88, %p89
      %p91 = scmp.ne.s32.totalorder %s82, %s83
      %p92 = scmp.eq.s32.totalorder %s39, 0
      %p93 = por %p91, %p92
      %p94 = scmp.ne.s32.totalorder %s82, %s83
      %p95 = scmp.eq.s32.totalorder %s40, 3
      %p96 = por %p94, %p95
      %p98 = scmp.ne.s32.totalorder %s83, %s97
      %p99 = scmp.eq.s32.totalorder %s40, 0
      %p100 = por %p98, %p99
      %s102 = sadd.s32 %s101, 1
      %p105 = scmp.eq.s32.totalorder %s34, 3
      %p106 = scmp.ne.s32.totalorder %s101, %s103
      %p107 = scmp.eq.s32.totalorder %s34, 0
      %p108 = por %p106, %p107
      %p109 = scmp.ne.s32.totalorder %s101, %s103
      %p110 = scmp.eq.s32.totalorder %s39, 3
      %p111 = por %p109, %p110
      %p112 = scmp.ne.s32.totalorder %s103, %s104
      %p113 = scmp.eq.s32.totalorder %s39, 0
      %p114 = por %p112, %p113
      %p115 = scmp.ne.s32.totalorder %s103, %s104
      %p116 = scmp.eq.s32.totalorder %s40, 3
      %p117 = por %p115, %p116
      %p119 = scmp.ne.s32.totalorder %s104, %s118
      %p120 = scmp.eq.s32.totalorder %s40, 0
      %p121 = por %p119, %p120
      %s123 = sadd.s32 %s122, 1
      %p126 = scmp.eq.s32.totalorder %s34, 3
      %p127 = scmp.ne.s32.totalorder %s122, %s124
      %p128 = scmp.eq.s32.totalorder %s34, 0
      %p129 = por %p127, %p128
      %p130 = scmp.ne.s32.totalorder %s122, %s124
      %p131 = scmp.eq.s32.totalorder %s39, 3
      %p132 = por %p130, %p131
      %p133 = scmp.ne.s32.totalorder %s124, %s125
      %p134 = scmp.eq.s32.totalorder %s39, 0
      %p135 = por %p133, %p134
      %p136 = scmp.ne.s32.totalorder %s124, %s125
      %p137 = scmp.eq.s32.totalorder %s40, 3
      %p138 = por %p136, %p137
      %p140 = scmp.ne.s32.totalorder %s125, %s139
      %p141 = scmp.eq.s32.totalorder %s40, 0
      %p142 = por %p140, %p141
      %s144 = sadd.s32 %s143, 1
      %p147 = scmp.eq.s32.totalorder %s34, 3
      %p148 = scmp.ne.s32.totalorder %s143, %s145
      %p149 = scmp.eq.s32.totalorder %s34, 0
      %p150 = por %p148, %p149
      %p151 = scmp.ne.s32.totalorder %s143, %s145
      %p152 = scmp.eq.s32.totalorder %s39, 3
      %p153 = por %p151, %p152
      %p154 = scmp.ne.s32.totalorder %s145, %s146
      %p155 = scmp.eq.s32.totalorder %s39, 0
      %p156 = por %p154, %p155
      %p157 = scmp.ne.s32.totalorder %s145, %s146
      %p158 = scmp.eq.s32.totalorder %s40, 3
      %p159 = por %p157, %p158
      %p161 = scmp.ne.s32.totalorder %s146, %s160
      %p162 = scmp.eq.s32.totalorder %s40, 0
      %p163 = por %p161, %p162
      %s165 = sadd.s32 %s164, 1
      %p168 = scmp.eq.s32.totalorder %s34, 3
      %p169 = scmp.ne.s32.totalorder %s164, %s166
      %p170 = scmp.eq.s32.totalorder %s34, 0
      %p171 = por %p169, %p170
      %p172 = scmp.ne.s32.totalorder %s164, %s166
      %p173 = scmp.eq.s32.totalorder %s39, 3
      %p174 = por %p172, %p173
      %p175 = scmp.ne.s32.totalorder %s166, %s167
      %p176 = scmp.eq.s32.totalorder %s39, 0
      %p177 = por %p175, %p176
      %p178 = scmp.ne.s32.totalorder %s166, %s167
      %p179 = scmp.eq.s32.totalorder %s40, 3
      %p180 = por %p178, %p179
      %p182 = scmp.ne.s32.totalorder %s167, %s181
      %p183 = scmp.eq.s32.totalorder %s40, 0
      %p184 = por %p182, %p183
      %s186 = sadd.s32 %s185, 1
      %p189 = scmp.eq.s32.totalorder %s34, 3
      %p190 = scmp.ne.s32.totalorder %s185, %s187
      %p191 = scmp.eq.s32.totalorder %s34, 0
      %p192 = por %p190, %p191
      %p193 = scmp.ne.s32.totalorder %s185, %s187
      %p194 = scmp.eq.s32.totalorder %s39, 3
      %p195 = por %p193, %p194
      %p196 = scmp.ne.s32.totalorder %s187, %s188
      %p197 = scmp.eq.s32.totalorder %s39, 0
      %p198 = por %p196, %p197
      %p199 = scmp.ne.s32.totalorder %s187, %s188
      %p200 = scmp.eq.s32.totalorder %s40, 3
      %p201 = por %p199, %p200
      %p203 = scmp.ne.s32.totalorder %s188, %s202
      %p204 = scmp.eq.s32.totalorder %s40, 0
      %p205 = por %p203, %p204
      %s207 = sadd.s32 %s206, 1
      %p210 = scmp.eq.s32.totalorder %s34, 3
      %p211 = scmp.ne.s32.totalorder %s206, %s208
      %p212 = scmp.eq.s32.totalorder %s34, 0
      %p213 = por %p211, %p212
      %p214 = scmp.ne.s32.totalorder %s206, %s208
      %p215 = scmp.eq.s32.totalorder %s39, 3
      %p216 = por %p214, %p215
      %p217 = scmp.ne.s32.totalorder %s208, %s209
      %p218 = scmp.eq.s32.totalorder %s39, 0
      %p219 = por %p217, %p218
      %p220 = scmp.ne.s32.totalorder %s208, %s209
      %p221 = scmp.eq.s32.totalorder %s40, 3
      %p222 = por %p220, %p221
      %p224 = scmp.ne.s32.totalorder %s209, %s223
      %p225 = scmp.eq.s32.totalorder %s40, 0
      %p226 = por %p224, %p225
      %s228 = sadd.s32 %s227, 1
      %p231 = scmp.eq.s32.totalorder %s34, 3
      %p232 = scmp.ne.s32.totalorder %s227, %s229
      %p233 = scmp.eq.s32.totalorder %s34, 0
      %p234 = por %p232, %p233
      %p235 = scmp.ne.s32.totalorder %s227, %s229
      %p236 = scmp.eq.s32.totalorder %s39, 3
      %p237 = por %p235, %p236
      %p238 = scmp.ne.s32.totalorder %s229, %s230
      %p239 = scmp.eq.s32.totalorder %s39, 0
      %p240 = por %p238, %p239
      %p241 = scmp.ne.s32.totalorder %s229, %s230
      %p242 = scmp.eq.s32.totalorder %s40, 3
      %p243 = por %p241, %p242
      %p245 = scmp.ne.s32.totalorder %s230, %s244
      %p246 = scmp.eq.s32.totalorder %s40, 0
      %p247 = por %p245, %p246
      %s249 = sadd.s32 %s248, 1
      %p252 = scmp.eq.s32.totalorder %s34, 3
      %p253 = scmp.ne.s32.totalorder %s248, %s250
      %p254 = scmp.eq.s32.totalorder %s34, 0
      %p255 = por %p253, %p254
      %p256 = scmp.ne.s32.totalorder %s248, %s250
      %p257 = scmp.eq.s32.totalorder %s39, 3
      %p258 = por %p256, %p257
      %p259 = scmp.ne.s32.totalorder %s250, %s251
      %p260 = scmp.eq.s32.totalorder %s39, 0
      %p261 = por %p259, %p260
      %p262 = scmp.ne.s32.totalorder %s250, %s251
      %p263 = scmp.eq.s32.totalorder %s40, 3
      %p264 = por %p262, %p263
      %p266 = scmp.ne.s32.totalorder %s251, %s265
      %p267 = scmp.eq.s32.totalorder %s40, 0
      %p268 = por %p266, %p267
      %s270 = sadd.s32 %s269, 1
      %p273 = scmp.eq.s32.totalorder %s34, 3
      %p274 = scmp.ne.s32.totalorder %s269, %s271
      %p275 = scmp.eq.s32.totalorder %s34, 0
      %p276 = por %p274, %p275
      %p277 = scmp.ne.s32.totalorder %s269, %s271
      %p278 = scmp.eq.s32.totalorder %s39, 3
      %p279 = por %p277, %p278
      %p280 = scmp.ne.s32.totalorder %s271, %s272
      %p281 = scmp.eq.s32.totalorder %s39, 0
      %p282 = por %p280, %p281
      %p283 = scmp.ne.s32.totalorder %s271, %s272
      %p284 = scmp.eq.s32.totalorder %s40, 3
      %p285 = por %p283, %p284
      %p287 = scmp.ne.s32.totalorder %s272, %s286
      %p288 = scmp.eq.s32.totalorder %s40, 0
      %p289 = por %p287, %p288
      %s291 = sadd.s32 %s290, 1
      %p294 = scmp.eq.s32.totalorder %s34, 3
      %p295 = scmp.ne.s32.totalorder %s290, %s292
      %p296 = scmp.eq.s32.totalorder %s34, 0
      %p297 = por %p295, %p296
      %p298 = scmp.ne.s32.totalorder %s290, %s292
      %p299 = scmp.eq.s32.totalorder %s39, 3
      %p300 = por %p298, %p299
      %p301 = scmp.ne.s32.totalorder %s292, %s293
      %p302 = scmp.eq.s32.totalorder %s39, 0
      %p303 = por %p301, %p302
      %p304 = scmp.ne.s32.totalorder %s292, %s293
      %p305 = scmp.eq.s32.totalorder %s40, 3
      %p306 = por %p304, %p305
      %p308 = scmp.ne.s32.totalorder %s293, %s307
      %p309 = scmp.eq.s32.totalorder %s40, 0
      %p310 = por %p308, %p309
      %s312 = sadd.s32 %s311, 1
      %p315 = scmp.eq.s32.totalorder %s34, 3
      %p316 = scmp.ne.s32.totalorder %s311, %s313
      %p317 = scmp.eq.s32.totalorder %s34, 0
      %p318 = por %p316, %p317
      %p319 = scmp.ne.s32.totalorder %s311, %s313
      %p320 = scmp.eq.s32.totalorder %s39, 3
      %p321 = por %p319, %p320
      %p322 = scmp.ne.s32.totalorder %s313, %s314
      %p323 = scmp.eq.s32.totalorder %s39, 0
      %p324 = por %p322, %p323
      %p325 = scmp.ne.s32.totalorder %s313, %s314
      %p326 = scmp.eq.s32.totalorder %s40, 3
      %p327 = por %p325, %p326
      %p329 = scmp.ne.s32.totalorder %s314, %s328
      %p330 = scmp.eq.s32.totalorder %s40, 0
      %p331 = por %p329, %p330
      %s333 = sadd.s32 %s332, 1
      %p336 = scmp.eq.s32.totalorder %s34, 3
      %p337 = scmp.ne.s32.totalorder %s332, %s334
      %p338 = scmp.eq.s32.totalorder %s34, 0
      %p339 = por %p337, %p338
      %p340 = scmp.ne.s32.totalorder %s332, %s334
      %p341 = scmp.eq.s32.totalorder %s39, 3
      %p342 = por %p340, %p341
      %p343 = scmp.ne.s32.totalorder %s334, %s335
      %p344 = scmp.eq.s32.totalorder %s39, 0
      %p345 = por %p343, %p344
      %p346 = scmp.ne.s32.totalorder %s334, %s335
      %p347 = scmp.eq.s32.totalorder %s40, 3
      %p348 = por %p346, %p347
      %p350 = scmp.ne.s32.totalorder %s335, %s349
      %p351 = scmp.eq.s32.totalorder %s40, 0
      %p352 = por %p350, %p351
      %s354 = sadd.s32 %s353, 1
      %p357 = scmp.eq.s32.totalorder %s34, 3
      %p358 = scmp.ne.s32.totalorder %s353, %s355
      %p359 = scmp.eq.s32.totalorder %s34, 0
      %p360 = por %p358, %p359
      %p361 = scmp.ne.s32.totalorder %s353, %s355
      %p362 = scmp.eq.s32.totalorder %s39, 3
      %p363 = por %p361, %p362
      %p364 = scmp.ne.s32.totalorder %s355, %s356
      %p365 = scmp.eq.s32.totalorder %s39, 0
      %p366 = por %p364, %p365
      %p367 = scmp.ne.s32.totalorder %s355, %s356
      %p368 = scmp.eq.s32.totalorder %s40, 3
      %p369 = por %p367, %p368
      %p371 = scmp.ne.s32.totalorder %s356, %s370
      %p372 = scmp.eq.s32.totalorder %s40, 0
      %p373 = por %p371, %p372
      %s375 = sadd.s32 %s374, 1
      %p378 = scmp.eq.s32.totalorder %s34, 3
      %p379 = scmp.ne.s32.totalorder %s374, %s376
      %p380 = scmp.eq.s32.totalorder %s34, 0
      %p381 = por %p379, %p380
      %p382 = scmp.ne.s32.totalorder %s374, %s376
      %p383 = scmp.eq.s32.totalorder %s39, 3
      %p384 = por %p382, %p383
      %p385 = scmp.ne.s32.totalorder %s376, %s377
      %p386 = scmp.eq.s32.totalorder %s39, 0
      %p387 = por %p385, %p386
      %p388 = scmp.ne.s32.totalorder %s376, %s377
      %p389 = scmp.eq.s32.totalorder %s40, 3
      %p390 = por %p388, %p389
      %p392 = scmp.ne.s32.totalorder %s377, %s391
      %p393 = scmp.eq.s32.totalorder %s40, 0
      %p394 = por %p392, %p393
      %s396 = sadd.s32 %s395, 1
      %p399 = scmp.eq.s32.totalorder %s34, 3
      %p400 = scmp.ne.s32.totalorder %s395, %s397
      %p401 = scmp.eq.s32.totalorder %s34, 0
      %p402 = por %p400, %p401
      %p403 = scmp.ne.s32.totalorder %s395, %s397
      %p404 = scmp.eq.s32.totalorder %s39, 3
      %p405 = por %p403, %p404
      %p406 = scmp.ne.s32.totalorder %s397, %s398
      %p407 = scmp.eq.s32.totalorder %s39, 0
      %p408 = por %p406, %p407
      %p409 = scmp.ne.s32.totalorder %s397, %s398
      %p410 = scmp.eq.s32.totalorder %s40, 3
      %p411 = por %p409, %p410
      %p413 = scmp.ne.s32.totalorder %s398, %s412
      %p414 = scmp.eq.s32.totalorder %s40, 0
      %p415 = por %p413, %p414
      %s416 = ssub.s32 %s41, %s53
      %s417 = ssub.s32 %s42, %s49
      %s418 = sor.u32 %s416, %s417
      %p419 = scmp.eq.s32.totalorder %s418, 0
      %s421 = sadd.s32 %s420, 1
      %s422 = scalar_select %p419, %s420, %s421
      %p425 = pneg %p419
      %p426 = scmp.eq.s32.totalorder %s34, 3
      %p427 = por %p425, %p426
      %p428 = scmp.ne.s32.totalorder %s420, %s423
      %p429 = scmp.eq.s32.totalorder %s34, 0
      %p430 = por %p428, %p429
      %p431 = scmp.ne.s32.totalorder %s420, %s423
      %p432 = scmp.eq.s32.totalorder %s39, 3
      %p433 = por %p431, %p432
      %p434 = scmp.ne.s32.totalorder %s423, %s424
      %p435 = scmp.eq.s32.totalorder %s39, 0
      %p436 = por %p434, %p435
      %p437 = scmp.ne.s32.totalorder %s423, %s424
      %p438 = scmp.eq.s32.totalorder %s40, 3
      %p439 = por %p437, %p438
      %p441 = scmp.ne.s32.totalorder %s424, %s440
      %p442 = scmp.eq.s32.totalorder %s40, 0
      %p443 = por %p441, %p442
      %p444 = scmp.le.s32.totalorder 1, %s34
      %p445 = scmp.lt.s32.totalorder %s34, 5
      %p446 = pnand %p444, %p445
      %p447 = pneg %p446
      // Predicated region
      $region9: #{tpu_custom_call.1} parent=5 // pred_check
        _
      $region10: #{tpu_custom_call.1} parent=5 // pred_check_branch
        %449 = sbr.rel (%p446) target = $region12
      $region11: #{tpu_custom_call.1} parent=5 // pred_region
        %s450 = ssub.s32 %s34, 1
        // Predicated region
        $region13: #{tpu_custom_call.1} parent=11 // pred_check
          %p451 = pneg %p93
        $region14: #{tpu_custom_call.1} parent=11 // pred_check_branch
          %453 = sbr.rel (%p451) target = $region16
        $region15: #{tpu_custom_call.1} parent=11 // pred_region
          %455 = vsyncadd [#allocation9], 0
          %s457 = sshll.u32 %s1, 4
          %s458 = int_to_ptr.hbm [resolvable:$true] %s457
          %s459 = sshll.u32 [#allocation8], 4
          %s460 = int_to_ptr.vmem [resolvable:$true] %s459
          %462 = dma.hbm_to_vmem [thread:$0]  %s458, 16, %s460, [#allocation9]
        $region16: #{tpu_custom_call.1} parent=11 // pred_fallthru
          _
        // Predicated region
        $region17: #{tpu_custom_call.1} parent=11 // pred_check
          %p463 = pneg %p114
        $region18: #{tpu_custom_call.1} parent=11 // pred_check_branch
          %465 = sbr.rel (%p463) target = $region20
        $region19: #{tpu_custom_call.1} parent=11 // pred_region
          %467 = vsyncadd [#allocation9], 0
          %s469 = sshll.u32 %s2, 4
          %s470 = int_to_ptr.hbm [resolvable:$true] %s469
          %s471 = sshll.u32 [#allocation10], 4
          %s472 = int_to_ptr.vmem [resolvable:$true] %s471
          %474 = dma.hbm_to_vmem [thread:$0]  %s470, 16, %s472, [#allocation9]
        $region20: #{tpu_custom_call.1} parent=11 // pred_fallthru
          _
        // Predicated region
        $region21: #{tpu_custom_call.1} parent=11 // pred_check
          %p475 = pneg %p135
        $region22: #{tpu_custom_call.1} parent=11 // pred_check_branch
          %477 = sbr.rel (%p475) target = $region24
        $region23: #{tpu_custom_call.1} parent=11 // pred_region
          %479 = vsyncadd [#allocation12], 0
          %s480 = sshll.u32 %s3, 4
          %s481 = int_to_ptr.hbm [resolvable:$true] %s480
          %s482 = sshll.u32 [#allocation11], 4
          %s483 = int_to_ptr.vmem [resolvable:$true] %s482
          %488 = dma.hbm_to_vmem [thread:$0]  %s481, 1024, %s483, [#allocation12], 64, 64, 4
        $region24: #{tpu_custom_call.1} parent=11 // pred_fallthru
          _
        // Predicated region
        $region25: #{tpu_custom_call.1} parent=11 // pred_check
          %p489 = pneg %p156
        $region26: #{tpu_custom_call.1} parent=11 // pred_check_branch
          %491 = sbr.rel (%p489) target = $region28
        $region27: #{tpu_custom_call.1} parent=11 // pred_region
          %493 = vsyncadd [#allocation12], 0
          %s495 = sshll.u32 %s4, 4
          %s496 = int_to_ptr.hbm [resolvable:$true] %s495
          %s497 = sshll.u32 [#allocation13], 4
          %s498 = int_to_ptr.vmem [resolvable:$true] %s497
          %500 = dma.hbm_to_vmem [thread:$0]  %s496, 16, %s498, [#allocation12]
        $region28: #{tpu_custom_call.1} parent=11 // pred_fallthru
          _
        // Predicated region
        $region29: #{tpu_custom_call.1} parent=11 // pred_check
          %p501 = pneg %p177
        $region30: #{tpu_custom_call.1} parent=11 // pred_check_branch
          %503 = sbr.rel (%p501) target = $region32
        $region31: #{tpu_custom_call.1} parent=11 // pred_region
          %505 = vsyncadd [#allocation15], 0
          %s506 = sshll.u32 %s5, 4
          %s507 = int_to_ptr.hbm [resolvable:$true] %s506
          %s508 = sshll.u32 [#allocation14], 4
          %s509 = int_to_ptr.vmem [resolvable:$true] %s508
          %514 = dma.hbm_to_vmem [thread:$0]  %s507, 1024, %s509, [#allocation15], 64, 64, 4
        $region32: #{tpu_custom_call.1} parent=11 // pred_fallthru
          _
        // Predicated region
        $region33: #{tpu_custom_call.1} parent=11 // pred_check
          %p515 = pneg %p198
        $region34: #{tpu_custom_call.1} parent=11 // pred_check_branch
          %517 = sbr.rel (%p515) target = $region36
        $region35: #{tpu_custom_call.1} parent=11 // pred_region
          _
        $region36: #{tpu_custom_call.1} parent=11 // pred_fallthru
          _
        // Predicated region
        $region37: #{tpu_custom_call.1} parent=11 // pred_check
          %p518 = pneg %p219
        $region38: #{tpu_custom_call.1} parent=11 // pred_check_branch
          %520 = sbr.rel (%p518) target = $region40
        $region39: #{tpu_custom_call.1} parent=11 // pred_region
          %522 = vsyncadd [#allocation15], 0
          %s523 = sshll.u32 %s7, 4
          %s524 = int_to_ptr.hbm [resolvable:$true] %s523
          %s525 = sshll.u32 [#allocation16], 4
          %s526 = int_to_ptr.vmem [resolvable:$true] %s525
          %531 = dma.hbm_to_vmem [thread:$0]  %s524, 1024, %s526, [#allocation15], 64, 64, 4
        $region40: #{tpu_custom_call.1} parent=11 // pred_fallthru
          _
        // Predicated region
        $region41: #{tpu_custom_call.1} parent=11 // pred_check
          %p532 = pneg %p240
        $region42: #{tpu_custom_call.1} parent=11 // pred_check_branch
          %534 = sbr.rel (%p532) target = $region44
        $region43: #{tpu_custom_call.1} parent=11 // pred_region
          %536 = vsyncadd [#allocation18], 0
          %s538 = sshll.u32 %s8, 4
          %s539 = int_to_ptr.hbm [resolvable:$true] %s538
          %s540 = sshll.u32 [#allocation17], 4
          %s541 = int_to_ptr.vmem [resolvable:$true] %s540
          %543 = dma.hbm_to_vmem [thread:$0]  %s539, 16, %s541, [#allocation18]
        $region44: #{tpu_custom_call.1} parent=11 // pred_fallthru
          _
        // Predicated region
        $region45: #{tpu_custom_call.1} parent=11 // pred_check
          %p544 = pneg %p261
        $region46: #{tpu_custom_call.1} parent=11 // pred_check_branch
          %546 = sbr.rel (%p544) target = $region48
        $region47: #{tpu_custom_call.1} parent=11 // pred_region
          %548 = vsyncadd [#allocation18], 0
          %s549 = sshll.u32 %s9, 4
          %s550 = int_to_ptr.hbm [resolvable:$true] %s549
          %s551 = sshll.u32 [#allocation19], 4
          %s552 = int_to_ptr.vmem [resolvable:$true] %s551
          %557 = dma.hbm_to_vmem [thread:$0]  %s550, 1024, %s552, [#allocation18], 64, 64, 4
        $region48: #{tpu_custom_call.1} parent=11 // pred_fallthru
          _
        // Predicated region
        $region49: #{tpu_custom_call.1} parent=11 // pred_check
          %p558 = pneg %p282
        $region50: #{tpu_custom_call.1} parent=11 // pred_check_branch
          %560 = sbr.rel (%p558) target = $region52
        $region51: #{tpu_custom_call.1} parent=11 // pred_region
          %562 = vsyncadd [#allocation21], 0
          %s564 = sshll.u32 %s10, 4
          %s565 = int_to_ptr.hbm [resolvable:$true] %s564
          %s566 = sshll.u32 [#allocation20], 4
          %s567 = int_to_ptr.vmem [resolvable:$true] %s566
          %569 = dma.hbm_to_vmem [thread:$0]  %s565, 16, %s567, [#allocation21]
        $region52: #{tpu_custom_call.1} parent=11 // pred_fallthru
          _
        // Predicated region
        $region53: #{tpu_custom_call.1} parent=11 // pred_check
          %p570 = pneg %p303
        $region54: #{tpu_custom_call.1} parent=11 // pred_check_branch
          %572 = sbr.rel (%p570) target = $region56
        $region55: #{tpu_custom_call.1} parent=11 // pred_region
          %574 = vsyncadd [#allocation21], 0
          %s576 = sshll.u32 %s11, 4
          %s577 = int_to_ptr.hbm [resolvable:$true] %s576
          %s578 = sshll.u32 [#allocation22], 4
          %s579 = int_to_ptr.vmem [resolvable:$true] %s578
          %581 = dma.hbm_to_vmem [thread:$0]  %s577, 16, %s579, [#allocation21]
        $region56: #{tpu_custom_call.1} parent=11 // pred_fallthru
          _
        // Predicated region
        $region57: #{tpu_custom_call.1} parent=11 // pred_check
          %p582 = pneg %p324
        $region58: #{tpu_custom_call.1} parent=11 // pred_check_branch
          %584 = sbr.rel (%p582) target = $region60
        $region59: #{tpu_custom_call.1} parent=11 // pred_region
          _
        $region60: #{tpu_custom_call.1} parent=11 // pred_fallthru
          _
        // Predicated region
        $region61: #{tpu_custom_call.1} parent=11 // pred_check
          %p585 = pneg %p345
        $region62: #{tpu_custom_call.1} parent=11 // pred_check_branch
          %587 = sbr.rel (%p585) target = $region64
        $region63: #{tpu_custom_call.1} parent=11 // pred_region
          _
        $region64: #{tpu_custom_call.1} parent=11 // pred_fallthru
          _
        // Predicated region
        $region65: #{tpu_custom_call.1} parent=11 // pred_check
          %p588 = pneg %p366
        $region66: #{tpu_custom_call.1} parent=11 // pred_check_branch
          %590 = sbr.rel (%p588) target = $region68
        $region67: #{tpu_custom_call.1} parent=11 // pred_region
          _
        $region68: #{tpu_custom_call.1} parent=11 // pred_fallthru
          _
        // Predicated region
        $region69: #{tpu_custom_call.1} parent=11 // pred_check
          %p591 = pneg %p387
        $region70: #{tpu_custom_call.1} parent=11 // pred_check_branch
          %593 = sbr.rel (%p591) target = $region72
        $region71: #{tpu_custom_call.1} parent=11 // pred_region
          _
        $region72: #{tpu_custom_call.1} parent=11 // pred_fallthru
          _
        // Predicated region
        $region73: #{tpu_custom_call.1} parent=11 // pred_check
          %p594 = pneg %p408
        $region74: #{tpu_custom_call.1} parent=11 // pred_check_branch
          %596 = sbr.rel (%p594) target = $region76
        $region75: #{tpu_custom_call.1} parent=11 // pred_region
          _
        $region76: #{tpu_custom_call.1} parent=11 // pred_fallthru
          _
      $region12: #{tpu_custom_call.1} parent=5 // pred_fallthru
        _
      %p597 = scmp.lt.s32.totalorder %s34, 4
      // Predicated region
      $region77: #{tpu_custom_call.1} parent=5 // pred_check
        %p598 = pneg %p597
      $region78: #{tpu_custom_call.1} parent=5 // pred_check_branch
        %600 = sbr.rel (%p598) target = $region80
      $region79: #{tpu_custom_call.1} parent=5 // pred_region
        // Predicated region
        $region81: #{tpu_custom_call.1} parent=79 // pred_check
          %p601 = pneg %p66
        $region82: #{tpu_custom_call.1} parent=79 // pred_check_branch
          %603 = sbr.rel (%p601) target = $region84
        $region83: #{tpu_custom_call.1} parent=79 // pred_region
          %s604 = sand.u32 %s56, 1
          %s605 = scalar_lea.sflag [#allocation6], %s604
          %s606 = sand.u32 %s56, 1
          %s607 = smul.addr %s606, 128
          %s608 = scalar_lea.vmem [#allocation5], %s607
          %610 = vsyncadd %s605, 0
          %s611 = smul.addr %s41, 16
          %s612 = smul.addr %s611, 8
          %s613 = scalar_lea.hbm %s0, %s612
          %s614 = sshll.u32 %s613, 4
          %s615 = int_to_ptr.hbm [resolvable:$true] %s614
          %s616 = sshll.u32 %s608, 4
          %s617 = int_to_ptr.vmem [resolvable:$true] %s616
          %622 = dma.hbm_to_vmem [thread:$0]  %s615, 2048, %s617, %s605, 128, 128, 8
        $region84: #{tpu_custom_call.1} parent=79 // pred_fallthru
          _
      $region80: #{tpu_custom_call.1} parent=5 // pred_fallthru
        _
      %p623 = scmp.le.s32.totalorder 1, %s34
      %p624 = scmp.lt.s32.totalorder %s34, 5
      %p625 = pnand %p623, %p624
      %p626 = pneg %p625
      // Predicated region
      $region85: #{tpu_custom_call.1} parent=5 // pred_check
        _
      $region86: #{tpu_custom_call.1} parent=5 // pred_check_branch
        %628 = sbr.rel (%p625) target = $region88
      $region87: #{tpu_custom_call.1} parent=5 // pred_region
        %s629 = ssub.s32 %s34, 1
        %s630 = sand.u32 %s59, 1
        %s631 = scalar_lea.sflag [#allocation6], %s630
        %s632 = sand.u32 %s59, 1
        %s633 = smul.addr %s632, 128
        %s634 = scalar_lea.vmem [#allocation5], %s633
        // Predicated region
        $region89: #{tpu_custom_call.1} parent=87 // pred_check
          %p635 = pneg %p72
        $region90: #{tpu_custom_call.1} parent=87 // pred_check_branch
          %637 = sbr.rel (%p635) target = $region92
        $region91: #{tpu_custom_call.1} parent=87 // pred_region
          %639 = dma.done %s631, 2048
        $region92: #{tpu_custom_call.1} parent=87 // pred_fallthru
          _
        // Predicated region
        $region93: #{tpu_custom_call.1} parent=87 // pred_check
          %p640 = pneg %p93
        $region94: #{tpu_custom_call.1} parent=87 // pred_check_branch
          %642 = sbr.rel (%p640) target = $region96
        $region95: #{tpu_custom_call.1} parent=87 // pred_region
          %644 = dma.done [#allocation9], 16
        $region96: #{tpu_custom_call.1} parent=87 // pred_fallthru
          _
        // Predicated region
        $region97: #{tpu_custom_call.1} parent=87 // pred_check
          %p645 = pneg %p114
        $region98: #{tpu_custom_call.1} parent=87 // pred_check_branch
          %647 = sbr.rel (%p645) target = $region100
        $region99: #{tpu_custom_call.1} parent=87 // pred_region
          %649 = dma.done [#allocation9], 16
        $region100: #{tpu_custom_call.1} parent=87 // pred_fallthru
          _
        // Predicated region
        $region101: #{tpu_custom_call.1} parent=87 // pred_check
          %p650 = pneg %p135
        $region102: #{tpu_custom_call.1} parent=87 // pred_check_branch
          %652 = sbr.rel (%p650) target = $region104
        $region103: #{tpu_custom_call.1} parent=87 // pred_region
          %654 = dma.done [#allocation12], 1024
        $region104: #{tpu_custom_call.1} parent=87 // pred_fallthru
          _
        // Predicated region
        $region105: #{tpu_custom_call.1} parent=87 // pred_check
          %p655 = pneg %p156
        $region106: #{tpu_custom_call.1} parent=87 // pred_check_branch
          %657 = sbr.rel (%p655) target = $region108
        $region107: #{tpu_custom_call.1} parent=87 // pred_region
          %659 = dma.done [#allocation12], 16
        $region108: #{tpu_custom_call.1} parent=87 // pred_fallthru
          _
        // Predicated region
        $region109: #{tpu_custom_call.1} parent=87 // pred_check
          %p660 = pneg %p177
        $region110: #{tpu_custom_call.1} parent=87 // pred_check_branch
          %662 = sbr.rel (%p660) target = $region112
        $region111: #{tpu_custom_call.1} parent=87 // pred_region
          %664 = dma.done [#allocation15], 1024
        $region112: #{tpu_custom_call.1} parent=87 // pred_fallthru
          _
        // Predicated region
        $region113: #{tpu_custom_call.1} parent=87 // pred_check
          %p665 = pneg %p219
        $region114: #{tpu_custom_call.1} parent=87 // pred_check_branch
          %667 = sbr.rel (%p665) target = $region116
        $region115: #{tpu_custom_call.1} parent=87 // pred_region
          %669 = dma.done [#allocation15], 1024
        $region116: #{tpu_custom_call.1} parent=87 // pred_fallthru
          _
        // Predicated region
        $region117: #{tpu_custom_call.1} parent=87 // pred_check
          %p670 = pneg %p240
        $region118: #{tpu_custom_call.1} parent=87 // pred_check_branch
          %672 = sbr.rel (%p670) target = $region120
        $region119: #{tpu_custom_call.1} parent=87 // pred_region
          %674 = dma.done [#allocation18], 16
        $region120: #{tpu_custom_call.1} parent=87 // pred_fallthru
          _
        // Predicated region
        $region121: #{tpu_custom_call.1} parent=87 // pred_check
          %p675 = pneg %p261
        $region122: #{tpu_custom_call.1} parent=87 // pred_check_branch
          %677 = sbr.rel (%p675) target = $region124
        $region123: #{tpu_custom_call.1} parent=87 // pred_region
          %679 = dma.done [#allocation18], 1024
        $region124: #{tpu_custom_call.1} parent=87 // pred_fallthru
          _
        // Predicated region
        $region125: #{tpu_custom_call.1} parent=87 // pred_check
          %p680 = pneg %p282
        $region126: #{tpu_custom_call.1} parent=87 // pred_check_branch
          %682 = sbr.rel (%p680) target = $region128
        $region127: #{tpu_custom_call.1} parent=87 // pred_region
          %684 = dma.done [#allocation21], 16
        $region128: #{tpu_custom_call.1} parent=87 // pred_fallthru
          _
        // Predicated region
        $region129: #{tpu_custom_call.1} parent=87 // pred_check
          %p685 = pneg %p303
        $region130: #{tpu_custom_call.1} parent=87 // pred_check_branch
          %687 = sbr.rel (%p685) target = $region132
        $region131: #{tpu_custom_call.1} parent=87 // pred_region
          %689 = dma.done [#allocation21], 16
        $region132: #{tpu_custom_call.1} parent=87 // pred_fallthru
          _
        %s690 = sand.u32 %s59, 1
        %s691 = scalar_lea.sflag [#allocation6], %s690
        %s692 = sand.u32 %s59, 1
        %s693 = smul.addr %s692, 128
        %s694 = scalar_lea.vmem [#allocation5], %s693
        %p695 = pneg %p72
        %p696 = pneg %p69
        %p697 = pneg %p93
        %p698 = pneg %p90
        %p699 = pneg %p114
        %p700 = pneg %p111
        %p701 = pneg %p135
        %p702 = pneg %p132
        %p703 = pneg %p156
        %p704 = pneg %p153
        %p705 = pneg %p177
        %p706 = pneg %p174
        %p707 = pneg %p198
        %p708 = pneg %p195
        %p709 = pneg %p219
        %p710 = pneg %p216
        %p711 = pneg %p240
        %p712 = pneg %p237
        %p713 = pneg %p261
        %p714 = pneg %p258
        %p715 = pneg %p282
        %p716 = pneg %p279
        %p717 = pneg %p303
        %p718 = pneg %p300
        %p719 = pneg %p324
        %p720 = pneg %p321
        %p721 = pneg %p345
        %p722 = pneg %p342
        %p723 = pneg %p366
        %p724 = pneg %p363
        %p725 = pneg %p387
        %p726 = pneg %p384
        %p727 = pneg %p408
        %p728 = pneg %p405
        %p729 = pneg %p436
        %p730 = pneg %p433
        %s731 = sand.u32 %s423, 1
        %s732 = scalar_lea.sflag [#allocation7], %s731
        %s733 = sand.u32 %s423, 1
        %s734 = smul.addr %s733, 64
        %s735 = scalar_lea.vmem [#allocation23], %s734
        %s736 = smul.u32 8, %s44
        %p738 = scmp.eq.s32.totalorder %s44, 0
        // Predicated region
        $region133: #{tpu_custom_call.1} parent=87 // pred_check
          %p739 = pneg %p738
        $region134: #{tpu_custom_call.1} parent=87 // pred_check_branch
          %741 = sbr.rel (%p739) target = $region136
        $region135: #{tpu_custom_call.1} parent=87 // pred_region
          %v742 = vld [vmem:[%s634] sm:$0xff]
          %v743 = vld [vmem:[%s634 + $0x8] sm:$0xff]
          %v744 = vld [vmem:[%s634 + $0x10] sm:$0xff]
          %v745 = vld [vmem:[%s634 + $0x18] sm:$0xff]
          %v746 = vld [vmem:[%s634 + $0x20] sm:$0xff]
          %v747 = vld [vmem:[%s634 + $0x28] sm:$0xff]
          %v748 = vld [vmem:[%s634 + $0x30] sm:$0xff]
          %v749 = vld [vmem:[%s634 + $0x38] sm:$0xff]
          %v750 = vld [vmem:[%s634 + $0x40] sm:$0xff]
          %v751 = vld [vmem:[%s634 + $0x48] sm:$0xff]
          %v752 = vld [vmem:[%s634 + $0x50] sm:$0xff]
          %v753 = vld [vmem:[%s634 + $0x58] sm:$0xff]
          %v754 = vld [vmem:[%s634 + $0x60] sm:$0xff]
          %v755 = vld [vmem:[%s634 + $0x68] sm:$0xff]
          %v756 = vld [vmem:[%s634 + $0x70] sm:$0xff]
          %v757 = vld [vmem:[%s634 + $0x78] sm:$0xff]
          %v758 = vld [vmem:[#allocation8] sm:$0x1]
          %v759 = vld [vmem:[#allocation10] sm:$0x1]
          %760 = vadd.xlane.f32.xlu0 %v742
          %v761 = vpop.xlane.xlu0 %760
          %762 = vadd.xlane.f32.xlu0 %v743
          %v763 = vpop.xlane.xlu0 %762
          %764 = vadd.xlane.f32.xlu0 %v744
          %v765 = vpop.xlane.xlu0 %764
          %766 = vadd.xlane.f32.xlu0 %v745
          %v767 = vpop.xlane.xlu0 %766
          %768 = vadd.xlane.f32.xlu0 %v746
          %v769 = vpop.xlane.xlu0 %768
          %770 = vadd.xlane.f32.xlu0 %v747
          %v771 = vpop.xlane.xlu0 %770
          %772 = vadd.xlane.f32.xlu0 %v748
          %v773 = vpop.xlane.xlu0 %772
          %774 = vadd.xlane.f32.xlu0 %v749
          %v775 = vpop.xlane.xlu0 %774
          %776 = vadd.xlane.f32.xlu0 %v750
          %v777 = vpop.xlane.xlu0 %776
          %778 = vadd.xlane.f32.xlu0 %v751
          %v779 = vpop.xlane.xlu0 %778
          %780 = vadd.xlane.f32.xlu0 %v752
          %v781 = vpop.xlane.xlu0 %780
          %782 = vadd.xlane.f32.xlu0 %v753
          %v783 = vpop.xlane.xlu0 %782
          %784 = vadd.xlane.f32.xlu0 %v754
          %v785 = vpop.xlane.xlu0 %784
          %786 = vadd.xlane.f32.xlu0 %v755
          %v787 = vpop.xlane.xlu0 %786
          %788 = vadd.xlane.f32.xlu0 %v756
          %v789 = vpop.xlane.xlu0 %788
          %790 = vadd.xlane.f32.xlu0 %v757
          %v791 = vpop.xlane.xlu0 %790
          %v792 = vrcp.pop 128.0
          %v793 = vmul.f32 128.0, %v792
          %v794 = vsub.f32 1.0, %v793
          %v795 = vmul.f32 %v792, %v794
          %v796 = vadd.f32 %v792, %v795
          %vm797 = vweird.f32 %v792
          %v798 = vsel %vm797, %v792, %v796
          %v799 = vmul.f32 %v761, %v798
          %v800 = vmul.f32 %v763, %v798
          %v801 = vmul.f32 %v765, %v798
          %v802 = vmul.f32 %v767, %v798
          %v803 = vmul.f32 %v769, %v798
          %v804 = vmul.f32 %v771, %v798
          %v805 = vmul.f32 %v773, %v798
          %v806 = vmul.f32 %v775, %v798
          %v807 = vmul.f32 %v777, %v798
          %v808 = vmul.f32 %v779, %v798
          %v809 = vmul.f32 %v781, %v798
          %v810 = vmul.f32 %v783, %v798
          %v811 = vmul.f32 %v785, %v798
          %v812 = vmul.f32 %v787, %v798
          %v813 = vmul.f32 %v789, %v798
          %v814 = vmul.f32 %v791, %v798
          %v815 = vsub.f32 %v742, %v799
          %v816 = vsub.f32 %v743, %v800
          %v817 = vsub.f32 %v744, %v801
          %v818 = vsub.f32 %v745, %v802
          %v819 = vsub.f32 %v746, %v803
          %v820 = vsub.f32 %v747, %v804
          %v821 = vsub.f32 %v748, %v805
          %v822 = vsub.f32 %v749, %v806
          %v823 = vsub.f32 %v750, %v807
          %v824 = vsub.f32 %v751, %v808
          %v825 = vsub.f32 %v752, %v809
          %v826 = vsub.f32 %v753, %v810
          %v827 = vsub.f32 %v754, %v811
          %v828 = vsub.f32 %v755, %v812
          %v829 = vsub.f32 %v756, %v813
          %v830 = vsub.f32 %v757, %v814
          %v831 = vmul.f32 %v815, %v815
          %v832 = vmul.f32 %v816, %v816
          %v833 = vmul.f32 %v817, %v817
          %v834 = vmul.f32 %v818, %v818
          %v835 = vmul.f32 %v819, %v819
          %v836 = vmul.f32 %v820, %v820
          %v837 = vmul.f32 %v821, %v821
          %v838 = vmul.f32 %v822, %v822
          %v839 = vmul.f32 %v823, %v823
          %v840 = vmul.f32 %v824, %v824
          %v841 = vmul.f32 %v825, %v825
          %v842 = vmul.f32 %v826, %v826
          %v843 = vmul.f32 %v827, %v827
          %v844 = vmul.f32 %v828, %v828
          %v845 = vmul.f32 %v829, %v829
          %v846 = vmul.f32 %v830, %v830
          %847 = vadd.xlane.f32.xlu0 %v831
          %v848 = vpop.xlane.xlu0 %847
          %849 = vadd.xlane.f32.xlu0 %v832
          %v850 = vpop.xlane.xlu0 %849
          %851 = vadd.xlane.f32.xlu0 %v833
          %v852 = vpop.xlane.xlu0 %851
          %853 = vadd.xlane.f32.xlu0 %v834
          %v854 = vpop.xlane.xlu0 %853
          %855 = vadd.xlane.f32.xlu0 %v835
          %v856 = vpop.xlane.xlu0 %855
          %857 = vadd.xlane.f32.xlu0 %v836
          %v858 = vpop.xlane.xlu0 %857
          %859 = vadd.xlane.f32.xlu0 %v837
          %v860 = vpop.xlane.xlu0 %859
          %861 = vadd.xlane.f32.xlu0 %v838
          %v862 = vpop.xlane.xlu0 %861
          %863 = vadd.xlane.f32.xlu0 %v839
          %v864 = vpop.xlane.xlu0 %863
          %865 = vadd.xlane.f32.xlu0 %v840
          %v866 = vpop.xlane.xlu0 %865
          %867 = vadd.xlane.f32.xlu0 %v841
          %v868 = vpop.xlane.xlu0 %867
          %869 = vadd.xlane.f32.xlu0 %v842
          %v870 = vpop.xlane.xlu0 %869
          %871 = vadd.xlane.f32.xlu0 %v843
          %v872 = vpop.xlane.xlu0 %871
          %873 = vadd.xlane.f32.xlu0 %v844
          %v874 = vpop.xlane.xlu0 %873
          %875 = vadd.xlane.f32.xlu0 %v845
          %v876 = vpop.xlane.xlu0 %875
          %877 = vadd.xlane.f32.xlu0 %v846
          %v878 = vpop.xlane.xlu0 %877
          %v879 = vmul.f32 %v848, %v798
          %v880 = vmul.f32 %v850, %v798
          %v881 = vmul.f32 %v852, %v798
          %v882 = vmul.f32 %v854, %v798
          %v883 = vmul.f32 %v856, %v798
          %v884 = vmul.f32 %v858, %v798
          %v885 = vmul.f32 %v860, %v798
          %v886 = vmul.f32 %v862, %v798
          %v887 = vmul.f32 %v864, %v798
          %v888 = vmul.f32 %v866, %v798
          %v889 = vmul.f32 %v868, %v798
          %v890 = vmul.f32 %v870, %v798
          %v891 = vmul.f32 %v872, %v798
          %v892 = vmul.f32 %v874, %v798
          %v893 = vmul.f32 %v876, %v798
          %v894 = vmul.f32 %v878, %v798
          %v895 = vadd.f32 %v879, 1e-05
          %v896 = vadd.f32 %v880, 1e-05
          %v897 = vadd.f32 %v881, 1e-05
          %v898 = vadd.f32 %v882, 1e-05
          %v899 = vadd.f32 %v883, 1e-05
          %v900 = vadd.f32 %v884, 1e-05
          %v901 = vadd.f32 %v885, 1e-05
          %v902 = vadd.f32 %v886, 1e-05
          %v903 = vadd.f32 %v887, 1e-05
          %v904 = vadd.f32 %v888, 1e-05
          %v905 = vadd.f32 %v889, 1e-05
          %v906 = vadd.f32 %v890, 1e-05
          %v907 = vadd.f32 %v891, 1e-05
          %v908 = vadd.f32 %v892, 1e-05
          %v909 = vadd.f32 %v893, 1e-05
          %v910 = vadd.f32 %v894, 1e-05
          %v911 = vrsqrt.pop %v895
          %v912 = vmul.f32 %v911, %v895
          %v913 = vmul.f32 %v912, %v911
          %v914 = vmul.f32 0.5, %v913
          %v915 = vsub.f32 1.5, %v914
          %v916 = vmul.f32 %v911, %v915
          %vm917 = vweird.f32 %v895
          %vm918 = vweird.f32 %v911
          %vm919 = vmor %vm917, %vm918
          %v920 = vsel %vm919, %v911, %v916
          %v921 = vrsqrt.pop %v896
          %v922 = vmul.f32 %v921, %v896
          %v923 = vmul.f32 %v922, %v921
          %v924 = vmul.f32 0.5, %v923
          %v925 = vsub.f32 1.5, %v924
          %v926 = vmul.f32 %v921, %v925
          %vm927 = vweird.f32 %v896
          %vm928 = vweird.f32 %v921
          %vm929 = vmor %vm927, %vm928
          %v930 = vsel %vm929, %v921, %v926
          %v931 = vrsqrt.pop %v897
          %v932 = vmul.f32 %v931, %v897
          %v933 = vmul.f32 %v932, %v931
          %v934 = vmul.f32 0.5, %v933
          %v935 = vsub.f32 1.5, %v934
          %v936 = vmul.f32 %v931, %v935
          %vm937 = vweird.f32 %v897
          %vm938 = vweird.f32 %v931
          %vm939 = vmor %vm937, %vm938
          %v940 = vsel %vm939, %v931, %v936
          %v941 = vrsqrt.pop %v898
          %v942 = vmul.f32 %v941, %v898
          %v943 = vmul.f32 %v942, %v941
          %v944 = vmul.f32 0.5, %v943
          %v945 = vsub.f32 1.5, %v944
          %v946 = vmul.f32 %v941, %v945
          %vm947 = vweird.f32 %v898
          %vm948 = vweird.f32 %v941
          %vm949 = vmor %vm947, %vm948
          %v950 = vsel %vm949, %v941, %v946
          %v951 = vrsqrt.pop %v899
          %v952 = vmul.f32 %v951, %v899
          %v953 = vmul.f32 %v952, %v951
          %v954 = vmul.f32 0.5, %v953
          %v955 = vsub.f32 1.5, %v954
          %v956 = vmul.f32 %v951, %v955
          %vm957 = vweird.f32 %v899
          %vm958 = vweird.f32 %v951
          %vm959 = vmor %vm957, %vm958
          %v960 = vsel %vm959, %v951, %v956
          %v961 = vrsqrt.pop %v900
          %v962 = vmul.f32 %v961, %v900
          %v963 = vmul.f32 %v962, %v961
          %v964 = vmul.f32 0.5, %v963
          %v965 = vsub.f32 1.5, %v964
          %v966 = vmul.f32 %v961, %v965
          %vm967 = vweird.f32 %v900
          %vm968 = vweird.f32 %v961
          %vm969 = vmor %vm967, %vm968
          %v970 = vsel %vm969, %v961, %v966
          %v971 = vrsqrt.pop %v901
          %v972 = vmul.f32 %v971, %v901
          %v973 = vmul.f32 %v972, %v971
          %v974 = vmul.f32 0.5, %v973
          %v975 = vsub.f32 1.5, %v974
          %v976 = vmul.f32 %v971, %v975
          %vm977 = vweird.f32 %v901
          %vm978 = vweird.f32 %v971
          %vm979 = vmor %vm977, %vm978
          %v980 = vsel %vm979, %v971, %v976
          %v981 = vrsqrt.pop %v902
          %v982 = vmul.f32 %v981, %v902
          %v983 = vmul.f32 %v982, %v981
          %v984 = vmul.f32 0.5, %v983
          %v985 = vsub.f32 1.5, %v984
          %v986 = vmul.f32 %v981, %v985
          %vm987 = vweird.f32 %v902
          %vm988 = vweird.f32 %v981
          %vm989 = vmor %vm987, %vm988
          %v990 = vsel %vm989, %v981, %v986
          %v991 = vrsqrt.pop %v903
          %v992 = vmul.f32 %v991, %v903
          %v993 = vmul.f32 %v992, %v991
          %v994 = vmul.f32 0.5, %v993
          %v995 = vsub.f32 1.5, %v994
          %v996 = vmul.f32 %v991, %v995
          %vm997 = vweird.f32 %v903
          %vm998 = vweird.f32 %v991
          %vm999 = vmor %vm997, %vm998
          %v1000 = vsel %vm999, %v991, %v996
          %v1001 = vrsqrt.pop %v904
          %v1002 = vmul.f32 %v1001, %v904
          %v1003 = vmul.f32 %v1002, %v1001
          %v1004 = vmul.f32 0.5, %v1003
          %v1005 = vsub.f32 1.5, %v1004
          %v1006 = vmul.f32 %v1001, %v1005
          %vm1007 = vweird.f32 %v904
          %vm1008 = vweird.f32 %v1001
          %vm1009 = vmor %vm1007, %vm1008
          %v1010 = vsel %vm1009, %v1001, %v1006
          %v1011 = vrsqrt.pop %v905
          %v1012 = vmul.f32 %v1011, %v905
          %v1013 = vmul.f32 %v1012, %v1011
          %v1014 = vmul.f32 0.5, %v1013
          %v1015 = vsub.f32 1.5, %v1014
          %v1016 = vmul.f32 %v1011, %v1015
          %vm1017 = vweird.f32 %v905
          %vm1018 = vweird.f32 %v1011
          %vm1019 = vmor %vm1017, %vm1018
          %v1020 = vsel %vm1019, %v1011, %v1016
          %v1021 = vrsqrt.pop %v906
          %v1022 = vmul.f32 %v1021, %v906
          %v1023 = vmul.f32 %v1022, %v1021
          %v1024 = vmul.f32 0.5, %v1023
          %v1025 = vsub.f32 1.5, %v1024
          %v1026 = vmul.f32 %v1021, %v1025
          %vm1027 = vweird.f32 %v906
          %vm1028 = vweird.f32 %v1021
          %vm1029 = vmor %vm1027, %vm1028
          %v1030 = vsel %vm1029, %v1021, %v1026
          %v1031 = vrsqrt.pop %v907
          %v1032 = vmul.f32 %v1031, %v907
          %v1033 = vmul.f32 %v1032, %v1031
          %v1034 = vmul.f32 0.5, %v1033
          %v1035 = vsub.f32 1.5, %v1034
          %v1036 = vmul.f32 %v1031, %v1035
          %vm1037 = vweird.f32 %v907
          %vm1038 = vweird.f32 %v1031
          %vm1039 = vmor %vm1037, %vm1038
          %v1040 = vsel %vm1039, %v1031, %v1036
          %v1041 = vrsqrt.pop %v908
          %v1042 = vmul.f32 %v1041, %v908
          %v1043 = vmul.f32 %v1042, %v1041
          %v1044 = vmul.f32 0.5, %v1043
          %v1045 = vsub.f32 1.5, %v1044
          %v1046 = vmul.f32 %v1041, %v1045
          %vm1047 = vweird.f32 %v908
          %vm1048 = vweird.f32 %v1041
          %vm1049 = vmor %vm1047, %vm1048
          %v1050 = vsel %vm1049, %v1041, %v1046
          %v1051 = vrsqrt.pop %v909
          %v1052 = vmul.f32 %v1051, %v909
          %v1053 = vmul.f32 %v1052, %v1051
          %v1054 = vmul.f32 0.5, %v1053
          %v1055 = vsub.f32 1.5, %v1054
          %v1056 = vmul.f32 %v1051, %v1055
          %vm1057 = vweird.f32 %v909
          %vm1058 = vweird.f32 %v1051
          %vm1059 = vmor %vm1057, %vm1058
          %v1060 = vsel %vm1059, %v1051, %v1056
          %v1061 = vrsqrt.pop %v910
          %v1062 = vmul.f32 %v1061, %v910
          %v1063 = vmul.f32 %v1062, %v1061
          %v1064 = vmul.f32 0.5, %v1063
          %v1065 = vsub.f32 1.5, %v1064
          %v1066 = vmul.f32 %v1061, %v1065
          %vm1067 = vweird.f32 %v910
          %vm1068 = vweird.f32 %v1061
          %vm1069 = vmor %vm1067, %vm1068
          %v1070 = vsel %vm1069, %v1061, %v1066
          %v1071 = vmul.f32 %v815, %v920
          %v1072 = vmul.f32 %v816, %v930
          %v1073 = vmul.f32 %v817, %v940
          %v1074 = vmul.f32 %v818, %v950
          %v1075 = vmul.f32 %v819, %v960
          %v1076 = vmul.f32 %v820, %v970
          %v1077 = vmul.f32 %v821, %v980
          %v1078 = vmul.f32 %v822, %v990
          %v1079 = vmul.f32 %v823, %v1000
          %v1080 = vmul.f32 %v824, %v1010
          %v1081 = vmul.f32 %v825, %v1020
          %v1082 = vmul.f32 %v826, %v1030
          %v1083 = vmul.f32 %v827, %v1040
          %v1084 = vmul.f32 %v828, %v1050
          %v1085 = vmul.f32 %v829, %v1060
          %v1086 = vmul.f32 %v830, %v1070
          %v1088 = vperm.slane %v758, 0
          %v1090 = vmul.f32 %v1071, %v1088
          %v1091 = vmul.f32 %v1072, %v1088
          %v1092 = vmul.f32 %v1073, %v1088
          %v1093 = vmul.f32 %v1074, %v1088
          %v1094 = vmul.f32 %v1075, %v1088
          %v1095 = vmul.f32 %v1076, %v1088
          %v1096 = vmul.f32 %v1077, %v1088
          %v1097 = vmul.f32 %v1078, %v1088
          %v1098 = vmul.f32 %v1079, %v1088
          %v1099 = vmul.f32 %v1080, %v1088
          %v1100 = vmul.f32 %v1081, %v1088
          %v1101 = vmul.f32 %v1082, %v1088
          %v1102 = vmul.f32 %v1083, %v1088
          %v1103 = vmul.f32 %v1084, %v1088
          %v1104 = vmul.f32 %v1085, %v1088
          %v1105 = vmul.f32 %v1086, %v1088
          %v1107 = vperm.slane %v759, 0
          %v1109 = vadd.f32 %v1090, %v1107
          %v1110 = vadd.f32 %v1091, %v1107
          %v1111 = vadd.f32 %v1092, %v1107
          %v1112 = vadd.f32 %v1093, %v1107
          %v1113 = vadd.f32 %v1094, %v1107
          %v1114 = vadd.f32 %v1095, %v1107
          %v1115 = vadd.f32 %v1096, %v1107
          %v1116 = vadd.f32 %v1097, %v1107
          %v1117 = vadd.f32 %v1098, %v1107
          %v1118 = vadd.f32 %v1099, %v1107
          %v1119 = vadd.f32 %v1100, %v1107
          %v1120 = vadd.f32 %v1101, %v1107
          %v1121 = vadd.f32 %v1102, %v1107
          %v1122 = vadd.f32 %v1103, %v1107
          %v1123 = vadd.f32 %v1104, %v1107
          %v1124 = vadd.f32 %v1105, %v1107
          %v1125 = vpack.c.bf16 %v1109, %v1109
          %v1126 = vpack.c.bf16 %v1110, %v1110
          %v1127 = vpack.c.bf16 %v1111, %v1111
          %v1128 = vpack.c.bf16 %v1112, %v1112
          %v1129 = vpack.c.bf16 %v1113, %v1113
          %v1130 = vpack.c.bf16 %v1114, %v1114
          %v1131 = vpack.c.bf16 %v1115, %v1115
          %v1132 = vpack.c.bf16 %v1116, %v1116
          %v1133 = vpack.c.bf16 %v1117, %v1117
          %v1134 = vpack.c.bf16 %v1118, %v1118
          %v1135 = vpack.c.bf16 %v1119, %v1119
          %v1136 = vpack.c.bf16 %v1120, %v1120
          %v1137 = vpack.c.bf16 %v1121, %v1121
          %v1138 = vpack.c.bf16 %v1122, %v1122
          %v1139 = vpack.c.bf16 %v1123, %v1123
          %v1140 = vpack.c.bf16 %v1124, %v1124
          %1141 = vst [vmem:[#allocation2] sm:$0xf] %v1125
          %1142 = vst [vmem:[#allocation2 + $0x4] sm:$0xf] %v1126
          %1143 = vst [vmem:[#allocation2 + $0x8] sm:$0xf] %v1127
          %1144 = vst [vmem:[#allocation2 + $0xc] sm:$0xf] %v1128
          %1145 = vst [vmem:[#allocation2 + $0x10] sm:$0xf] %v1129
          %1146 = vst [vmem:[#allocation2 + $0x14] sm:$0xf] %v1130
          %1147 = vst [vmem:[#allocation2 + $0x18] sm:$0xf] %v1131
          %1148 = vst [vmem:[#allocation2 + $0x1c] sm:$0xf] %v1132
          %1149 = vst [vmem:[#allocation2 + $0x20] sm:$0xf] %v1133
          %1150 = vst [vmem:[#allocation2 + $0x24] sm:$0xf] %v1134
          %1151 = vst [vmem:[#allocation2 + $0x28] sm:$0xf] %v1135
          %1152 = vst [vmem:[#allocation2 + $0x2c] sm:$0xf] %v1136
          %1153 = vst [vmem:[#allocation2 + $0x30] sm:$0xf] %v1137
          %1154 = vst [vmem:[#allocation2 + $0x34] sm:$0xf] %v1138
          %1155 = vst [vmem:[#allocation2 + $0x38] sm:$0xf] %v1139
          %1156 = vst [vmem:[#allocation2 + $0x3c] sm:$0xf] %v1140
          %v1157 = vld [vmem:[#allocation14] sm:$0xf]
          %v1158 = vld [vmem:[#allocation14 + $0x4] sm:$0xf]
          %v1159 = vld [vmem:[#allocation14 + $0x8] sm:$0xf]
          %v1160 = vld [vmem:[#allocation14 + $0xc] sm:$0xf]
          %v1161 = vld [vmem:[#allocation14 + $0x10] sm:$0xf]
          %v1162 = vld [vmem:[#allocation14 + $0x14] sm:$0xf]
          %v1163 = vld [vmem:[#allocation14 + $0x18] sm:$0xf]
          %v1164 = vld [vmem:[#allocation14 + $0x1c] sm:$0xf]
          %v1165 = vld [vmem:[#allocation14 + $0x20] sm:$0xf]
          %v1166 = vld [vmem:[#allocation14 + $0x24] sm:$0xf]
          %v1167 = vld [vmem:[#allocation14 + $0x28] sm:$0xf]
          %v1168 = vld [vmem:[#allocation14 + $0x2c] sm:$0xf]
          %v1169 = vld [vmem:[#allocation14 + $0x30] sm:$0xf]
          %v1170 = vld [vmem:[#allocation14 + $0x34] sm:$0xf]
          %v1171 = vld [vmem:[#allocation14 + $0x38] sm:$0xf]
          %v1172 = vld [vmem:[#allocation14 + $0x3c] sm:$0xf]
          %v1173 = vld [vmem:[%s6] sm:$0x1]
          %v1175 = vperm.slane %v1173, 0
          %v1193 = vunpack.c.l.b16 %v1125
          %v1194 = vunpack.c.l.b16 %v1126
          %v1195 = vunpack.c.l.b16 %v1127
          %v1196 = vunpack.c.l.b16 %v1128
          %v1197 = vunpack.c.l.b16 %v1129
          %v1198 = vunpack.c.l.b16 %v1130
          %v1199 = vunpack.c.l.b16 %v1131
          %v1200 = vunpack.c.l.b16 %v1132
          %v1201 = vunpack.c.l.b16 %v1133
          %v1202 = vunpack.c.l.b16 %v1134
          %v1203 = vunpack.c.l.b16 %v1135
          %v1204 = vunpack.c.l.b16 %v1136
          %v1205 = vunpack.c.l.b16 %v1137
          %v1206 = vunpack.c.l.b16 %v1138
          %v1207 = vunpack.c.l.b16 %v1139
          %v1208 = vunpack.c.l.b16 %v1140
          %v1209 = vpack.c.b16 %v1194, %v1193
          %v1210 = vpack.c.b16 %v1196, %v1195
          %v1211 = vpack.c.b16 %v1198, %v1197
          %v1212 = vpack.c.b16 %v1200, %v1199
          %v1213 = vpack.c.b16 %v1202, %v1201
          %v1214 = vpack.c.b16 %v1204, %v1203
          %v1215 = vpack.c.b16 %v1206, %v1205
          %v1216 = vpack.c.b16 %v1208, %v1207
          %v1241 = vunpack.c.l.b16 %v1157
          %v1242 = vunpack.c.l.b16 %v1158
          %v1243 = vunpack.c.l.b16 %v1159
          %v1244 = vunpack.c.l.b16 %v1160
          %v1245 = vunpack.c.l.b16 %v1161
          %v1246 = vunpack.c.l.b16 %v1162
          %v1247 = vunpack.c.l.b16 %v1163
          %v1248 = vunpack.c.l.b16 %v1164
          %v1249 = vunpack.c.l.b16 %v1165
          %v1250 = vunpack.c.l.b16 %v1166
          %v1251 = vunpack.c.l.b16 %v1167
          %v1252 = vunpack.c.l.b16 %v1168
          %v1253 = vunpack.c.l.b16 %v1169
          %v1254 = vunpack.c.l.b16 %v1170
          %v1255 = vunpack.c.l.b16 %v1171
          %v1256 = vunpack.c.l.b16 %v1172
          %v1257 = vpack.c.b16 %v1242, %v1241
          %v1258 = vpack.c.b16 %v1244, %v1243
          %v1259 = vpack.c.b16 %v1246, %v1245
          %v1260 = vpack.c.b16 %v1248, %v1247
          %v1261 = vpack.c.b16 %v1250, %v1249
          %v1262 = vpack.c.b16 %v1252, %v1251
          %v1263 = vpack.c.b16 %v1254, %v1253
          %v1264 = vpack.c.b16 %v1256, %v1255
          %1273 = vmatpush.bf16.msra.mxu0 %v1264
          %1274 = vmatpush.bf16.msra.mxu0 %v1263
          %1275 = vmatpush.bf16.msra.mxu0 %v1262
          %1276 = vmatpush.bf16.msra.mxu0 %v1261
          %1277 = vmatpush.bf16.msra.mxu0 %v1260
          %1278 = vmatpush.bf16.msra.mxu0 %v1259
          %1279 = vmatpush.bf16.msra.mxu0 %v1258
          %1280 = vmatpush.bf16.msra.mxu0 %v1257
          %1281 = vmatmul.bf16.gmra.mxu0 %v1209
          %v1282 = vpop.f32.mrf.mxu0
          %v1283 = vadd.f32 %v1175, %v1282
          %v1284 = vpop.f32.mrf.mxu0
          %v1285 = vadd.f32 %v1175, %v1284
          %1286 = vmatmul.bf16.gmra.mxu0 %v1210
          %v1287 = vpop.f32.mrf.mxu0
          %v1288 = vadd.f32 %v1175, %v1287
          %v1289 = vpop.f32.mrf.mxu0
          %v1290 = vadd.f32 %v1175, %v1289
          %1291 = vmatmul.bf16.gmra.mxu0 %v1211
          %v1292 = vpop.f32.mrf.mxu0
          %v1293 = vadd.f32 %v1175, %v1292
          %v1294 = vpop.f32.mrf.mxu0
          %v1295 = vadd.f32 %v1175, %v1294
          %1296 = vmatmul.bf16.gmra.mxu0 %v1212
          %v1297 = vpop.f32.mrf.mxu0
          %v1298 = vadd.f32 %v1175, %v1297
          %v1299 = vpop.f32.mrf.mxu0
          %v1300 = vadd.f32 %v1175, %v1299
          %1301 = vmatmul.bf16.gmra.mxu0 %v1213
          %v1302 = vpop.f32.mrf.mxu0
          %v1303 = vadd.f32 %v1175, %v1302
          %v1304 = vpop.f32.mrf.mxu0
          %v1305 = vadd.f32 %v1175, %v1304
          %1306 = vmatmul.bf16.gmra.mxu0 %v1214
          %v1307 = vpop.f32.mrf.mxu0
          %v1308 = vadd.f32 %v1175, %v1307
          %v1309 = vpop.f32.mrf.mxu0
          %v1310 = vadd.f32 %v1175, %v1309
          %1311 = vmatmul.bf16.gmra.mxu0 %v1215
          %v1312 = vpop.f32.mrf.mxu0
          %v1313 = vadd.f32 %v1175, %v1312
          %v1314 = vpop.f32.mrf.mxu0
          %v1315 = vadd.f32 %v1175, %v1314
          %1316 = vmatmul.bf16.gmra.mxu0 %v1216
          %v1317 = vpop.f32.mrf.mxu0
          %v1318 = vadd.f32 %v1175, %v1317
          %v1319 = vpop.f32.mrf.mxu0
          %v1320 = vadd.f32 %v1175, %v1319
          %1321 = vdwg.mxu0
          %v1322 = vpack.c.bf16 %v1283, %v1283
          %v1323 = vpack.c.bf16 %v1285, %v1285
          %v1324 = vpack.c.bf16 %v1288, %v1288
          %v1325 = vpack.c.bf16 %v1290, %v1290
          %v1326 = vpack.c.bf16 %v1293, %v1293
          %v1327 = vpack.c.bf16 %v1295, %v1295
          %v1328 = vpack.c.bf16 %v1298, %v1298
          %v1329 = vpack.c.bf16 %v1300, %v1300
          %v1330 = vpack.c.bf16 %v1303, %v1303
          %v1331 = vpack.c.bf16 %v1305, %v1305
          %v1332 = vpack.c.bf16 %v1308, %v1308
          %v1333 = vpack.c.bf16 %v1310, %v1310
          %v1334 = vpack.c.bf16 %v1313, %v1313
          %v1335 = vpack.c.bf16 %v1315, %v1315
          %v1336 = vpack.c.bf16 %v1318, %v1318
          %v1337 = vpack.c.bf16 %v1320, %v1320
          %1338 = vst [vmem:[#allocation3] sm:$0xf] %v1322
          %1339 = vst [vmem:[#allocation3 + $0x4] sm:$0xf] %v1323
          %1340 = vst [vmem:[#allocation3 + $0x8] sm:$0xf] %v1324
          %1341 = vst [vmem:[#allocation3 + $0xc] sm:$0xf] %v1325
          %1342 = vst [vmem:[#allocation3 + $0x10] sm:$0xf] %v1326
          %1343 = vst [vmem:[#allocation3 + $0x14] sm:$0xf] %v1327
          %1344 = vst [vmem:[#allocation3 + $0x18] sm:$0xf] %v1328
          %1345 = vst [vmem:[#allocation3 + $0x1c] sm:$0xf] %v1329
          %1346 = vst [vmem:[#allocation3 + $0x20] sm:$0xf] %v1330
          %1347 = vst [vmem:[#allocation3 + $0x24] sm:$0xf] %v1331
          %1348 = vst [vmem:[#allocation3 + $0x28] sm:$0xf] %v1332
          %1349 = vst [vmem:[#allocation3 + $0x2c] sm:$0xf] %v1333
          %1350 = vst [vmem:[#allocation3 + $0x30] sm:$0xf] %v1334
          %1351 = vst [vmem:[#allocation3 + $0x34] sm:$0xf] %v1335
          %1352 = vst [vmem:[#allocation3 + $0x38] sm:$0xf] %v1336
          %1353 = vst [vmem:[#allocation3 + $0x3c] sm:$0xf] %v1337
          %v1354 = vld [vmem:[#allocation16] sm:$0xf]
          %v1355 = vld [vmem:[#allocation16 + $0x4] sm:$0xf]
          %v1356 = vld [vmem:[#allocation16 + $0x8] sm:$0xf]
          %v1357 = vld [vmem:[#allocation16 + $0xc] sm:$0xf]
          %v1358 = vld [vmem:[#allocation16 + $0x10] sm:$0xf]
          %v1359 = vld [vmem:[#allocation16 + $0x14] sm:$0xf]
          %v1360 = vld [vmem:[#allocation16 + $0x18] sm:$0xf]
          %v1361 = vld [vmem:[#allocation16 + $0x1c] sm:$0xf]
          %v1362 = vld [vmem:[#allocation16 + $0x20] sm:$0xf]
          %v1363 = vld [vmem:[#allocation16 + $0x24] sm:$0xf]
          %v1364 = vld [vmem:[#allocation16 + $0x28] sm:$0xf]
          %v1365 = vld [vmem:[#allocation16 + $0x2c] sm:$0xf]
          %v1366 = vld [vmem:[#allocation16 + $0x30] sm:$0xf]
          %v1367 = vld [vmem:[#allocation16 + $0x34] sm:$0xf]
          %v1368 = vld [vmem:[#allocation16 + $0x38] sm:$0xf]
          %v1369 = vld [vmem:[#allocation16 + $0x3c] sm:$0xf]
          %v1370 = vld [vmem:[#allocation17] sm:$0x1]
          %v1372 = vperm.slane %v1370, 0
          %v1390 = vunpack.c.l.b16 %v1354
          %v1391 = vunpack.c.l.b16 %v1355
          %v1392 = vunpack.c.l.b16 %v1356
          %v1393 = vunpack.c.l.b16 %v1357
          %v1394 = vunpack.c.l.b16 %v1358
          %v1395 = vunpack.c.l.b16 %v1359
          %v1396 = vunpack.c.l.b16 %v1360
          %v1397 = vunpack.c.l.b16 %v1361
          %v1398 = vunpack.c.l.b16 %v1362
          %v1399 = vunpack.c.l.b16 %v1363
          %v1400 = vunpack.c.l.b16 %v1364
          %v1401 = vunpack.c.l.b16 %v1365
          %v1402 = vunpack.c.l.b16 %v1366
          %v1403 = vunpack.c.l.b16 %v1367
          %v1404 = vunpack.c.l.b16 %v1368
          %v1405 = vunpack.c.l.b16 %v1369
          %v1406 = vpack.c.b16 %v1391, %v1390
          %v1407 = vpack.c.b16 %v1393, %v1392
          %v1408 = vpack.c.b16 %v1395, %v1394
          %v1409 = vpack.c.b16 %v1397, %v1396
          %v1410 = vpack.c.b16 %v1399, %v1398
          %v1411 = vpack.c.b16 %v1401, %v1400
          %v1412 = vpack.c.b16 %v1403, %v1402
          %v1413 = vpack.c.b16 %v1405, %v1404
          %1422 = vmatpush.bf16.msra.mxu0 %v1413
          %1423 = vmatpush.bf16.msra.mxu0 %v1412
          %1424 = vmatpush.bf16.msra.mxu0 %v1411
          %1425 = vmatpush.bf16.msra.mxu0 %v1410
          %1426 = vmatpush.bf16.msra.mxu0 %v1409
          %1427 = vmatpush.bf16.msra.mxu0 %v1408
          %1428 = vmatpush.bf16.msra.mxu0 %v1407
          %1429 = vmatpush.bf16.msra.mxu0 %v1406
          %1430 = vmatmul.bf16.gmra.mxu0 %v1209
          %v1431 = vpop.f32.mrf.mxu0
          %v1432 = vadd.f32 %v1372, %v1431
          %v1433 = vpop.f32.mrf.mxu0
          %v1434 = vadd.f32 %v1372, %v1433
          %1435 = vmatmul.bf16.gmra.mxu0 %v1210
          %v1436 = vpop.f32.mrf.mxu0
          %v1437 = vadd.f32 %v1372, %v1436
          %v1438 = vpop.f32.mrf.mxu0
          %v1439 = vadd.f32 %v1372, %v1438
          %1440 = vmatmul.bf16.gmra.mxu0 %v1211
          %v1441 = vpop.f32.mrf.mxu0
          %v1442 = vadd.f32 %v1372, %v1441
          %v1443 = vpop.f32.mrf.mxu0
          %v1444 = vadd.f32 %v1372, %v1443
          %1445 = vmatmul.bf16.gmra.mxu0 %v1212
          %v1446 = vpop.f32.mrf.mxu0
          %v1447 = vadd.f32 %v1372, %v1446
          %v1448 = vpop.f32.mrf.mxu0
          %v1449 = vadd.f32 %v1372, %v1448
          %1450 = vmatmul.bf16.gmra.mxu0 %v1213
          %v1451 = vpop.f32.mrf.mxu0
          %v1452 = vadd.f32 %v1372, %v1451
          %v1453 = vpop.f32.mrf.mxu0
          %v1454 = vadd.f32 %v1372, %v1453
          %1455 = vmatmul.bf16.gmra.mxu0 %v1214
          %v1456 = vpop.f32.mrf.mxu0
          %v1457 = vadd.f32 %v1372, %v1456
          %v1458 = vpop.f32.mrf.mxu0
          %v1459 = vadd.f32 %v1372, %v1458
          %1460 = vmatmul.bf16.gmra.mxu0 %v1215
          %v1461 = vpop.f32.mrf.mxu0
          %v1462 = vadd.f32 %v1372, %v1461
          %v1463 = vpop.f32.mrf.mxu0
          %v1464 = vadd.f32 %v1372, %v1463
          %1465 = vmatmul.bf16.gmra.mxu0 %v1216
          %v1466 = vpop.f32.mrf.mxu0
          %v1467 = vadd.f32 %v1372, %v1466
          %v1468 = vpop.f32.mrf.mxu0
          %v1469 = vadd.f32 %v1372, %v1468
          %1470 = vdwg.mxu0
          %v1471 = vpack.c.bf16 %v1432, %v1432
          %v1472 = vpack.c.bf16 %v1434, %v1434
          %v1473 = vpack.c.bf16 %v1437, %v1437
          %v1474 = vpack.c.bf16 %v1439, %v1439
          %v1475 = vpack.c.bf16 %v1442, %v1442
          %v1476 = vpack.c.bf16 %v1444, %v1444
          %v1477 = vpack.c.bf16 %v1447, %v1447
          %v1478 = vpack.c.bf16 %v1449, %v1449
          %v1479 = vpack.c.bf16 %v1452, %v1452
          %v1480 = vpack.c.bf16 %v1454, %v1454
          %v1481 = vpack.c.bf16 %v1457, %v1457
          %v1482 = vpack.c.bf16 %v1459, %v1459
          %v1483 = vpack.c.bf16 %v1462, %v1462
          %v1484 = vpack.c.bf16 %v1464, %v1464
          %v1485 = vpack.c.bf16 %v1467, %v1467
          %v1486 = vpack.c.bf16 %v1469, %v1469
          %1487 = vst [vmem:[#allocation4] sm:$0xf] %v1471
          %1488 = vst [vmem:[#allocation4 + $0x4] sm:$0xf] %v1472
          %1489 = vst [vmem:[#allocation4 + $0x8] sm:$0xf] %v1473
          %1490 = vst [vmem:[#allocation4 + $0xc] sm:$0xf] %v1474
          %1491 = vst [vmem:[#allocation4 + $0x10] sm:$0xf] %v1475
          %1492 = vst [vmem:[#allocation4 + $0x14] sm:$0xf] %v1476
          %1493 = vst [vmem:[#allocation4 + $0x18] sm:$0xf] %v1477
          %1494 = vst [vmem:[#allocation4 + $0x1c] sm:$0xf] %v1478
          %1495 = vst [vmem:[#allocation4 + $0x20] sm:$0xf] %v1479
          %1496 = vst [vmem:[#allocation4 + $0x24] sm:$0xf] %v1480
          %1497 = vst [vmem:[#allocation4 + $0x28] sm:$0xf] %v1481
          %1498 = vst [vmem:[#allocation4 + $0x2c] sm:$0xf] %v1482
          %1499 = vst [vmem:[#allocation4 + $0x30] sm:$0xf] %v1483
          %1500 = vst [vmem:[#allocation4 + $0x34] sm:$0xf] %v1484
          %1501 = vst [vmem:[#allocation4 + $0x38] sm:$0xf] %v1485
          %1502 = vst [vmem:[#allocation4 + $0x3c] sm:$0xf] %v1486
        $region136: #{tpu_custom_call.1} parent=87 // pred_fallthru
          _
        %s1503 = smul.u32 %s44, 64
        %s1504 = scalar_lea.vmem %s634, %s1503 [#allocation5]
        %v1505 = vld [vmem:[%s1504] sm:$0xff]
        %v1506 = vld [vmem:[%s1504 + $0x8] sm:$0xff]
        %v1507 = vld [vmem:[%s1504 + $0x10] sm:$0xff]
        %v1508 = vld [vmem:[%s1504 + $0x18] sm:$0xff]
        %v1509 = vld [vmem:[%s1504 + $0x20] sm:$0xff]
        %v1510 = vld [vmem:[%s1504 + $0x28] sm:$0xff]
        %v1511 = vld [vmem:[%s1504 + $0x30] sm:$0xff]
        %v1512 = vld [vmem:[%s1504 + $0x38] sm:$0xff]
        %s1513 = sshra.s32 %s1503, 3
        %s1514 = sand.u32 %s1503, 7
        %s1515 = smul.addr %s1513, 4
        %s1516 = scalar_lea.vmem [#allocation2], %s1515
        %v1517 = vld [vmem:[%s1516] sm:$0xf]
        %v1518 = vld [vmem:[%s1516 + $0x4] sm:$0xf]
        %v1519 = vld [vmem:[%s1516 + $0x8] sm:$0xf]
        %v1520 = vld [vmem:[%s1516 + $0xc] sm:$0xf]
        %v1521 = vld [vmem:[%s1516 + $0x10] sm:$0xf]
        %v1522 = vld [vmem:[%s1516 + $0x14] sm:$0xf]
        %v1523 = vld [vmem:[%s1516 + $0x18] sm:$0xf]
        %v1524 = vld [vmem:[%s1516 + $0x1c] sm:$0xf]
        %v1525 = vld [vmem:[#allocation11] sm:$0xf]
        %v1526 = vld [vmem:[#allocation11 + $0x4] sm:$0xf]
        %v1527 = vld [vmem:[#allocation11 + $0x8] sm:$0xf]
        %v1528 = vld [vmem:[#allocation11 + $0xc] sm:$0xf]
        %v1529 = vld [vmem:[#allocation11 + $0x10] sm:$0xf]
        %v1530 = vld [vmem:[#allocation11 + $0x14] sm:$0xf]
        %v1531 = vld [vmem:[#allocation11 + $0x18] sm:$0xf]
        %v1532 = vld [vmem:[#allocation11 + $0x1c] sm:$0xf]
        %v1533 = vld [vmem:[#allocation11 + $0x20] sm:$0xf]
        %v1534 = vld [vmem:[#allocation11 + $0x24] sm:$0xf]
        %v1535 = vld [vmem:[#allocation11 + $0x28] sm:$0xf]
        %v1536 = vld [vmem:[#allocation11 + $0x2c] sm:$0xf]
        %v1537 = vld [vmem:[#allocation11 + $0x30] sm:$0xf]
        %v1538 = vld [vmem:[#allocation11 + $0x34] sm:$0xf]
        %v1539 = vld [vmem:[#allocation11 + $0x38] sm:$0xf]
        %v1540 = vld [vmem:[#allocation11 + $0x3c] sm:$0xf]
        %v1541 = vld [vmem:[#allocation13] sm:$0x1]
        %v1543 = vperm.slane %v1541, 0
        %v1553 = vunpack.c.l.b16 %v1517
        %v1554 = vunpack.c.l.b16 %v1518
        %v1555 = vunpack.c.l.b16 %v1519
        %v1556 = vunpack.c.l.b16 %v1520
        %v1557 = vunpack.c.l.b16 %v1521
        %v1558 = vunpack.c.l.b16 %v1522
        %v1559 = vunpack.c.l.b16 %v1523
        %v1560 = vunpack.c.l.b16 %v1524
        %v1561 = vpack.c.b16 %v1554, %v1553
        %v1562 = vpack.c.b16 %v1556, %v1555
        %v1563 = vpack.c.b16 %v1558, %v1557
        %v1564 = vpack.c.b16 %v1560, %v1559
        %v1585 = vunpack.c.l.b16 %v1525
        %v1586 = vunpack.c.l.b16 %v1526
        %v1587 = vunpack.c.l.b16 %v1527
        %v1588 = vunpack.c.l.b16 %v1528
        %v1589 = vunpack.c.l.b16 %v1529
        %v1590 = vunpack.c.l.b16 %v1530
        %v1591 = vunpack.c.l.b16 %v1531
        %v1592 = vunpack.c.l.b16 %v1532
        %v1593 = vunpack.c.l.b16 %v1533
        %v1594 = vunpack.c.l.b16 %v1534
        %v1595 = vunpack.c.l.b16 %v1535
        %v1596 = vunpack.c.l.b16 %v1536
        %v1597 = vunpack.c.l.b16 %v1537
        %v1598 = vunpack.c.l.b16 %v1538
        %v1599 = vunpack.c.l.b16 %v1539
        %v1600 = vunpack.c.l.b16 %v1540
        %v1601 = vpack.c.b16 %v1586, %v1585
        %v1602 = vpack.c.b16 %v1588, %v1587
        %v1603 = vpack.c.b16 %v1590, %v1589
        %v1604 = vpack.c.b16 %v1592, %v1591
        %v1605 = vpack.c.b16 %v1594, %v1593
        %v1606 = vpack.c.b16 %v1596, %v1595
        %v1607 = vpack.c.b16 %v1598, %v1597
        %v1608 = vpack.c.b16 %v1600, %v1599
        %1617 = vmatpush.bf16.msra.mxu0 %v1608
        %1618 = vmatpush.bf16.msra.mxu0 %v1607
        %1619 = vmatpush.bf16.msra.mxu0 %v1606
        %1620 = vmatpush.bf16.msra.mxu0 %v1605
        %1621 = vmatpush.bf16.msra.mxu0 %v1604
        %1622 = vmatpush.bf16.msra.mxu0 %v1603
        %1623 = vmatpush.bf16.msra.mxu0 %v1602
        %1624 = vmatpush.bf16.msra.mxu0 %v1601
        %1625 = vmatmul.bf16.gmra.mxu0 %v1561
        %v1626 = vpop.f32.mrf.mxu0
        %v1627 = vadd.f32 %v1543, %v1626
        %v1628 = vpop.f32.mrf.mxu0
        %v1629 = vadd.f32 %v1543, %v1628
        %1630 = vmatmul.bf16.gmra.mxu0 %v1562
        %v1631 = vpop.f32.mrf.mxu0
        %v1632 = vadd.f32 %v1543, %v1631
        %v1633 = vpop.f32.mrf.mxu0
        %v1634 = vadd.f32 %v1543, %v1633
        %1635 = vmatmul.bf16.gmra.mxu0 %v1563
        %v1636 = vpop.f32.mrf.mxu0
        %v1637 = vadd.f32 %v1543, %v1636
        %v1638 = vpop.f32.mrf.mxu0
        %v1639 = vadd.f32 %v1543, %v1638
        %1640 = vmatmul.bf16.gmra.mxu0 %v1564
        %v1641 = vpop.f32.mrf.mxu0
        %v1642 = vadd.f32 %v1543, %v1641
        %v1643 = vpop.f32.mrf.mxu0
        %v1644 = vadd.f32 %v1543, %v1643
        %1645 = vdwg.mxu0
        %v1646 = vmul.f32 %v1627, 0.17677669
        %v1647 = vmul.f32 %v1629, 0.17677669
        %v1648 = vmul.f32 %v1632, 0.17677669
        %v1649 = vmul.f32 %v1634, 0.17677669
        %v1650 = vmul.f32 %v1637, 0.17677669
        %v1651 = vmul.f32 %v1639, 0.17677669
        %v1652 = vmul.f32 %v1642, 0.17677669
        %v1653 = vmul.f32 %v1644, 0.17677669
        %v1654 = vpack.c.bf16 %v1647, %v1646
        %v1655 = vpack.c.bf16 %v1649, %v1648
        %v1656 = vpack.c.bf16 %v1651, %v1650
        %v1657 = vpack.c.bf16 %v1653, %v1652
        %v1658 = vld [vmem:[#allocation3] sm:$0xf]
        %v1659 = vld [vmem:[#allocation3 + $0x4] sm:$0xf]
        %v1660 = vld [vmem:[#allocation3 + $0x8] sm:$0xf]
        %v1661 = vld [vmem:[#allocation3 + $0xc] sm:$0xf]
        %v1662 = vld [vmem:[#allocation3 + $0x10] sm:$0xf]
        %v1663 = vld [vmem:[#allocation3 + $0x14] sm:$0xf]
        %v1664 = vld [vmem:[#allocation3 + $0x18] sm:$0xf]
        %v1665 = vld [vmem:[#allocation3 + $0x1c] sm:$0xf]
        %v1666 = vld [vmem:[#allocation3 + $0x20] sm:$0xf]
        %v1667 = vld [vmem:[#allocation3 + $0x24] sm:$0xf]
        %v1668 = vld [vmem:[#allocation3 + $0x28] sm:$0xf]
        %v1669 = vld [vmem:[#allocation3 + $0x2c] sm:$0xf]
        %v1670 = vld [vmem:[#allocation3 + $0x30] sm:$0xf]
        %v1671 = vld [vmem:[#allocation3 + $0x34] sm:$0xf]
        %v1672 = vld [vmem:[#allocation3 + $0x38] sm:$0xf]
        %v1673 = vld [vmem:[#allocation3 + $0x3c] sm:$0xf]
        %v1674 = vld [vmem:[#allocation4] sm:$0xf]
        %v1675 = vld [vmem:[#allocation4 + $0x4] sm:$0xf]
        %v1676 = vld [vmem:[#allocation4 + $0x8] sm:$0xf]
        %v1677 = vld [vmem:[#allocation4 + $0xc] sm:$0xf]
        %v1678 = vld [vmem:[#allocation4 + $0x10] sm:$0xf]
        %v1679 = vld [vmem:[#allocation4 + $0x14] sm:$0xf]
        %v1680 = vld [vmem:[#allocation4 + $0x18] sm:$0xf]
        %v1681 = vld [vmem:[#allocation4 + $0x1c] sm:$0xf]
        %v1682 = vld [vmem:[#allocation4 + $0x20] sm:$0xf]
        %v1683 = vld [vmem:[#allocation4 + $0x24] sm:$0xf]
        %v1684 = vld [vmem:[#allocation4 + $0x28] sm:$0xf]
        %v1685 = vld [vmem:[#allocation4 + $0x2c] sm:$0xf]
        %v1686 = vld [vmem:[#allocation4 + $0x30] sm:$0xf]
        %v1687 = vld [vmem:[#allocation4 + $0x34] sm:$0xf]
        %v1688 = vld [vmem:[#allocation4 + $0x38] sm:$0xf]
        %v1689 = vld [vmem:[#allocation4 + $0x3c] sm:$0xf]
        %v1706 = vunpack.c.l.b16 %v1658
        %v1707 = vunpack.c.l.b16 %v1659
        %v1708 = vunpack.c.l.b16 %v1660
        %v1709 = vunpack.c.l.b16 %v1661
        %v1710 = vunpack.c.l.b16 %v1662
        %v1711 = vunpack.c.l.b16 %v1663
        %v1712 = vunpack.c.l.b16 %v1664
        %v1713 = vunpack.c.l.b16 %v1665
        %v1714 = vunpack.c.l.b16 %v1666
        %v1715 = vunpack.c.l.b16 %v1667
        %v1716 = vunpack.c.l.b16 %v1668
        %v1717 = vunpack.c.l.b16 %v1669
        %v1718 = vunpack.c.l.b16 %v1670
        %v1719 = vunpack.c.l.b16 %v1671
        %v1720 = vunpack.c.l.b16 %v1672
        %v1721 = vunpack.c.l.b16 %v1673
        %v1722 = vpack.c.b16 %v1707, %v1706
        %v1723 = vpack.c.b16 %v1709, %v1708
        %v1724 = vpack.c.b16 %v1711, %v1710
        %v1725 = vpack.c.b16 %v1713, %v1712
        %v1726 = vpack.c.b16 %v1715, %v1714
        %v1727 = vpack.c.b16 %v1717, %v1716
        %v1728 = vpack.c.b16 %v1719, %v1718
        %v1729 = vpack.c.b16 %v1721, %v1720
        %vm1730 = vcmask 261120
        %v1732 = vsel %vm1730, %v1654, 0
        %v1735 = vsel %vm1730, %v1655, 0
        %v1738 = vsel %vm1730, %v1656, 0
        %v1741 = vsel %vm1730, %v1657, 0
        %v1744 = vsel %vm1730, %v1722, 0
        %v1747 = vsel %vm1730, %v1723, 0
        %v1750 = vsel %vm1730, %v1724, 0
        %v1753 = vsel %vm1730, %v1725, 0
        %v1756 = vsel %vm1730, %v1726, 0
        %v1759 = vsel %vm1730, %v1727, 0
        %v1762 = vsel %vm1730, %v1728, 0
        %v1765 = vsel %vm1730, %v1729, 0
        %1767 = vmatpush.bf16.xpose.msra.mxu0 %v1765
        %1768 = vmatpush.bf16.xpose.msra.mxu0 %v1762
        %1769 = vmatpush.bf16.xpose.msra.mxu0 %v1759
        %1770 = vmatpush.bf16.xpose.msra.mxu0 %v1756
        %1771 = vmatpush.bf16.xpose.msra.mxu0 %v1753
        %1772 = vmatpush.bf16.xpose.msra.mxu0 %v1750
        %1773 = vmatpush.bf16.xpose.msra.mxu0 %v1747
        %1774 = vmatpush.bf16.xpose.msra.mxu0 %v1744
        %1775 = vmatmul.bf16.gmra.mxu0 %v1732
        %v1776 = vpop.f32.mrf.mxu0
        %v1777 = vadd.f32 0.0, %v1776
        %v1778 = vpop.f32.mrf.mxu0
        %v1779 = vadd.f32 0.0, %v1778
        %1780 = vmatmul.bf16.gmra.mxu0 %v1735
        %v1781 = vpop.f32.mrf.mxu0
        %v1782 = vadd.f32 0.0, %v1781
        %v1783 = vpop.f32.mrf.mxu0
        %v1784 = vadd.f32 0.0, %v1783
        %1785 = vmatmul.bf16.gmra.mxu0 %v1738
        %v1786 = vpop.f32.mrf.mxu0
        %v1787 = vadd.f32 0.0, %v1786
        %v1788 = vpop.f32.mrf.mxu0
        %v1789 = vadd.f32 0.0, %v1788
        %1790 = vmatmul.bf16.gmra.mxu0 %v1741
        %v1791 = vpop.f32.mrf.mxu0
        %v1792 = vadd.f32 0.0, %v1791
        %v1793 = vpop.f32.mrf.mxu0
        %v1794 = vadd.f32 0.0, %v1793
        %1795 = vdwg.mxu0
        %1796 = vmax.xlane.f32.xlu0 %v1777
        %v1797 = vpop.xlane.xlu0 %1796
        %1798 = vmax.xlane.f32.xlu0 %v1779
        %v1799 = vpop.xlane.xlu0 %1798
        %1800 = vmax.xlane.f32.xlu0 %v1782
        %v1801 = vpop.xlane.xlu0 %1800
        %1802 = vmax.xlane.f32.xlu0 %v1784
        %v1803 = vpop.xlane.xlu0 %1802
        %1804 = vmax.xlane.f32.xlu0 %v1787
        %v1805 = vpop.xlane.xlu0 %1804
        %1806 = vmax.xlane.f32.xlu0 %v1789
        %v1807 = vpop.xlane.xlu0 %1806
        %1808 = vmax.xlane.f32.xlu0 %v1792
        %v1809 = vpop.xlane.xlu0 %1808
        %1810 = vmax.xlane.f32.xlu0 %v1794
        %v1811 = vpop.xlane.xlu0 %1810
        %v1812 = vsub.f32 %v1777, %v1797
        %v1813 = vsub.f32 %v1779, %v1799
        %v1814 = vsub.f32 %v1782, %v1801
        %v1815 = vsub.f32 %v1784, %v1803
        %v1816 = vsub.f32 %v1787, %v1805
        %v1817 = vsub.f32 %v1789, %v1807
        %v1818 = vsub.f32 %v1792, %v1809
        %v1819 = vsub.f32 %v1794, %v1811
        %v1820 = vmul.f32 %v1812, 1.442695
        %v1821 = vpow.pop %v1820
        %v1822 = vmul.f32 %v1813, 1.442695
        %v1823 = vpow.pop %v1822
        %v1824 = vmul.f32 %v1814, 1.442695
        %v1825 = vpow.pop %v1824
        %v1826 = vmul.f32 %v1815, 1.442695
        %v1827 = vpow.pop %v1826
        %v1828 = vmul.f32 %v1816, 1.442695
        %v1829 = vpow.pop %v1828
        %v1830 = vmul.f32 %v1817, 1.442695
        %v1831 = vpow.pop %v1830
        %v1832 = vmul.f32 %v1818, 1.442695
        %v1833 = vpow.pop %v1832
        %v1834 = vmul.f32 %v1819, 1.442695
        %v1835 = vpow.pop %v1834
        %1836 = vadd.xlane.f32.xlu0 %v1821
        %v1837 = vpop.xlane.xlu0 %1836
        %1838 = vadd.xlane.f32.xlu0 %v1823
        %v1839 = vpop.xlane.xlu0 %1838
        %1840 = vadd.xlane.f32.xlu0 %v1825
        %v1841 = vpop.xlane.xlu0 %1840
        %1842 = vadd.xlane.f32.xlu0 %v1827
        %v1843 = vpop.xlane.xlu0 %1842
        %1844 = vadd.xlane.f32.xlu0 %v1829
        %v1845 = vpop.xlane.xlu0 %1844
        %1846 = vadd.xlane.f32.xlu0 %v1831
        %v1847 = vpop.xlane.xlu0 %1846
        %1848 = vadd.xlane.f32.xlu0 %v1833
        %v1849 = vpop.xlane.xlu0 %1848
        %1850 = vadd.xlane.f32.xlu0 %v1835
        %v1851 = vpop.xlane.xlu0 %1850
        %v1852 = vrcp.pop %v1837
        %v1853 = vrcp.pop %v1839
        %v1854 = vrcp.pop %v1841
        %v1855 = vrcp.pop %v1843
        %v1856 = vrcp.pop %v1845
        %v1857 = vrcp.pop %v1847
        %v1858 = vrcp.pop %v1849
        %v1859 = vrcp.pop %v1851
        %v1860 = vmul.f32 %v1821, %v1852
        %v1861 = vmul.f32 %v1823, %v1853
        %v1862 = vmul.f32 %v1825, %v1854
        %v1863 = vmul.f32 %v1827, %v1855
        %v1864 = vmul.f32 %v1829, %v1856
        %v1865 = vmul.f32 %v1831, %v1857
        %v1866 = vmul.f32 %v1833, %v1858
        %v1867 = vmul.f32 %v1835, %v1859
        %v1868 = vpack.c.bf16 %v1861, %v1860
        %v1869 = vpack.c.bf16 %v1863, %v1862
        %v1870 = vpack.c.bf16 %v1865, %v1864
        %v1871 = vpack.c.bf16 %v1867, %v1866
        %v1888 = vunpack.c.l.b16 %v1674
        %v1889 = vunpack.c.l.b16 %v1675
        %v1890 = vunpack.c.l.b16 %v1676
        %v1891 = vunpack.c.l.b16 %v1677
        %v1892 = vunpack.c.l.b16 %v1678
        %v1893 = vunpack.c.l.b16 %v1679
        %v1894 = vunpack.c.l.b16 %v1680
        %v1895 = vunpack.c.l.b16 %v1681
        %v1896 = vunpack.c.l.b16 %v1682
        %v1897 = vunpack.c.l.b16 %v1683
        %v1898 = vunpack.c.l.b16 %v1684
        %v1899 = vunpack.c.l.b16 %v1685
        %v1900 = vunpack.c.l.b16 %v1686
        %v1901 = vunpack.c.l.b16 %v1687
        %v1902 = vunpack.c.l.b16 %v1688
        %v1903 = vunpack.c.l.b16 %v1689
        %v1904 = vpack.c.b16 %v1889, %v1888
        %v1905 = vpack.c.b16 %v1891, %v1890
        %v1906 = vpack.c.b16 %v1893, %v1892
        %v1907 = vpack.c.b16 %v1895, %v1894
        %v1908 = vpack.c.b16 %v1897, %v1896
        %v1909 = vpack.c.b16 %v1899, %v1898
        %v1910 = vpack.c.b16 %v1901, %v1900
        %v1911 = vpack.c.b16 %v1903, %v1902
        %1920 = vmatpush.bf16.msra.mxu0 %v1911
        %1921 = vmatpush.bf16.msra.mxu0 %v1910
        %1922 = vmatpush.bf16.msra.mxu0 %v1909
        %1923 = vmatpush.bf16.msra.mxu0 %v1908
        %1924 = vmatpush.bf16.msra.mxu0 %v1907
        %1925 = vmatpush.bf16.msra.mxu0 %v1906
        %1926 = vmatpush.bf16.msra.mxu0 %v1905
        %1927 = vmatpush.bf16.msra.mxu0 %v1904
        %1928 = vmatmul.bf16.gmra.mxu0 %v1868
        %v1929 = vpop.f32.mrf.mxu0
        %v1930 = vadd.f32 0.0, %v1929
        %v1931 = vpop.f32.mrf.mxu0
        %v1932 = vadd.f32 0.0, %v1931
        %1933 = vmatmul.bf16.gmra.mxu0 %v1869
        %v1934 = vpop.f32.mrf.mxu0
        %v1935 = vadd.f32 0.0, %v1934
        %v1936 = vpop.f32.mrf.mxu0
        %v1937 = vadd.f32 0.0, %v1936
        %1938 = vmatmul.bf16.gmra.mxu0 %v1870
        %v1939 = vpop.f32.mrf.mxu0
        %v1940 = vadd.f32 0.0, %v1939
        %v1941 = vpop.f32.mrf.mxu0
        %v1942 = vadd.f32 0.0, %v1941
        %1943 = vmatmul.bf16.gmra.mxu0 %v1871
        %v1944 = vpop.f32.mrf.mxu0
        %v1945 = vadd.f32 0.0, %v1944
        %v1946 = vpop.f32.mrf.mxu0
        %v1947 = vadd.f32 0.0, %v1946
        %1948 = vdwg.mxu0
        %v1949 = vpack.c.bf16 %v1932, %v1930
        %v1950 = vpack.c.bf16 %v1937, %v1935
        %v1951 = vpack.c.bf16 %v1942, %v1940
        %v1952 = vpack.c.bf16 %v1947, %v1945
        %v1953 = vld [vmem:[#allocation19] sm:$0xf]
        %v1954 = vld [vmem:[#allocation19 + $0x4] sm:$0xf]
        %v1955 = vld [vmem:[#allocation19 + $0x8] sm:$0xf]
        %v1956 = vld [vmem:[#allocation19 + $0xc] sm:$0xf]
        %1961 = vrot.lane.b32.xlu0 %v1654, 96
        %v1962 = vpop.permute.xlu0 %1961
        %1963 = vrot.lane.b32.xlu0 %v1655, 96
        %v1964 = vpop.permute.xlu0 %1963
        %1965 = vrot.lane.b32.xlu0 %v1656, 96
        %v1966 = vpop.permute.xlu0 %1965
        %1967 = vrot.lane.b32.xlu0 %v1657, 96
        %v1968 = vpop.permute.xlu0 %1967
        %1969 = vrot.lane.b32.xlu0 %v1722, 96
        %v1970 = vpop.permute.xlu0 %1969
        %1971 = vrot.lane.b32.xlu0 %v1723, 96
        %v1972 = vpop.permute.xlu0 %1971
        %1973 = vrot.lane.b32.xlu0 %v1724, 96
        %v1974 = vpop.permute.xlu0 %1973
        %1975 = vrot.lane.b32.xlu0 %v1725, 96
        %v1976 = vpop.permute.xlu0 %1975
        %1977 = vrot.lane.b32.xlu0 %v1726, 96
        %v1978 = vpop.permute.xlu0 %1977
        %1979 = vrot.lane.b32.xlu0 %v1727, 96
        %v1980 = vpop.permute.xlu0 %1979
        %1981 = vrot.lane.b32.xlu0 %v1728, 96
        %v1982 = vpop.permute.xlu0 %1981
        %1983 = vrot.lane.b32.xlu0 %v1729, 96
        %v1984 = vpop.permute.xlu0 %1983
        %v1986 = vsel %vm1730, %v1962, 0
        %v1989 = vsel %vm1730, %v1964, 0
        %v1992 = vsel %vm1730, %v1966, 0
        %v1995 = vsel %vm1730, %v1968, 0
        %v1998 = vsel %vm1730, %v1970, 0
        %v2001 = vsel %vm1730, %v1972, 0
        %v2004 = vsel %vm1730, %v1974, 0
        %v2007 = vsel %vm1730, %v1976, 0
        %v2010 = vsel %vm1730, %v1978, 0
        %v2013 = vsel %vm1730, %v1980, 0
        %v2016 = vsel %vm1730, %v1982, 0
        %v2019 = vsel %vm1730, %v1984, 0
        %2021 = vmatpush.bf16.xpose.msra.mxu0 %v2019
        %2022 = vmatpush.bf16.xpose.msra.mxu0 %v2016
        %2023 = vmatpush.bf16.xpose.msra.mxu0 %v2013
        %2024 = vmatpush.bf16.xpose.msra.mxu0 %v2010
        %2025 = vmatpush.bf16.xpose.msra.mxu0 %v2007
        %2026 = vmatpush.bf16.xpose.msra.mxu0 %v2004
        %2027 = vmatpush.bf16.xpose.msra.mxu0 %v2001
        %2028 = vmatpush.bf16.xpose.msra.mxu0 %v1998
        %2029 = vmatmul.bf16.gmra.mxu0 %v1986
        %v2030 = vpop.f32.mrf.mxu0
        %v2031 = vadd.f32 0.0, %v2030
        %v2032 = vpop.f32.mrf.mxu0
        %v2033 = vadd.f32 0.0, %v2032
        %2034 = vmatmul.bf16.gmra.mxu0 %v1989
        %v2035 = vpop.f32.mrf.mxu0
        %v2036 = vadd.f32 0.0, %v2035
        %v2037 = vpop.f32.mrf.mxu0
        %v2038 = vadd.f32 0.0, %v2037
        %2039 = vmatmul.bf16.gmra.mxu0 %v1992
        %v2040 = vpop.f32.mrf.mxu0
        %v2041 = vadd.f32 0.0, %v2040
        %v2042 = vpop.f32.mrf.mxu0
        %v2043 = vadd.f32 0.0, %v2042
        %2044 = vmatmul.bf16.gmra.mxu0 %v1995
        %v2045 = vpop.f32.mrf.mxu0
        %v2046 = vadd.f32 0.0, %v2045
        %v2047 = vpop.f32.mrf.mxu0
        %v2048 = vadd.f32 0.0, %v2047
        %2049 = vdwg.mxu0
        %2050 = vmax.xlane.f32.xlu0 %v2031
        %v2051 = vpop.xlane.xlu0 %2050
        %2052 = vmax.xlane.f32.xlu0 %v2033
        %v2053 = vpop.xlane.xlu0 %2052
        %2054 = vmax.xlane.f32.xlu0 %v2036
        %v2055 = vpop.xlane.xlu0 %2054
        %2056 = vmax.xlane.f32.xlu0 %v2038
        %v2057 = vpop.xlane.xlu0 %2056
        %2058 = vmax.xlane.f32.xlu0 %v2041
        %v2059 = vpop.xlane.xlu0 %2058
        %2060 = vmax.xlane.f32.xlu0 %v2043
        %v2061 = vpop.xlane.xlu0 %2060
        %2062 = vmax.xlane.f32.xlu0 %v2046
        %v2063 = vpop.xlane.xlu0 %2062
        %2064 = vmax.xlane.f32.xlu0 %v2048
        %v2065 = vpop.xlane.xlu0 %2064
        %v2066 = vsub.f32 %v2031, %v2051
        %v2067 = vsub.f32 %v2033, %v2053
        %v2068 = vsub.f32 %v2036, %v2055
        %v2069 = vsub.f32 %v2038, %v2057
        %v2070 = vsub.f32 %v2041, %v2059
        %v2071 = vsub.f32 %v2043, %v2061
        %v2072 = vsub.f32 %v2046, %v2063
        %v2073 = vsub.f32 %v2048, %v2065
        %v2074 = vmul.f32 %v2066, 1.442695
        %v2075 = vpow.pop %v2074
        %v2076 = vmul.f32 %v2067, 1.442695
        %v2077 = vpow.pop %v2076
        %v2078 = vmul.f32 %v2068, 1.442695
        %v2079 = vpow.pop %v2078
        %v2080 = vmul.f32 %v2069, 1.442695
        %v2081 = vpow.pop %v2080
        %v2082 = vmul.f32 %v2070, 1.442695
        %v2083 = vpow.pop %v2082
        %v2084 = vmul.f32 %v2071, 1.442695
        %v2085 = vpow.pop %v2084
        %v2086 = vmul.f32 %v2072, 1.442695
        %v2087 = vpow.pop %v2086
        %v2088 = vmul.f32 %v2073, 1.442695
        %v2089 = vpow.pop %v2088
        %2090 = vadd.xlane.f32.xlu0 %v2075
        %v2091 = vpop.xlane.xlu0 %2090
        %2092 = vadd.xlane.f32.xlu0 %v2077
        %v2093 = vpop.xlane.xlu0 %2092
        %2094 = vadd.xlane.f32.xlu0 %v2079
        %v2095 = vpop.xlane.xlu0 %2094
        %2096 = vadd.xlane.f32.xlu0 %v2081
        %v2097 = vpop.xlane.xlu0 %2096
        %2098 = vadd.xlane.f32.xlu0 %v2083
        %v2099 = vpop.xlane.xlu0 %2098
        %2100 = vadd.xlane.f32.xlu0 %v2085
        %v2101 = vpop.xlane.xlu0 %2100
        %2102 = vadd.xlane.f32.xlu0 %v2087
        %v2103 = vpop.xlane.xlu0 %2102
        %2104 = vadd.xlane.f32.xlu0 %v2089
        %v2105 = vpop.xlane.xlu0 %2104
        %v2106 = vrcp.pop %v2091
        %v2107 = vrcp.pop %v2093
        %v2108 = vrcp.pop %v2095
        %v2109 = vrcp.pop %v2097
        %v2110 = vrcp.pop %v2099
        %v2111 = vrcp.pop %v2101
        %v2112 = vrcp.pop %v2103
        %v2113 = vrcp.pop %v2105
        %v2114 = vmul.f32 %v2075, %v2106
        %v2115 = vmul.f32 %v2077, %v2107
        %v2116 = vmul.f32 %v2079, %v2108
        %v2117 = vmul.f32 %v2081, %v2109
        %v2118 = vmul.f32 %v2083, %v2110
        %v2119 = vmul.f32 %v2085, %v2111
        %v2120 = vmul.f32 %v2087, %v2112
        %v2121 = vmul.f32 %v2089, %v2113
        %v2122 = vpack.c.bf16 %v2115, %v2114
        %v2123 = vpack.c.bf16 %v2117, %v2116
        %v2124 = vpack.c.bf16 %v2119, %v2118
        %v2125 = vpack.c.bf16 %v2121, %v2120
        %2126 = vrot.lane.b32.xlu0 %v1904, 96
        %v2127 = vpop.permute.xlu0 %2126
        %2128 = vrot.lane.b32.xlu0 %v1905, 96
        %v2129 = vpop.permute.xlu0 %2128
        %2130 = vrot.lane.b32.xlu0 %v1906, 96
        %v2131 = vpop.permute.xlu0 %2130
        %2132 = vrot.lane.b32.xlu0 %v1907, 96
        %v2133 = vpop.permute.xlu0 %2132
        %2134 = vrot.lane.b32.xlu0 %v1908, 96
        %v2135 = vpop.permute.xlu0 %2134
        %2136 = vrot.lane.b32.xlu0 %v1909, 96
        %v2137 = vpop.permute.xlu0 %2136
        %2138 = vrot.lane.b32.xlu0 %v1910, 96
        %v2139 = vpop.permute.xlu0 %2138
        %2140 = vrot.lane.b32.xlu0 %v1911, 96
        %v2141 = vpop.permute.xlu0 %2140
        %2150 = vmatpush.bf16.msra.mxu0 %v2141
        %2151 = vmatpush.bf16.msra.mxu0 %v2139
        %2152 = vmatpush.bf16.msra.mxu0 %v2137
        %2153 = vmatpush.bf16.msra.mxu0 %v2135
        %2154 = vmatpush.bf16.msra.mxu0 %v2133
        %2155 = vmatpush.bf16.msra.mxu0 %v2131
        %2156 = vmatpush.bf16.msra.mxu0 %v2129
        %2157 = vmatpush.bf16.msra.mxu0 %v2127
        %2158 = vmatmul.bf16.gmra.mxu0 %v2122
        %v2159 = vpop.f32.mrf.mxu0
        %v2160 = vadd.f32 0.0, %v2159
        %v2161 = vpop.f32.mrf.mxu0
        %v2162 = vadd.f32 0.0, %v2161
        %2163 = vmatmul.bf16.gmra.mxu0 %v2123
        %v2164 = vpop.f32.mrf.mxu0
        %v2165 = vadd.f32 0.0, %v2164
        %v2166 = vpop.f32.mrf.mxu0
        %v2167 = vadd.f32 0.0, %v2166
        %2168 = vmatmul.bf16.gmra.mxu0 %v2124
        %v2169 = vpop.f32.mrf.mxu0
        %v2170 = vadd.f32 0.0, %v2169
        %v2171 = vpop.f32.mrf.mxu0
        %v2172 = vadd.f32 0.0, %v2171
        %2173 = vmatmul.bf16.gmra.mxu0 %v2125
        %v2174 = vpop.f32.mrf.mxu0
        %v2175 = vadd.f32 0.0, %v2174
        %v2176 = vpop.f32.mrf.mxu0
        %v2177 = vadd.f32 0.0, %v2176
        %2178 = vdwg.mxu0
        %v2179 = vpack.c.bf16 %v2162, %v2160
        %v2180 = vpack.c.bf16 %v2167, %v2165
        %v2181 = vpack.c.bf16 %v2172, %v2170
        %v2182 = vpack.c.bf16 %v2177, %v2175
        %s2183 = scalar_lea.vmem [#allocation19], 16
        %v2184 = vld [vmem:[%s2183] sm:$0xf]
        %v2185 = vld [vmem:[%s2183 + $0x4] sm:$0xf]
        %v2186 = vld [vmem:[%s2183 + $0x8] sm:$0xf]
        %v2187 = vld [vmem:[%s2183 + $0xc] sm:$0xf]
        %v2192 = vunpack.c.l.b16 %v2184
        %v2193 = vunpack.c.l.b16 %v2185
        %v2194 = vunpack.c.l.b16 %v2186
        %v2195 = vunpack.c.l.b16 %v2187
        %v2196 = vpack.c.b16 %v2193, %v2192
        %v2197 = vpack.c.b16 %v2195, %v2194
        %v2201 = vsel %vm1730, %v2179, 0
        %v2204 = vsel %vm1730, %v2180, 0
        %v2207 = vsel %vm1730, %v2181, 0
        %v2210 = vsel %vm1730, %v2182, 0
        %2212 = vmatpush.bf16.msra.mxu0 0
        %2213 = vmatpush.bf16.msra.mxu0 0
        %2214 = vmatpush.bf16.msra.mxu0 0
        %2215 = vmatpush.bf16.msra.mxu0 0
        %2216 = vmatpush.bf16.msra.mxu0 0
        %2217 = vmatpush.bf16.msra.mxu0 0
        %2218 = vmatpush.bf16.msra.mxu0 %v2197
        %2219 = vmatpush.bf16.msra.mxu0 %v2196
        %2220 = vmatmul.bf16.gmra.mxu0 %v2201
        %v2221 = vpop.f32.mrf.mxu0
        %v2222 = vadd.f32 0.0, %v2221
        %v2223 = vpop.f32.mrf.mxu0
        %v2224 = vadd.f32 0.0, %v2223
        %2225 = vmatmul.bf16.gmra.mxu0 %v2204
        %v2226 = vpop.f32.mrf.mxu0
        %v2227 = vadd.f32 0.0, %v2226
        %v2228 = vpop.f32.mrf.mxu0
        %v2229 = vadd.f32 0.0, %v2228
        %2230 = vmatmul.bf16.gmra.mxu0 %v2207
        %v2231 = vpop.f32.mrf.mxu0
        %v2232 = vadd.f32 0.0, %v2231
        %v2233 = vpop.f32.mrf.mxu0
        %v2234 = vadd.f32 0.0, %v2233
        %2235 = vmatmul.bf16.gmra.mxu0 %v2210
        %v2236 = vpop.f32.mrf.mxu0
        %v2237 = vadd.f32 0.0, %v2236
        %v2238 = vpop.f32.mrf.mxu0
        %v2239 = vadd.f32 0.0, %v2238
        %2240 = vdwg.mxu0
        %v2245 = vunpack.c.l.b16 %v1953
        %v2246 = vunpack.c.l.b16 %v1954
        %v2247 = vunpack.c.l.b16 %v1955
        %v2248 = vunpack.c.l.b16 %v1956
        %v2249 = vpack.c.b16 %v2246, %v2245
        %v2250 = vpack.c.b16 %v2248, %v2247
        %v2254 = vsel %vm1730, %v1949, 0
        %v2257 = vsel %vm1730, %v1950, 0
        %v2260 = vsel %vm1730, %v1951, 0
        %v2263 = vsel %vm1730, %v1952, 0
        %2265 = vmatpush.bf16.msra.mxu0 0
        %2266 = vmatpush.bf16.msra.mxu0 0
        %2267 = vmatpush.bf16.msra.mxu0 0
        %2268 = vmatpush.bf16.msra.mxu0 0
        %2269 = vmatpush.bf16.msra.mxu0 0
        %2270 = vmatpush.bf16.msra.mxu0 0
        %2271 = vmatpush.bf16.msra.mxu0 %v2250
        %2272 = vmatpush.bf16.msra.mxu0 %v2249
        %2273 = vmatmul.bf16.gmra.mxu0 %v2254
        %v2274 = vpop.f32.mrf.mxu0
        %v2275 = vadd.f32 %v2222, %v2274
        %v2276 = vpop.f32.mrf.mxu0
        %v2277 = vadd.f32 %v2224, %v2276
        %2278 = vmatmul.bf16.gmra.mxu0 %v2257
        %v2279 = vpop.f32.mrf.mxu0
        %v2280 = vadd.f32 %v2227, %v2279
        %v2281 = vpop.f32.mrf.mxu0
        %v2282 = vadd.f32 %v2229, %v2281
        %2283 = vmatmul.bf16.gmra.mxu0 %v2260
        %v2284 = vpop.f32.mrf.mxu0
        %v2285 = vadd.f32 %v2232, %v2284
        %v2286 = vpop.f32.mrf.mxu0
        %v2287 = vadd.f32 %v2234, %v2286
        %2288 = vmatmul.bf16.gmra.mxu0 %v2263
        %v2289 = vpop.f32.mrf.mxu0
        %v2290 = vadd.f32 %v2237, %v2289
        %v2291 = vpop.f32.mrf.mxu0
        %v2292 = vadd.f32 %v2239, %v2291
        %2293 = vdwg.mxu0
        %2294 = vrot.lane.b32.xlu0 %v1654, 64
        %v2295 = vpop.permute.xlu0 %2294
        %2296 = vrot.lane.b32.xlu0 %v1655, 64
        %v2297 = vpop.permute.xlu0 %2296
        %2298 = vrot.lane.b32.xlu0 %v1656, 64
        %v2299 = vpop.permute.xlu0 %2298
        %2300 = vrot.lane.b32.xlu0 %v1657, 64
        %v2301 = vpop.permute.xlu0 %2300
        %2302 = vrot.lane.b32.xlu0 %v1722, 64
        %v2303 = vpop.permute.xlu0 %2302
        %2304 = vrot.lane.b32.xlu0 %v1723, 64
        %v2305 = vpop.permute.xlu0 %2304
        %2306 = vrot.lane.b32.xlu0 %v1724, 64
        %v2307 = vpop.permute.xlu0 %2306
        %2308 = vrot.lane.b32.xlu0 %v1725, 64
        %v2309 = vpop.permute.xlu0 %2308
        %2310 = vrot.lane.b32.xlu0 %v1726, 64
        %v2311 = vpop.permute.xlu0 %2310
        %2312 = vrot.lane.b32.xlu0 %v1727, 64
        %v2313 = vpop.permute.xlu0 %2312
        %2314 = vrot.lane.b32.xlu0 %v1728, 64
        %v2315 = vpop.permute.xlu0 %2314
        %2316 = vrot.lane.b32.xlu0 %v1729, 64
        %v2317 = vpop.permute.xlu0 %2316
        %v2319 = vsel %vm1730, %v2295, 0
        %v2322 = vsel %vm1730, %v2297, 0
        %v2325 = vsel %vm1730, %v2299, 0
        %v2328 = vsel %vm1730, %v2301, 0
        %v2331 = vsel %vm1730, %v2303, 0
        %v2334 = vsel %vm1730, %v2305, 0
        %v2337 = vsel %vm1730, %v2307, 0
        %v2340 = vsel %vm1730, %v2309, 0
        %v2343 = vsel %vm1730, %v2311, 0
        %v2346 = vsel %vm1730, %v2313, 0
        %v2349 = vsel %vm1730, %v2315, 0
        %v2352 = vsel %vm1730, %v2317, 0
        %2354 = vmatpush.bf16.xpose.msra.mxu0 %v2352
        %2355 = vmatpush.bf16.xpose.msra.mxu0 %v2349
        %2356 = vmatpush.bf16.xpose.msra.mxu0 %v2346
        %2357 = vmatpush.bf16.xpose.msra.mxu0 %v2343
        %2358 = vmatpush.bf16.xpose.msra.mxu0 %v2340
        %2359 = vmatpush.bf16.xpose.msra.mxu0 %v2337
        %2360 = vmatpush.bf16.xpose.msra.mxu0 %v2334
        %2361 = vmatpush.bf16.xpose.msra.mxu0 %v2331
        %2362 = vmatmul.bf16.gmra.mxu0 %v2319
        %v2363 = vpop.f32.mrf.mxu0
        %v2364 = vadd.f32 0.0, %v2363
        %v2365 = vpop.f32.mrf.mxu0
        %v2366 = vadd.f32 0.0, %v2365
        %2367 = vmatmul.bf16.gmra.mxu0 %v2322
        %v2368 = vpop.f32.mrf.mxu0
        %v2369 = vadd.f32 0.0, %v2368
        %v2370 = vpop.f32.mrf.mxu0
        %v2371 = vadd.f32 0.0, %v2370
        %2372 = vmatmul.bf16.gmra.mxu0 %v2325
        %v2373 = vpop.f32.mrf.mxu0
        %v2374 = vadd.f32 0.0, %v2373
        %v2375 = vpop.f32.mrf.mxu0
        %v2376 = vadd.f32 0.0, %v2375
        %2377 = vmatmul.bf16.gmra.mxu0 %v2328
        %v2378 = vpop.f32.mrf.mxu0
        %v2379 = vadd.f32 0.0, %v2378
        %v2380 = vpop.f32.mrf.mxu0
        %v2381 = vadd.f32 0.0, %v2380
        %2382 = vdwg.mxu0
        %2383 = vmax.xlane.f32.xlu0 %v2364
        %v2384 = vpop.xlane.xlu0 %2383
        %2385 = vmax.xlane.f32.xlu0 %v2366
        %v2386 = vpop.xlane.xlu0 %2385
        %2387 = vmax.xlane.f32.xlu0 %v2369
        %v2388 = vpop.xlane.xlu0 %2387
        %2389 = vmax.xlane.f32.xlu0 %v2371
        %v2390 = vpop.xlane.xlu0 %2389
        %2391 = vmax.xlane.f32.xlu0 %v2374
        %v2392 = vpop.xlane.xlu0 %2391
        %2393 = vmax.xlane.f32.xlu0 %v2376
        %v2394 = vpop.xlane.xlu0 %2393
        %2395 = vmax.xlane.f32.xlu0 %v2379
        %v2396 = vpop.xlane.xlu0 %2395
        %2397 = vmax.xlane.f32.xlu0 %v2381
        %v2398 = vpop.xlane.xlu0 %2397
        %v2399 = vsub.f32 %v2364, %v2384
        %v2400 = vsub.f32 %v2366, %v2386
        %v2401 = vsub.f32 %v2369, %v2388
        %v2402 = vsub.f32 %v2371, %v2390
        %v2403 = vsub.f32 %v2374, %v2392
        %v2404 = vsub.f32 %v2376, %v2394
        %v2405 = vsub.f32 %v2379, %v2396
        %v2406 = vsub.f32 %v2381, %v2398
        %v2407 = vmul.f32 %v2399, 1.442695
        %v2408 = vpow.pop %v2407
        %v2409 = vmul.f32 %v2400, 1.442695
        %v2410 = vpow.pop %v2409
        %v2411 = vmul.f32 %v2401, 1.442695
        %v2412 = vpow.pop %v2411
        %v2413 = vmul.f32 %v2402, 1.442695
        %v2414 = vpow.pop %v2413
        %v2415 = vmul.f32 %v2403, 1.442695
        %v2416 = vpow.pop %v2415
        %v2417 = vmul.f32 %v2404, 1.442695
        %v2418 = vpow.pop %v2417
        %v2419 = vmul.f32 %v2405, 1.442695
        %v2420 = vpow.pop %v2419
        %v2421 = vmul.f32 %v2406, 1.442695
        %v2422 = vpow.pop %v2421
        %2423 = vadd.xlane.f32.xlu0 %v2408
        %v2424 = vpop.xlane.xlu0 %2423
        %2425 = vadd.xlane.f32.xlu0 %v2410
        %v2426 = vpop.xlane.xlu0 %2425
        %2427 = vadd.xlane.f32.xlu0 %v2412
        %v2428 = vpop.xlane.xlu0 %2427
        %2429 = vadd.xlane.f32.xlu0 %v2414
        %v2430 = vpop.xlane.xlu0 %2429
        %2431 = vadd.xlane.f32.xlu0 %v2416
        %v2432 = vpop.xlane.xlu0 %2431
        %2433 = vadd.xlane.f32.xlu0 %v2418
        %v2434 = vpop.xlane.xlu0 %2433
        %2435 = vadd.xlane.f32.xlu0 %v2420
        %v2436 = vpop.xlane.xlu0 %2435
        %2437 = vadd.xlane.f32.xlu0 %v2422
        %v2438 = vpop.xlane.xlu0 %2437
        %v2439 = vrcp.pop %v2424
        %v2440 = vrcp.pop %v2426
        %v2441 = vrcp.pop %v2428
        %v2442 = vrcp.pop %v2430
        %v2443 = vrcp.pop %v2432
        %v2444 = vrcp.pop %v2434
        %v2445 = vrcp.pop %v2436
        %v2446 = vrcp.pop %v2438
        %v2447 = vmul.f32 %v2408, %v2439
        %v2448 = vmul.f32 %v2410, %v2440
        %v2449 = vmul.f32 %v2412, %v2441
        %v2450 = vmul.f32 %v2414, %v2442
        %v2451 = vmul.f32 %v2416, %v2443
        %v2452 = vmul.f32 %v2418, %v2444
        %v2453 = vmul.f32 %v2420, %v2445
        %v2454 = vmul.f32 %v2422, %v2446
        %v2455 = vpack.c.bf16 %v2448, %v2447
        %v2456 = vpack.c.bf16 %v2450, %v2449
        %v2457 = vpack.c.bf16 %v2452, %v2451
        %v2458 = vpack.c.bf16 %v2454, %v2453
        %2459 = vrot.lane.b32.xlu0 %v1904, 64
        %v2460 = vpop.permute.xlu0 %2459
        %2461 = vrot.lane.b32.xlu0 %v1905, 64
        %v2462 = vpop.permute.xlu0 %2461
        %2463 = vrot.lane.b32.xlu0 %v1906, 64
        %v2464 = vpop.permute.xlu0 %2463
        %2465 = vrot.lane.b32.xlu0 %v1907, 64
        %v2466 = vpop.permute.xlu0 %2465
        %2467 = vrot.lane.b32.xlu0 %v1908, 64
        %v2468 = vpop.permute.xlu0 %2467
        %2469 = vrot.lane.b32.xlu0 %v1909, 64
        %v2470 = vpop.permute.xlu0 %2469
        %2471 = vrot.lane.b32.xlu0 %v1910, 64
        %v2472 = vpop.permute.xlu0 %2471
        %2473 = vrot.lane.b32.xlu0 %v1911, 64
        %v2474 = vpop.permute.xlu0 %2473
        %2483 = vmatpush.bf16.msra.mxu0 %v2474
        %2484 = vmatpush.bf16.msra.mxu0 %v2472
        %2485 = vmatpush.bf16.msra.mxu0 %v2470
        %2486 = vmatpush.bf16.msra.mxu0 %v2468
        %2487 = vmatpush.bf16.msra.mxu0 %v2466
        %2488 = vmatpush.bf16.msra.mxu0 %v2464
        %2489 = vmatpush.bf16.msra.mxu0 %v2462
        %2490 = vmatpush.bf16.msra.mxu0 %v2460
        %2491 = vmatmul.bf16.gmra.mxu0 %v2455
        %v2492 = vpop.f32.mrf.mxu0
        %v2493 = vadd.f32 0.0, %v2492
        %v2494 = vpop.f32.mrf.mxu0
        %v2495 = vadd.f32 0.0, %v2494
        %2496 = vmatmul.bf16.gmra.mxu0 %v2456
        %v2497 = vpop.f32.mrf.mxu0
        %v2498 = vadd.f32 0.0, %v2497
        %v2499 = vpop.f32.mrf.mxu0
        %v2500 = vadd.f32 0.0, %v2499
        %2501 = vmatmul.bf16.gmra.mxu0 %v2457
        %v2502 = vpop.f32.mrf.mxu0
        %v2503 = vadd.f32 0.0, %v2502
        %v2504 = vpop.f32.mrf.mxu0
        %v2505 = vadd.f32 0.0, %v2504
        %2506 = vmatmul.bf16.gmra.mxu0 %v2458
        %v2507 = vpop.f32.mrf.mxu0
        %v2508 = vadd.f32 0.0, %v2507
        %v2509 = vpop.f32.mrf.mxu0
        %v2510 = vadd.f32 0.0, %v2509
        %2511 = vdwg.mxu0
        %v2512 = vpack.c.bf16 %v2495, %v2493
        %v2513 = vpack.c.bf16 %v2500, %v2498
        %v2514 = vpack.c.bf16 %v2505, %v2503
        %v2515 = vpack.c.bf16 %v2510, %v2508
        %s2516 = scalar_lea.vmem [#allocation19], 32
        %v2517 = vld [vmem:[%s2516] sm:$0xf]
        %v2518 = vld [vmem:[%s2516 + $0x4] sm:$0xf]
        %v2519 = vld [vmem:[%s2516 + $0x8] sm:$0xf]
        %v2520 = vld [vmem:[%s2516 + $0xc] sm:$0xf]
        %v2525 = vunpack.c.l.b16 %v2517
        %v2526 = vunpack.c.l.b16 %v2518
        %v2527 = vunpack.c.l.b16 %v2519
        %v2528 = vunpack.c.l.b16 %v2520
        %v2529 = vpack.c.b16 %v2526, %v2525
        %v2530 = vpack.c.b16 %v2528, %v2527
        %v2534 = vsel %vm1730, %v2512, 0
        %v2537 = vsel %vm1730, %v2513, 0
        %v2540 = vsel %vm1730, %v2514, 0
        %v2543 = vsel %vm1730, %v2515, 0
        %2545 = vmatpush.bf16.msra.mxu0 0
        %2546 = vmatpush.bf16.msra.mxu0 0
        %2547 = vmatpush.bf16.msra.mxu0 0
        %2548 = vmatpush.bf16.msra.mxu0 0
        %2549 = vmatpush.bf16.msra.mxu0 0
        %2550 = vmatpush.bf16.msra.mxu0 0
        %2551 = vmatpush.bf16.msra.mxu0 %v2530
        %2552 = vmatpush.bf16.msra.mxu0 %v2529
        %2553 = vmatmul.bf16.gmra.mxu0 %v2534
        %v2554 = vpop.f32.mrf.mxu0
        %v2555 = vadd.f32 0.0, %v2554
        %v2556 = vpop.f32.mrf.mxu0
        %v2557 = vadd.f32 0.0, %v2556
        %2558 = vmatmul.bf16.gmra.mxu0 %v2537
        %v2559 = vpop.f32.mrf.mxu0
        %v2560 = vadd.f32 0.0, %v2559
        %v2561 = vpop.f32.mrf.mxu0
        %v2562 = vadd.f32 0.0, %v2561
        %2563 = vmatmul.bf16.gmra.mxu0 %v2540
        %v2564 = vpop.f32.mrf.mxu0
        %v2565 = vadd.f32 0.0, %v2564
        %v2566 = vpop.f32.mrf.mxu0
        %v2567 = vadd.f32 0.0, %v2566
        %2568 = vmatmul.bf16.gmra.mxu0 %v2543
        %v2569 = vpop.f32.mrf.mxu0
        %v2570 = vadd.f32 0.0, %v2569
        %v2571 = vpop.f32.mrf.mxu0
        %v2572 = vadd.f32 0.0, %v2571
        %2573 = vdwg.mxu0
        %v2574 = vadd.f32 %v2275, %v2555
        %v2575 = vadd.f32 %v2277, %v2557
        %v2576 = vadd.f32 %v2280, %v2560
        %v2577 = vadd.f32 %v2282, %v2562
        %v2578 = vadd.f32 %v2285, %v2565
        %v2579 = vadd.f32 %v2287, %v2567
        %v2580 = vadd.f32 %v2290, %v2570
        %v2581 = vadd.f32 %v2292, %v2572
        %2582 = vrot.lane.b32.xlu0 %v1654, 32
        %v2583 = vpop.permute.xlu0 %2582
        %2584 = vrot.lane.b32.xlu0 %v1655, 32
        %v2585 = vpop.permute.xlu0 %2584
        %2586 = vrot.lane.b32.xlu0 %v1656, 32
        %v2587 = vpop.permute.xlu0 %2586
        %2588 = vrot.lane.b32.xlu0 %v1657, 32
        %v2589 = vpop.permute.xlu0 %2588
        %2590 = vrot.lane.b32.xlu0 %v1722, 32
        %v2591 = vpop.permute.xlu0 %2590
        %2592 = vrot.lane.b32.xlu0 %v1723, 32
        %v2593 = vpop.permute.xlu0 %2592
        %2594 = vrot.lane.b32.xlu0 %v1724, 32
        %v2595 = vpop.permute.xlu0 %2594
        %2596 = vrot.lane.b32.xlu0 %v1725, 32
        %v2597 = vpop.permute.xlu0 %2596
        %2598 = vrot.lane.b32.xlu0 %v1726, 32
        %v2599 = vpop.permute.xlu0 %2598
        %2600 = vrot.lane.b32.xlu0 %v1727, 32
        %v2601 = vpop.permute.xlu0 %2600
        %2602 = vrot.lane.b32.xlu0 %v1728, 32
        %v2603 = vpop.permute.xlu0 %2602
        %2604 = vrot.lane.b32.xlu0 %v1729, 32
        %v2605 = vpop.permute.xlu0 %2604
        %v2607 = vsel %vm1730, %v2583, 0
        %v2610 = vsel %vm1730, %v2585, 0
        %v2613 = vsel %vm1730, %v2587, 0
        %v2616 = vsel %vm1730, %v2589, 0
        %v2619 = vsel %vm1730, %v2591, 0
        %v2622 = vsel %vm1730, %v2593, 0
        %v2625 = vsel %vm1730, %v2595, 0
        %v2628 = vsel %vm1730, %v2597, 0
        %v2631 = vsel %vm1730, %v2599, 0
        %v2634 = vsel %vm1730, %v2601, 0
        %v2637 = vsel %vm1730, %v2603, 0
        %v2640 = vsel %vm1730, %v2605, 0
        %2642 = vmatpush.bf16.xpose.msra.mxu0 %v2640
        %2643 = vmatpush.bf16.xpose.msra.mxu0 %v2637
        %2644 = vmatpush.bf16.xpose.msra.mxu0 %v2634
        %2645 = vmatpush.bf16.xpose.msra.mxu0 %v2631
        %2646 = vmatpush.bf16.xpose.msra.mxu0 %v2628
        %2647 = vmatpush.bf16.xpose.msra.mxu0 %v2625
        %2648 = vmatpush.bf16.xpose.msra.mxu0 %v2622
        %2649 = vmatpush.bf16.xpose.msra.mxu0 %v2619
        %2650 = vmatmul.bf16.gmra.mxu0 %v2607
        %v2651 = vpop.f32.mrf.mxu0
        %v2652 = vadd.f32 0.0, %v2651
        %v2653 = vpop.f32.mrf.mxu0
        %v2654 = vadd.f32 0.0, %v2653
        %2655 = vmatmul.bf16.gmra.mxu0 %v2610
        %v2656 = vpop.f32.mrf.mxu0
        %v2657 = vadd.f32 0.0, %v2656
        %v2658 = vpop.f32.mrf.mxu0
        %v2659 = vadd.f32 0.0, %v2658
        %2660 = vmatmul.bf16.gmra.mxu0 %v2613
        %v2661 = vpop.f32.mrf.mxu0
        %v2662 = vadd.f32 0.0, %v2661
        %v2663 = vpop.f32.mrf.mxu0
        %v2664 = vadd.f32 0.0, %v2663
        %2665 = vmatmul.bf16.gmra.mxu0 %v2616
        %v2666 = vpop.f32.mrf.mxu0
        %v2667 = vadd.f32 0.0, %v2666
        %v2668 = vpop.f32.mrf.mxu0
        %v2669 = vadd.f32 0.0, %v2668
        %2670 = vdwg.mxu0
        %2671 = vmax.xlane.f32.xlu0 %v2652
        %v2672 = vpop.xlane.xlu0 %2671
        %2673 = vmax.xlane.f32.xlu0 %v2654
        %v2674 = vpop.xlane.xlu0 %2673
        %2675 = vmax.xlane.f32.xlu0 %v2657
        %v2676 = vpop.xlane.xlu0 %2675
        %2677 = vmax.xlane.f32.xlu0 %v2659
        %v2678 = vpop.xlane.xlu0 %2677
        %2679 = vmax.xlane.f32.xlu0 %v2662
        %v2680 = vpop.xlane.xlu0 %2679
        %2681 = vmax.xlane.f32.xlu0 %v2664
        %v2682 = vpop.xlane.xlu0 %2681
        %2683 = vmax.xlane.f32.xlu0 %v2667
        %v2684 = vpop.xlane.xlu0 %2683
        %2685 = vmax.xlane.f32.xlu0 %v2669
        %v2686 = vpop.xlane.xlu0 %2685
        %v2687 = vsub.f32 %v2652, %v2672
        %v2688 = vsub.f32 %v2654, %v2674
        %v2689 = vsub.f32 %v2657, %v2676
        %v2690 = vsub.f32 %v2659, %v2678
        %v2691 = vsub.f32 %v2662, %v2680
        %v2692 = vsub.f32 %v2664, %v2682
        %v2693 = vsub.f32 %v2667, %v2684
        %v2694 = vsub.f32 %v2669, %v2686
        %v2695 = vmul.f32 %v2687, 1.442695
        %v2696 = vpow.pop %v2695
        %v2697 = vmul.f32 %v2688, 1.442695
        %v2698 = vpow.pop %v2697
        %v2699 = vmul.f32 %v2689, 1.442695
        %v2700 = vpow.pop %v2699
        %v2701 = vmul.f32 %v2690, 1.442695
        %v2702 = vpow.pop %v2701
        %v2703 = vmul.f32 %v2691, 1.442695
        %v2704 = vpow.pop %v2703
        %v2705 = vmul.f32 %v2692, 1.442695
        %v2706 = vpow.pop %v2705
        %v2707 = vmul.f32 %v2693, 1.442695
        %v2708 = vpow.pop %v2707
        %v2709 = vmul.f32 %v2694, 1.442695
        %v2710 = vpow.pop %v2709
        %2711 = vadd.xlane.f32.xlu0 %v2696
        %v2712 = vpop.xlane.xlu0 %2711
        %2713 = vadd.xlane.f32.xlu0 %v2698
        %v2714 = vpop.xlane.xlu0 %2713
        %2715 = vadd.xlane.f32.xlu0 %v2700
        %v2716 = vpop.xlane.xlu0 %2715
        %2717 = vadd.xlane.f32.xlu0 %v2702
        %v2718 = vpop.xlane.xlu0 %2717
        %2719 = vadd.xlane.f32.xlu0 %v2704
        %v2720 = vpop.xlane.xlu0 %2719
        %2721 = vadd.xlane.f32.xlu0 %v2706
        %v2722 = vpop.xlane.xlu0 %2721
        %2723 = vadd.xlane.f32.xlu0 %v2708
        %v2724 = vpop.xlane.xlu0 %2723
        %2725 = vadd.xlane.f32.xlu0 %v2710
        %v2726 = vpop.xlane.xlu0 %2725
        %v2727 = vrcp.pop %v2712
        %v2728 = vrcp.pop %v2714
        %v2729 = vrcp.pop %v2716
        %v2730 = vrcp.pop %v2718
        %v2731 = vrcp.pop %v2720
        %v2732 = vrcp.pop %v2722
        %v2733 = vrcp.pop %v2724
        %v2734 = vrcp.pop %v2726
        %v2735 = vmul.f32 %v2696, %v2727
        %v2736 = vmul.f32 %v2698, %v2728
        %v2737 = vmul.f32 %v2700, %v2729
        %v2738 = vmul.f32 %v2702, %v2730
        %v2739 = vmul.f32 %v2704, %v2731
        %v2740 = vmul.f32 %v2706, %v2732
        %v2741 = vmul.f32 %v2708, %v2733
        %v2742 = vmul.f32 %v2710, %v2734
        %v2743 = vpack.c.bf16 %v2736, %v2735
        %v2744 = vpack.c.bf16 %v2738, %v2737
        %v2745 = vpack.c.bf16 %v2740, %v2739
        %v2746 = vpack.c.bf16 %v2742, %v2741
        %2747 = vrot.lane.b32.xlu0 %v1904, 32
        %v2748 = vpop.permute.xlu0 %2747
        %2749 = vrot.lane.b32.xlu0 %v1905, 32
        %v2750 = vpop.permute.xlu0 %2749
        %2751 = vrot.lane.b32.xlu0 %v1906, 32
        %v2752 = vpop.permute.xlu0 %2751
        %2753 = vrot.lane.b32.xlu0 %v1907, 32
        %v2754 = vpop.permute.xlu0 %2753
        %2755 = vrot.lane.b32.xlu0 %v1908, 32
        %v2756 = vpop.permute.xlu0 %2755
        %2757 = vrot.lane.b32.xlu0 %v1909, 32
        %v2758 = vpop.permute.xlu0 %2757
        %2759 = vrot.lane.b32.xlu0 %v1910, 32
        %v2760 = vpop.permute.xlu0 %2759
        %2761 = vrot.lane.b32.xlu0 %v1911, 32
        %v2762 = vpop.permute.xlu0 %2761
        %2771 = vmatpush.bf16.msra.mxu0 %v2762
        %2772 = vmatpush.bf16.msra.mxu0 %v2760
        %2773 = vmatpush.bf16.msra.mxu0 %v2758
        %2774 = vmatpush.bf16.msra.mxu0 %v2756
        %2775 = vmatpush.bf16.msra.mxu0 %v2754
        %2776 = vmatpush.bf16.msra.mxu0 %v2752
        %2777 = vmatpush.bf16.msra.mxu0 %v2750
        %2778 = vmatpush.bf16.msra.mxu0 %v2748
        %2779 = vmatmul.bf16.gmra.mxu0 %v2743
        %v2780 = vpop.f32.mrf.mxu0
        %v2781 = vadd.f32 0.0, %v2780
        %v2782 = vpop.f32.mrf.mxu0
        %v2783 = vadd.f32 0.0, %v2782
        %2784 = vmatmul.bf16.gmra.mxu0 %v2744
        %v2785 = vpop.f32.mrf.mxu0
        %v2786 = vadd.f32 0.0, %v2785
        %v2787 = vpop.f32.mrf.mxu0
        %v2788 = vadd.f32 0.0, %v2787
        %2789 = vmatmul.bf16.gmra.mxu0 %v2745
        %v2790 = vpop.f32.mrf.mxu0
        %v2791 = vadd.f32 0.0, %v2790
        %v2792 = vpop.f32.mrf.mxu0
        %v2793 = vadd.f32 0.0, %v2792
        %2794 = vmatmul.bf16.gmra.mxu0 %v2746
        %v2795 = vpop.f32.mrf.mxu0
        %v2796 = vadd.f32 0.0, %v2795
        %v2797 = vpop.f32.mrf.mxu0
        %v2798 = vadd.f32 0.0, %v2797
        %2799 = vdwg.mxu0
        %v2800 = vpack.c.bf16 %v2783, %v2781
        %v2801 = vpack.c.bf16 %v2788, %v2786
        %v2802 = vpack.c.bf16 %v2793, %v2791
        %v2803 = vpack.c.bf16 %v2798, %v2796
        %s2804 = scalar_lea.vmem [#allocation19], 48
        %v2805 = vld [vmem:[%s2804] sm:$0xf]
        %v2806 = vld [vmem:[%s2804 + $0x4] sm:$0xf]
        %v2807 = vld [vmem:[%s2804 + $0x8] sm:$0xf]
        %v2808 = vld [vmem:[%s2804 + $0xc] sm:$0xf]
        %v2813 = vunpack.c.l.b16 %v2805
        %v2814 = vunpack.c.l.b16 %v2806
        %v2815 = vunpack.c.l.b16 %v2807
        %v2816 = vunpack.c.l.b16 %v2808
        %v2817 = vpack.c.b16 %v2814, %v2813
        %v2818 = vpack.c.b16 %v2816, %v2815
        %v2822 = vsel %vm1730, %v2800, 0
        %v2825 = vsel %vm1730, %v2801, 0
        %v2828 = vsel %vm1730, %v2802, 0
        %v2831 = vsel %vm1730, %v2803, 0
        %2833 = vmatpush.bf16.msra.mxu0 0
        %2834 = vmatpush.bf16.msra.mxu0 0
        %2835 = vmatpush.bf16.msra.mxu0 0
        %2836 = vmatpush.bf16.msra.mxu0 0
        %2837 = vmatpush.bf16.msra.mxu0 0
        %2838 = vmatpush.bf16.msra.mxu0 0
        %2839 = vmatpush.bf16.msra.mxu0 %v2818
        %2840 = vmatpush.bf16.msra.mxu0 %v2817
        %2841 = vmatmul.bf16.gmra.mxu0 %v2822
        %v2842 = vpop.f32.mrf.mxu0
        %v2843 = vadd.f32 0.0, %v2842
        %v2844 = vpop.f32.mrf.mxu0
        %v2845 = vadd.f32 0.0, %v2844
        %2846 = vmatmul.bf16.gmra.mxu0 %v2825
        %v2847 = vpop.f32.mrf.mxu0
        %v2848 = vadd.f32 0.0, %v2847
        %v2849 = vpop.f32.mrf.mxu0
        %v2850 = vadd.f32 0.0, %v2849
        %2851 = vmatmul.bf16.gmra.mxu0 %v2828
        %v2852 = vpop.f32.mrf.mxu0
        %v2853 = vadd.f32 0.0, %v2852
        %v2854 = vpop.f32.mrf.mxu0
        %v2855 = vadd.f32 0.0, %v2854
        %2856 = vmatmul.bf16.gmra.mxu0 %v2831
        %v2857 = vpop.f32.mrf.mxu0
        %v2858 = vadd.f32 0.0, %v2857
        %v2859 = vpop.f32.mrf.mxu0
        %v2860 = vadd.f32 0.0, %v2859
        %2861 = vdwg.mxu0
        %v2862 = vadd.f32 %v2574, %v2843
        %v2863 = vadd.f32 %v2575, %v2845
        %v2864 = vadd.f32 %v2576, %v2848
        %v2865 = vadd.f32 %v2577, %v2850
        %v2866 = vadd.f32 %v2578, %v2853
        %v2867 = vadd.f32 %v2579, %v2855
        %v2868 = vadd.f32 %v2580, %v2858
        %v2869 = vadd.f32 %v2581, %v2860
        %v2870 = vld [vmem:[#allocation20] sm:$0x1]
        %v2872 = vperm.slane %v2870, 0
        %v2874 = vadd.f32 %v2862, %v2872
        %v2875 = vadd.f32 %v2863, %v2872
        %v2876 = vadd.f32 %v2864, %v2872
        %v2877 = vadd.f32 %v2865, %v2872
        %v2878 = vadd.f32 %v2866, %v2872
        %v2879 = vadd.f32 %v2867, %v2872
        %v2880 = vadd.f32 %v2868, %v2872
        %v2881 = vadd.f32 %v2869, %v2872
        %v2882 = vadd.f32 %v1505, %v2874
        %v2883 = vadd.f32 %v1506, %v2875
        %v2884 = vadd.f32 %v1507, %v2876
        %v2885 = vadd.f32 %v1508, %v2877
        %v2886 = vadd.f32 %v1509, %v2878
        %v2887 = vadd.f32 %v1510, %v2879
        %v2888 = vadd.f32 %v1511, %v2880
        %v2889 = vadd.f32 %v1512, %v2881
        %v2890 = vld [vmem:[#allocation22] sm:$0x1]
        %v2891 = vld [vmem:[%s12] sm:$0x1]
        %2892 = vadd.xlane.f32.xlu0 %v2882
        %v2893 = vpop.xlane.xlu0 %2892
        %2894 = vadd.xlane.f32.xlu0 %v2883
        %v2895 = vpop.xlane.xlu0 %2894
        %2896 = vadd.xlane.f32.xlu0 %v2884
        %v2897 = vpop.xlane.xlu0 %2896
        %2898 = vadd.xlane.f32.xlu0 %v2885
        %v2899 = vpop.xlane.xlu0 %2898
        %2900 = vadd.xlane.f32.xlu0 %v2886
        %v2901 = vpop.xlane.xlu0 %2900
        %2902 = vadd.xlane.f32.xlu0 %v2887
        %v2903 = vpop.xlane.xlu0 %2902
        %2904 = vadd.xlane.f32.xlu0 %v2888
        %v2905 = vpop.xlane.xlu0 %2904
        %2906 = vadd.xlane.f32.xlu0 %v2889
        %v2907 = vpop.xlane.xlu0 %2906
        %v2908 = vrcp.pop 128.0
        %v2909 = vmul.f32 128.0, %v2908
        %v2910 = vsub.f32 1.0, %v2909
        %v2911 = vmul.f32 %v2908, %v2910
        %v2912 = vadd.f32 %v2908, %v2911
        %vm2913 = vweird.f32 %v2908
        %v2914 = vsel %vm2913, %v2908, %v2912
        %v2915 = vmul.f32 %v2893, %v2914
        %v2916 = vmul.f32 %v2895, %v2914
        %v2917 = vmul.f32 %v2897, %v2914
        %v2918 = vmul.f32 %v2899, %v2914
        %v2919 = vmul.f32 %v2901, %v2914
        %v2920 = vmul.f32 %v2903, %v2914
        %v2921 = vmul.f32 %v2905, %v2914
        %v2922 = vmul.f32 %v2907, %v2914
        %v2923 = vsub.f32 %v2882, %v2915
        %v2924 = vsub.f32 %v2883, %v2916
        %v2925 = vsub.f32 %v2884, %v2917
        %v2926 = vsub.f32 %v2885, %v2918
        %v2927 = vsub.f32 %v2886, %v2919
        %v2928 = vsub.f32 %v2887, %v2920
        %v2929 = vsub.f32 %v2888, %v2921
        %v2930 = vsub.f32 %v2889, %v2922
        %v2931 = vmul.f32 %v2923, %v2923
        %v2932 = vmul.f32 %v2924, %v2924
        %v2933 = vmul.f32 %v2925, %v2925
        %v2934 = vmul.f32 %v2926, %v2926
        %v2935 = vmul.f32 %v2927, %v2927
        %v2936 = vmul.f32 %v2928, %v2928
        %v2937 = vmul.f32 %v2929, %v2929
        %v2938 = vmul.f32 %v2930, %v2930
        %2939 = vadd.xlane.f32.xlu0 %v2931
        %v2940 = vpop.xlane.xlu0 %2939
        %2941 = vadd.xlane.f32.xlu0 %v2932
        %v2942 = vpop.xlane.xlu0 %2941
        %2943 = vadd.xlane.f32.xlu0 %v2933
        %v2944 = vpop.xlane.xlu0 %2943
        %2945 = vadd.xlane.f32.xlu0 %v2934
        %v2946 = vpop.xlane.xlu0 %2945
        %2947 = vadd.xlane.f32.xlu0 %v2935
        %v2948 = vpop.xlane.xlu0 %2947
        %2949 = vadd.xlane.f32.xlu0 %v2936
        %v2950 = vpop.xlane.xlu0 %2949
        %2951 = vadd.xlane.f32.xlu0 %v2937
        %v2952 = vpop.xlane.xlu0 %2951
        %2953 = vadd.xlane.f32.xlu0 %v2938
        %v2954 = vpop.xlane.xlu0 %2953
        %v2955 = vmul.f32 %v2940, %v2914
        %v2956 = vmul.f32 %v2942, %v2914
        %v2957 = vmul.f32 %v2944, %v2914
        %v2958 = vmul.f32 %v2946, %v2914
        %v2959 = vmul.f32 %v2948, %v2914
        %v2960 = vmul.f32 %v2950, %v2914
        %v2961 = vmul.f32 %v2952, %v2914
        %v2962 = vmul.f32 %v2954, %v2914
        %v2963 = vadd.f32 %v2955, 1e-05
        %v2964 = vadd.f32 %v2956, 1e-05
        %v2965 = vadd.f32 %v2957, 1e-05
        %v2966 = vadd.f32 %v2958, 1e-05
        %v2967 = vadd.f32 %v2959, 1e-05
        %v2968 = vadd.f32 %v2960, 1e-05
        %v2969 = vadd.f32 %v2961, 1e-05
        %v2970 = vadd.f32 %v2962, 1e-05
        %v2971 = vrsqrt.pop %v2963
        %v2972 = vmul.f32 %v2971, %v2963
        %v2973 = vmul.f32 %v2972, %v2971
        %v2974 = vmul.f32 0.5, %v2973
        %v2975 = vsub.f32 1.5, %v2974
        %v2976 = vmul.f32 %v2971, %v2975
        %vm2977 = vweird.f32 %v2963
        %vm2978 = vweird.f32 %v2971
        %vm2979 = vmor %vm2977, %vm2978
        %v2980 = vsel %vm2979, %v2971, %v2976
        %v2981 = vrsqrt.pop %v2964
        %v2982 = vmul.f32 %v2981, %v2964
        %v2983 = vmul.f32 %v2982, %v2981
        %v2984 = vmul.f32 0.5, %v2983
        %v2985 = vsub.f32 1.5, %v2984
        %v2986 = vmul.f32 %v2981, %v2985
        %vm2987 = vweird.f32 %v2964
        %vm2988 = vweird.f32 %v2981
        %vm2989 = vmor %vm2987, %vm2988
        %v2990 = vsel %vm2989, %v2981, %v2986
        %v2991 = vrsqrt.pop %v2965
        %v2992 = vmul.f32 %v2991, %v2965
        %v2993 = vmul.f32 %v2992, %v2991
        %v2994 = vmul.f32 0.5, %v2993
        %v2995 = vsub.f32 1.5, %v2994
        %v2996 = vmul.f32 %v2991, %v2995
        %vm2997 = vweird.f32 %v2965
        %vm2998 = vweird.f32 %v2991
        %vm2999 = vmor %vm2997, %vm2998
        %v3000 = vsel %vm2999, %v2991, %v2996
        %v3001 = vrsqrt.pop %v2966
        %v3002 = vmul.f32 %v3001, %v2966
        %v3003 = vmul.f32 %v3002, %v3001
        %v3004 = vmul.f32 0.5, %v3003
        %v3005 = vsub.f32 1.5, %v3004
        %v3006 = vmul.f32 %v3001, %v3005
        %vm3007 = vweird.f32 %v2966
        %vm3008 = vweird.f32 %v3001
        %vm3009 = vmor %vm3007, %vm3008
        %v3010 = vsel %vm3009, %v3001, %v3006
        %v3011 = vrsqrt.pop %v2967
        %v3012 = vmul.f32 %v3011, %v2967
        %v3013 = vmul.f32 %v3012, %v3011
        %v3014 = vmul.f32 0.5, %v3013
        %v3015 = vsub.f32 1.5, %v3014
        %v3016 = vmul.f32 %v3011, %v3015
        %vm3017 = vweird.f32 %v2967
        %vm3018 = vweird.f32 %v3011
        %vm3019 = vmor %vm3017, %vm3018
        %v3020 = vsel %vm3019, %v3011, %v3016
        %v3021 = vrsqrt.pop %v2968
        %v3022 = vmul.f32 %v3021, %v2968
        %v3023 = vmul.f32 %v3022, %v3021
        %v3024 = vmul.f32 0.5, %v3023
        %v3025 = vsub.f32 1.5, %v3024
        %v3026 = vmul.f32 %v3021, %v3025
        %vm3027 = vweird.f32 %v2968
        %vm3028 = vweird.f32 %v3021
        %vm3029 = vmor %vm3027, %vm3028
        %v3030 = vsel %vm3029, %v3021, %v3026
        %v3031 = vrsqrt.pop %v2969
        %v3032 = vmul.f32 %v3031, %v2969
        %v3033 = vmul.f32 %v3032, %v3031
        %v3034 = vmul.f32 0.5, %v3033
        %v3035 = vsub.f32 1.5, %v3034
        %v3036 = vmul.f32 %v3031, %v3035
        %vm3037 = vweird.f32 %v2969
        %vm3038 = vweird.f32 %v3031
        %vm3039 = vmor %vm3037, %vm3038
        %v3040 = vsel %vm3039, %v3031, %v3036
        %v3041 = vrsqrt.pop %v2970
        %v3042 = vmul.f32 %v3041, %v2970
        %v3043 = vmul.f32 %v3042, %v3041
        %v3044 = vmul.f32 0.5, %v3043
        %v3045 = vsub.f32 1.5, %v3044
        %v3046 = vmul.f32 %v3041, %v3045
        %vm3047 = vweird.f32 %v2970
        %vm3048 = vweird.f32 %v3041
        %vm3049 = vmor %vm3047, %vm3048
        %v3050 = vsel %vm3049, %v3041, %v3046
        %v3051 = vmul.f32 %v2923, %v2980
        %v3052 = vmul.f32 %v2924, %v2990
        %v3053 = vmul.f32 %v2925, %v3000
        %v3054 = vmul.f32 %v2926, %v3010
        %v3055 = vmul.f32 %v2927, %v3020
        %v3056 = vmul.f32 %v2928, %v3030
        %v3057 = vmul.f32 %v2929, %v3040
        %v3058 = vmul.f32 %v2930, %v3050
        %v3060 = vperm.slane %v2890, 0
        %v3062 = vmul.f32 %v3051, %v3060
        %v3063 = vmul.f32 %v3052, %v3060
        %v3064 = vmul.f32 %v3053, %v3060
        %v3065 = vmul.f32 %v3054, %v3060
        %v3066 = vmul.f32 %v3055, %v3060
        %v3067 = vmul.f32 %v3056, %v3060
        %v3068 = vmul.f32 %v3057, %v3060
        %v3069 = vmul.f32 %v3058, %v3060
        %v3071 = vperm.slane %v2891, 0
        %v3073 = vadd.f32 %v3062, %v3071
        %v3074 = vadd.f32 %v3063, %v3071
        %v3075 = vadd.f32 %v3064, %v3071
        %v3076 = vadd.f32 %v3065, %v3071
        %v3077 = vadd.f32 %v3066, %v3071
        %v3078 = vadd.f32 %v3067, %v3071
        %v3079 = vadd.f32 %v3068, %v3071
        %v3080 = vadd.f32 %v3069, %v3071
        %v3081 = vpack.c.bf16 %v3074, %v3073
        %v3082 = vpack.c.bf16 %v3076, %v3075
        %v3083 = vpack.c.bf16 %v3078, %v3077
        %v3084 = vpack.c.bf16 %v3080, %v3079
        %v3085 = vld [vmem:[%s13] sm:$0xff]
        %v3086 = vld [vmem:[%s13 + $0x8] sm:$0xff]
        %v3087 = vld [vmem:[%s13 + $0x10] sm:$0xff]
        %v3088 = vld [vmem:[%s13 + $0x18] sm:$0xff]
        %v3089 = vld [vmem:[%s13 + $0x20] sm:$0xff]
        %v3090 = vld [vmem:[%s13 + $0x28] sm:$0xff]
        %v3091 = vld [vmem:[%s13 + $0x30] sm:$0xff]
        %v3092 = vld [vmem:[%s13 + $0x38] sm:$0xff]
        %v3093 = vld [vmem:[%s13 + $0x40] sm:$0xff]
        %v3094 = vld [vmem:[%s13 + $0x48] sm:$0xff]
        %v3095 = vld [vmem:[%s13 + $0x50] sm:$0xff]
        %v3096 = vld [vmem:[%s13 + $0x58] sm:$0xff]
        %v3097 = vld [vmem:[%s13 + $0x60] sm:$0xff]
        %v3098 = vld [vmem:[%s13 + $0x68] sm:$0xff]
        %v3099 = vld [vmem:[%s13 + $0x70] sm:$0xff]
        %v3100 = vld [vmem:[%s13 + $0x78] sm:$0xff]
        %v3101 = vld [vmem:[%s13 + $0x80] sm:$0xff]
        %v3102 = vld [vmem:[%s13 + $0x88] sm:$0xff]
        %v3103 = vld [vmem:[%s13 + $0x90] sm:$0xff]
        %v3104 = vld [vmem:[%s13 + $0x98] sm:$0xff]
        %v3105 = vld [vmem:[%s13 + $0xa0] sm:$0xff]
        %v3106 = vld [vmem:[%s13 + $0xa8] sm:$0xff]
        %v3107 = vld [vmem:[%s13 + $0xb0] sm:$0xff]
        %v3108 = vld [vmem:[%s13 + $0xb8] sm:$0xff]
        %v3109 = vld [vmem:[%s13 + $0xc0] sm:$0xff]
        %v3110 = vld [vmem:[%s13 + $0xc8] sm:$0xff]
        %v3111 = vld [vmem:[%s13 + $0xd0] sm:$0xff]
        %v3112 = vld [vmem:[%s13 + $0xd8] sm:$0xff]
        %v3113 = vld [vmem:[%s13 + $0xe0] sm:$0xff]
        %v3114 = vld [vmem:[%s13 + $0xe8] sm:$0xff]
        %v3115 = vld [vmem:[%s13 + $0xf0] sm:$0xff]
        %v3116 = vld [vmem:[%s13 + $0xf8] sm:$0xff]
        %v3117 = vld [vmem:[%s14] sm:$0xf]
        %v3119 = vperm.slane %v3117, 0
        %v3120 = vperm.slane %v3117, 1
        %v3121 = vperm.slane %v3117, 2
        %v3122 = vperm.slane %v3117, 3
        %v3159 = vunpack.c.l.b16 %v3085
        %v3160 = vunpack.c.h.b16 %v3085
        %v3161 = vunpack.c.l.b16 %v3086
        %v3162 = vunpack.c.h.b16 %v3086
        %v3163 = vunpack.c.l.b16 %v3087
        %v3164 = vunpack.c.h.b16 %v3087
        %v3165 = vunpack.c.l.b16 %v3088
        %v3166 = vunpack.c.h.b16 %v3088
        %v3167 = vunpack.c.l.b16 %v3089
        %v3168 = vunpack.c.h.b16 %v3089
        %v3169 = vunpack.c.l.b16 %v3090
        %v3170 = vunpack.c.h.b16 %v3090
        %v3171 = vunpack.c.l.b16 %v3091
        %v3172 = vunpack.c.h.b16 %v3091
        %v3173 = vunpack.c.l.b16 %v3092
        %v3174 = vunpack.c.h.b16 %v3092
        %v3175 = vunpack.c.l.b16 %v3093
        %v3176 = vunpack.c.h.b16 %v3093
        %v3177 = vunpack.c.l.b16 %v3094
        %v3178 = vunpack.c.h.b16 %v3094
        %v3179 = vunpack.c.l.b16 %v3095
        %v3180 = vunpack.c.h.b16 %v3095
        %v3181 = vunpack.c.l.b16 %v3096
        %v3182 = vunpack.c.h.b16 %v3096
        %v3183 = vunpack.c.l.b16 %v3097
        %v3184 = vunpack.c.h.b16 %v3097
        %v3185 = vunpack.c.l.b16 %v3098
        %v3186 = vunpack.c.h.b16 %v3098
        %v3187 = vunpack.c.l.b16 %v3099
        %v3188 = vunpack.c.h.b16 %v3099
        %v3189 = vunpack.c.l.b16 %v3100
        %v3190 = vunpack.c.h.b16 %v3100
        %v3191 = vunpack.c.l.b16 %v3101
        %v3192 = vunpack.c.h.b16 %v3101
        %v3193 = vunpack.c.l.b16 %v3102
        %v3194 = vunpack.c.h.b16 %v3102
        %v3195 = vunpack.c.l.b16 %v3103
        %v3196 = vunpack.c.h.b16 %v3103
        %v3197 = vunpack.c.l.b16 %v3104
        %v3198 = vunpack.c.h.b16 %v3104
        %v3199 = vunpack.c.l.b16 %v3105
        %v3200 = vunpack.c.h.b16 %v3105
        %v3201 = vunpack.c.l.b16 %v3106
        %v3202 = vunpack.c.h.b16 %v3106
        %v3203 = vunpack.c.l.b16 %v3107
        %v3204 = vunpack.c.h.b16 %v3107
        %v3205 = vunpack.c.l.b16 %v3108
        %v3206 = vunpack.c.h.b16 %v3108
        %v3207 = vunpack.c.l.b16 %v3109
        %v3208 = vunpack.c.h.b16 %v3109
        %v3209 = vunpack.c.l.b16 %v3110
        %v3210 = vunpack.c.h.b16 %v3110
        %v3211 = vunpack.c.l.b16 %v3111
        %v3212 = vunpack.c.h.b16 %v3111
        %v3213 = vunpack.c.l.b16 %v3112
        %v3214 = vunpack.c.h.b16 %v3112
        %v3215 = vunpack.c.l.b16 %v3113
        %v3216 = vunpack.c.h.b16 %v3113
        %v3217 = vunpack.c.l.b16 %v3114
        %v3218 = vunpack.c.h.b16 %v3114
        %v3219 = vunpack.c.l.b16 %v3115
        %v3220 = vunpack.c.h.b16 %v3115
        %v3221 = vunpack.c.l.b16 %v3116
        %v3222 = vunpack.c.h.b16 %v3116
        %v3223 = vpack.c.b16 %v3163, %v3159
        %v3224 = vpack.c.b16 %v3164, %v3160
        %v3225 = vpack.c.b16 %v3165, %v3161
        %v3226 = vpack.c.b16 %v3166, %v3162
        %v3227 = vpack.c.b16 %v3171, %v3167
        %v3228 = vpack.c.b16 %v3172, %v3168
        %v3229 = vpack.c.b16 %v3173, %v3169
        %v3230 = vpack.c.b16 %v3174, %v3170
        %v3231 = vpack.c.b16 %v3179, %v3175
        %v3232 = vpack.c.b16 %v3180, %v3176
        %v3233 = vpack.c.b16 %v3181, %v3177
        %v3234 = vpack.c.b16 %v3182, %v3178
        %v3235 = vpack.c.b16 %v3187, %v3183
        %v3236 = vpack.c.b16 %v3188, %v3184
        %v3237 = vpack.c.b16 %v3189, %v3185
        %v3238 = vpack.c.b16 %v3190, %v3186
        %v3239 = vpack.c.b16 %v3195, %v3191
        %v3240 = vpack.c.b16 %v3196, %v3192
        %v3241 = vpack.c.b16 %v3197, %v3193
        %v3242 = vpack.c.b16 %v3198, %v3194
        %v3243 = vpack.c.b16 %v3203, %v3199
        %v3244 = vpack.c.b16 %v3204, %v3200
        %v3245 = vpack.c.b16 %v3205, %v3201
        %v3246 = vpack.c.b16 %v3206, %v3202
        %v3247 = vpack.c.b16 %v3211, %v3207
        %v3248 = vpack.c.b16 %v3212, %v3208
        %v3249 = vpack.c.b16 %v3213, %v3209
        %v3250 = vpack.c.b16 %v3214, %v3210
        %v3251 = vpack.c.b16 %v3219, %v3215
        %v3252 = vpack.c.b16 %v3220, %v3216
        %v3253 = vpack.c.b16 %v3221, %v3217
        %v3254 = vpack.c.b16 %v3222, %v3218
        %3287 = vmatpush.bf16.msra.mxu0 %v3251
        %3288 = vmatpush.bf16.msra.mxu0 %v3247
        %3289 = vmatpush.bf16.msra.mxu0 %v3243
        %3290 = vmatpush.bf16.msra.mxu0 %v3239
        %3291 = vmatpush.bf16.msra.mxu0 %v3235
        %3292 = vmatpush.bf16.msra.mxu0 %v3231
        %3293 = vmatpush.bf16.msra.mxu0 %v3227
        %3294 = vmatpush.bf16.msra.mxu0 %v3223
        %3295 = vmatmul.bf16.gmra.mxu0 %v3081
        %v3296 = vpop.f32.mrf.mxu0
        %v3297 = vadd.f32 %v3119, %v3296
        %v3298 = vpop.f32.mrf.mxu0
        %v3299 = vadd.f32 %v3119, %v3298
        %3300 = vmatmul.bf16.gmra.mxu0 %v3082
        %v3301 = vpop.f32.mrf.mxu0
        %v3302 = vadd.f32 %v3119, %v3301
        %v3303 = vpop.f32.mrf.mxu0
        %v3304 = vadd.f32 %v3119, %v3303
        %3305 = vmatmul.bf16.gmra.mxu0 %v3083
        %v3306 = vpop.f32.mrf.mxu0
        %v3307 = vadd.f32 %v3119, %v3306
        %v3308 = vpop.f32.mrf.mxu0
        %v3309 = vadd.f32 %v3119, %v3308
        %3310 = vmatmul.bf16.gmra.mxu0 %v3084
        %v3311 = vpop.f32.mrf.mxu0
        %v3312 = vadd.f32 %v3119, %v3311
        %v3313 = vpop.f32.mrf.mxu0
        %v3314 = vadd.f32 %v3119, %v3313
        %3315 = vdwg.mxu0
        %3316 = vmatpush.bf16.msra.mxu0 %v3252
        %3317 = vmatpush.bf16.msra.mxu0 %v3248
        %3318 = vmatpush.bf16.msra.mxu0 %v3244
        %3319 = vmatpush.bf16.msra.mxu0 %v3240
        %3320 = vmatpush.bf16.msra.mxu0 %v3236
        %3321 = vmatpush.bf16.msra.mxu0 %v3232
        %3322 = vmatpush.bf16.msra.mxu0 %v3228
        %3323 = vmatpush.bf16.msra.mxu0 %v3224
        %3324 = vmatmul.bf16.gmra.mxu0 %v3081
        %v3325 = vpop.f32.mrf.mxu0
        %v3326 = vadd.f32 %v3120, %v3325
        %v3327 = vpop.f32.mrf.mxu0
        %v3328 = vadd.f32 %v3120, %v3327
        %3329 = vmatmul.bf16.gmra.mxu0 %v3082
        %v3330 = vpop.f32.mrf.mxu0
        %v3331 = vadd.f32 %v3120, %v3330
        %v3332 = vpop.f32.mrf.mxu0
        %v3333 = vadd.f32 %v3120, %v3332
        %3334 = vmatmul.bf16.gmra.mxu0 %v3083
        %v3335 = vpop.f32.mrf.mxu0
        %v3336 = vadd.f32 %v3120, %v3335
        %v3337 = vpop.f32.mrf.mxu0
        %v3338 = vadd.f32 %v3120, %v3337
        %3339 = vmatmul.bf16.gmra.mxu0 %v3084
        %v3340 = vpop.f32.mrf.mxu0
        %v3341 = vadd.f32 %v3120, %v3340
        %v3342 = vpop.f32.mrf.mxu0
        %v3343 = vadd.f32 %v3120, %v3342
        %3344 = vdwg.mxu0
        %3345 = vmatpush.bf16.msra.mxu0 %v3253
        %3346 = vmatpush.bf16.msra.mxu0 %v3249
        %3347 = vmatpush.bf16.msra.mxu0 %v3245
        %3348 = vmatpush.bf16.msra.mxu0 %v3241
        %3349 = vmatpush.bf16.msra.mxu0 %v3237
        %3350 = vmatpush.bf16.msra.mxu0 %v3233
        %3351 = vmatpush.bf16.msra.mxu0 %v3229
        %3352 = vmatpush.bf16.msra.mxu0 %v3225
        %3353 = vmatmul.bf16.gmra.mxu0 %v3081
        %v3354 = vpop.f32.mrf.mxu0
        %v3355 = vadd.f32 %v3121, %v3354
        %v3356 = vpop.f32.mrf.mxu0
        %v3357 = vadd.f32 %v3121, %v3356
        %3358 = vmatmul.bf16.gmra.mxu0 %v3082
        %v3359 = vpop.f32.mrf.mxu0
        %v3360 = vadd.f32 %v3121, %v3359
        %v3361 = vpop.f32.mrf.mxu0
        %v3362 = vadd.f32 %v3121, %v3361
        %3363 = vmatmul.bf16.gmra.mxu0 %v3083
        %v3364 = vpop.f32.mrf.mxu0
        %v3365 = vadd.f32 %v3121, %v3364
        %v3366 = vpop.f32.mrf.mxu0
        %v3367 = vadd.f32 %v3121, %v3366
        %3368 = vmatmul.bf16.gmra.mxu0 %v3084
        %v3369 = vpop.f32.mrf.mxu0
        %v3370 = vadd.f32 %v3121, %v3369
        %v3371 = vpop.f32.mrf.mxu0
        %v3372 = vadd.f32 %v3121, %v3371
        %3373 = vdwg.mxu0
        %3374 = vmatpush.bf16.msra.mxu0 %v3254
        %3375 = vmatpush.bf16.msra.mxu0 %v3250
        %3376 = vmatpush.bf16.msra.mxu0 %v3246
        %3377 = vmatpush.bf16.msra.mxu0 %v3242
        %3378 = vmatpush.bf16.msra.mxu0 %v3238
        %3379 = vmatpush.bf16.msra.mxu0 %v3234
        %3380 = vmatpush.bf16.msra.mxu0 %v3230
        %3381 = vmatpush.bf16.msra.mxu0 %v3226
        %3382 = vmatmul.bf16.gmra.mxu0 %v3081
        %v3383 = vpop.f32.mrf.mxu0
        %v3384 = vadd.f32 %v3122, %v3383
        %v3385 = vpop.f32.mrf.mxu0
        %v3386 = vadd.f32 %v3122, %v3385
        %3387 = vmatmul.bf16.gmra.mxu0 %v3082
        %v3388 = vpop.f32.mrf.mxu0
        %v3389 = vadd.f32 %v3122, %v3388
        %v3390 = vpop.f32.mrf.mxu0
        %v3391 = vadd.f32 %v3122, %v3390
        %3392 = vmatmul.bf16.gmra.mxu0 %v3083
        %v3393 = vpop.f32.mrf.mxu0
        %v3394 = vadd.f32 %v3122, %v3393
        %v3395 = vpop.f32.mrf.mxu0
        %v3396 = vadd.f32 %v3122, %v3395
        %3397 = vmatmul.bf16.gmra.mxu0 %v3084
        %v3398 = vpop.f32.mrf.mxu0
        %v3399 = vadd.f32 %v3122, %v3398
        %v3400 = vpop.f32.mrf.mxu0
        %v3401 = vadd.f32 %v3122, %v3400
        %3402 = vdwg.mxu0
        %v3403 = vmul.f32 %v3297, 0.5
        %v3404 = vmul.f32 %v3326, 0.5
        %v3405 = vmul.f32 %v3355, 0.5
        %v3406 = vmul.f32 %v3384, 0.5
        %v3407 = vmul.f32 %v3299, 0.5
        %v3408 = vmul.f32 %v3328, 0.5
        %v3409 = vmul.f32 %v3357, 0.5
        %v3410 = vmul.f32 %v3386, 0.5
        %v3411 = vmul.f32 %v3302, 0.5
        %v3412 = vmul.f32 %v3331, 0.5
        %v3413 = vmul.f32 %v3360, 0.5
        %v3414 = vmul.f32 %v3389, 0.5
        %v3415 = vmul.f32 %v3304, 0.5
        %v3416 = vmul.f32 %v3333, 0.5
        %v3417 = vmul.f32 %v3362, 0.5
        %v3418 = vmul.f32 %v3391, 0.5
        %v3419 = vmul.f32 %v3307, 0.5
        %v3420 = vmul.f32 %v3336, 0.5
        %v3421 = vmul.f32 %v3365, 0.5
        %v3422 = vmul.f32 %v3394, 0.5
        %v3423 = vmul.f32 %v3309, 0.5
        %v3424 = vmul.f32 %v3338, 0.5
        %v3425 = vmul.f32 %v3367, 0.5
        %v3426 = vmul.f32 %v3396, 0.5
        %v3427 = vmul.f32 %v3312, 0.5
        %v3428 = vmul.f32 %v3341, 0.5
        %v3429 = vmul.f32 %v3370, 0.5
        %v3430 = vmul.f32 %v3399, 0.5
        %v3431 = vmul.f32 %v3314, 0.5
        %v3432 = vmul.f32 %v3343, 0.5
        %v3433 = vmul.f32 %v3372, 0.5
        %v3434 = vmul.f32 %v3401, 0.5
        %v3435 = vmul.f32 %v3297, 0.70710677
        %v3436 = vmul.f32 %v3326, 0.70710677
        %v3437 = vmul.f32 %v3355, 0.70710677
        %v3438 = vmul.f32 %v3384, 0.70710677
        %v3439 = vmul.f32 %v3299, 0.70710677
        %v3440 = vmul.f32 %v3328, 0.70710677
        %v3441 = vmul.f32 %v3357, 0.70710677
        %v3442 = vmul.f32 %v3386, 0.70710677
        %v3443 = vmul.f32 %v3302, 0.70710677
        %v3444 = vmul.f32 %v3331, 0.70710677
        %v3445 = vmul.f32 %v3360, 0.70710677
        %v3446 = vmul.f32 %v3389, 0.70710677
        %v3447 = vmul.f32 %v3304, 0.70710677
        %v3448 = vmul.f32 %v3333, 0.70710677
        %v3449 = vmul.f32 %v3362, 0.70710677
        %v3450 = vmul.f32 %v3391, 0.70710677
        %v3451 = vmul.f32 %v3307, 0.70710677
        %v3452 = vmul.f32 %v3336, 0.70710677
        %v3453 = vmul.f32 %v3365, 0.70710677
        %v3454 = vmul.f32 %v3394, 0.70710677
        %v3455 = vmul.f32 %v3309, 0.70710677
        %v3456 = vmul.f32 %v3338, 0.70710677
        %v3457 = vmul.f32 %v3367, 0.70710677
        %v3458 = vmul.f32 %v3396, 0.70710677
        %v3459 = vmul.f32 %v3312, 0.70710677
        %v3460 = vmul.f32 %v3341, 0.70710677
        %v3461 = vmul.f32 %v3370, 0.70710677
        %v3462 = vmul.f32 %v3399, 0.70710677
        %v3463 = vmul.f32 %v3314, 0.70710677
        %v3464 = vmul.f32 %v3343, 0.70710677
        %v3465 = vmul.f32 %v3372, 0.70710677
        %v3466 = vmul.f32 %v3401, 0.70710677
        %v3467 = vand.u32 2147483647, %v3435
        %v3468 = vand.u32 2147483647, %v3436
        %v3469 = vand.u32 2147483647, %v3437
        %v3470 = vand.u32 2147483647, %v3438
        %v3471 = vand.u32 2147483647, %v3439
        %v3472 = vand.u32 2147483647, %v3440
        %v3473 = vand.u32 2147483647, %v3441
        %v3474 = vand.u32 2147483647, %v3442
        %v3475 = vand.u32 2147483647, %v3443
        %v3476 = vand.u32 2147483647, %v3444
        %v3477 = vand.u32 2147483647, %v3445
        %v3478 = vand.u32 2147483647, %v3446
        %v3479 = vand.u32 2147483647, %v3447
        %v3480 = vand.u32 2147483647, %v3448
        %v3481 = vand.u32 2147483647, %v3449
        %v3482 = vand.u32 2147483647, %v3450
        %v3483 = vand.u32 2147483647, %v3451
        %v3484 = vand.u32 2147483647, %v3452
        %v3485 = vand.u32 2147483647, %v3453
        %v3486 = vand.u32 2147483647, %v3454
        %v3487 = vand.u32 2147483647, %v3455
        %v3488 = vand.u32 2147483647, %v3456
        %v3489 = vand.u32 2147483647, %v3457
        %v3490 = vand.u32 2147483647, %v3458
        %v3491 = vand.u32 2147483647, %v3459
        %v3492 = vand.u32 2147483647, %v3460
        %v3493 = vand.u32 2147483647, %v3461
        %v3494 = vand.u32 2147483647, %v3462
        %v3495 = vand.u32 2147483647, %v3463
        %v3496 = vand.u32 2147483647, %v3464
        %v3497 = vand.u32 2147483647, %v3465
        %v3498 = vand.u32 2147483647, %v3466
        %v3499 = vmul.f32 %v3467, 0.3275911
        %v3500 = vmul.f32 %v3468, 0.3275911
        %v3501 = vmul.f32 %v3469, 0.3275911
        %v3502 = vmul.f32 %v3470, 0.3275911
        %v3503 = vmul.f32 %v3471, 0.3275911
        %v3504 = vmul.f32 %v3472, 0.3275911
        %v3505 = vmul.f32 %v3473, 0.3275911
        %v3506 = vmul.f32 %v3474, 0.3275911
        %v3507 = vmul.f32 %v3475, 0.3275911
        %v3508 = vmul.f32 %v3476, 0.3275911
        %v3509 = vmul.f32 %v3477, 0.3275911
        %v3510 = vmul.f32 %v3478, 0.3275911
        %v3511 = vmul.f32 %v3479, 0.3275911
        %v3512 = vmul.f32 %v3480, 0.3275911
        %v3513 = vmul.f32 %v3481, 0.3275911
        %v3514 = vmul.f32 %v3482, 0.3275911
        %v3515 = vmul.f32 %v3483, 0.3275911
        %v3516 = vmul.f32 %v3484, 0.3275911
        %v3517 = vmul.f32 %v3485, 0.3275911
        %v3518 = vmul.f32 %v3486, 0.3275911
        %v3519 = vmul.f32 %v3487, 0.3275911
        %v3520 = vmul.f32 %v3488, 0.3275911
        %v3521 = vmul.f32 %v3489, 0.3275911
        %v3522 = vmul.f32 %v3490, 0.3275911
        %v3523 = vmul.f32 %v3491, 0.3275911
        %v3524 = vmul.f32 %v3492, 0.3275911
        %v3525 = vmul.f32 %v3493, 0.3275911
        %v3526 = vmul.f32 %v3494, 0.3275911
        %v3527 = vmul.f32 %v3495, 0.3275911
        %v3528 = vmul.f32 %v3496, 0.3275911
        %v3529 = vmul.f32 %v3497, 0.3275911
        %v3530 = vmul.f32 %v3498, 0.3275911
        %v3531 = vadd.f32 %v3499, 1.0
        %v3532 = vadd.f32 %v3500, 1.0
        %v3533 = vadd.f32 %v3501, 1.0
        %v3534 = vadd.f32 %v3502, 1.0
        %v3535 = vadd.f32 %v3503, 1.0
        %v3536 = vadd.f32 %v3504, 1.0
        %v3537 = vadd.f32 %v3505, 1.0
        %v3538 = vadd.f32 %v3506, 1.0
        %v3539 = vadd.f32 %v3507, 1.0
        %v3540 = vadd.f32 %v3508, 1.0
        %v3541 = vadd.f32 %v3509, 1.0
        %v3542 = vadd.f32 %v3510, 1.0
        %v3543 = vadd.f32 %v3511, 1.0
        %v3544 = vadd.f32 %v3512, 1.0
        %v3545 = vadd.f32 %v3513, 1.0
        %v3546 = vadd.f32 %v3514, 1.0
        %v3547 = vadd.f32 %v3515, 1.0
        %v3548 = vadd.f32 %v3516, 1.0
        %v3549 = vadd.f32 %v3517, 1.0
        %v3550 = vadd.f32 %v3518, 1.0
        %v3551 = vadd.f32 %v3519, 1.0
        %v3552 = vadd.f32 %v3520, 1.0
        %v3553 = vadd.f32 %v3521, 1.0
        %v3554 = vadd.f32 %v3522, 1.0
        %v3555 = vadd.f32 %v3523, 1.0
        %v3556 = vadd.f32 %v3524, 1.0
        %v3557 = vadd.f32 %v3525, 1.0
        %v3558 = vadd.f32 %v3526, 1.0
        %v3559 = vadd.f32 %v3527, 1.0
        %v3560 = vadd.f32 %v3528, 1.0
        %v3561 = vadd.f32 %v3529, 1.0
        %v3562 = vadd.f32 %v3530, 1.0
        %v3563 = vrcp.pop %v3531
        %v3564 = vmul.f32 %v3531, %v3563
        %v3565 = vsub.f32 1.0, %v3564
        %v3566 = vmul.f32 %v3563, %v3565
        %v3567 = vadd.f32 %v3563, %v3566
        %vm3568 = vweird.f32 %v3531
        %vm3569 = vweird.f32 %v3563
        %vm3570 = vmor %vm3568, %vm3569
        %v3571 = vsel %vm3570, %v3563, %v3567
        %v3572 = vand.u32 2147483647, %v3531
        %vm3573 = vcmp.eq.f32.partialorder %v3572, 8.507059e+37
        %v3574 = vand.u32 %v3531, 2147483648
        %v3575 = vor.u32 1.1754944e-38, %v3574
        %v3576 = vsel %vm3573, %v3575, %v3571
        %v3577 = vmul.f32 1.0, %v3576
        %v3578 = vrcp.pop %v3532
        %v3579 = vmul.f32 %v3532, %v3578
        %v3580 = vsub.f32 1.0, %v3579
        %v3581 = vmul.f32 %v3578, %v3580
        %v3582 = vadd.f32 %v3578, %v3581
        %vm3583 = vweird.f32 %v3532
        %vm3584 = vweird.f32 %v3578
        %vm3585 = vmor %vm3583, %vm3584
        %v3586 = vsel %vm3585, %v3578, %v3582
        %v3587 = vand.u32 2147483647, %v3532
        %vm3588 = vcmp.eq.f32.partialorder %v3587, 8.507059e+37
        %v3589 = vand.u32 %v3532, 2147483648
        %v3590 = vor.u32 1.1754944e-38, %v3589
        %v3591 = vsel %vm3588, %v3590, %v3586
        %v3592 = vmul.f32 1.0, %v3591
        %v3593 = vrcp.pop %v3533
        %v3594 = vmul.f32 %v3533, %v3593
        %v3595 = vsub.f32 1.0, %v3594
        %v3596 = vmul.f32 %v3593, %v3595
        %v3597 = vadd.f32 %v3593, %v3596
        %vm3598 = vweird.f32 %v3533
        %vm3599 = vweird.f32 %v3593
        %vm3600 = vmor %vm3598, %vm3599
        %v3601 = vsel %vm3600, %v3593, %v3597
        %v3602 = vand.u32 2147483647, %v3533
        %vm3603 = vcmp.eq.f32.partialorder %v3602, 8.507059e+37
        %v3604 = vand.u32 %v3533, 2147483648
        %v3605 = vor.u32 1.1754944e-38, %v3604
        %v3606 = vsel %vm3603, %v3605, %v3601
        %v3607 = vmul.f32 1.0, %v3606
        %v3608 = vrcp.pop %v3534
        %v3609 = vmul.f32 %v3534, %v3608
        %v3610 = vsub.f32 1.0, %v3609
        %v3611 = vmul.f32 %v3608, %v3610
        %v3612 = vadd.f32 %v3608, %v3611
        %vm3613 = vweird.f32 %v3534
        %vm3614 = vweird.f32 %v3608
        %vm3615 = vmor %vm3613, %vm3614
        %v3616 = vsel %vm3615, %v3608, %v3612
        %v3617 = vand.u32 2147483647, %v3534
        %vm3618 = vcmp.eq.f32.partialorder %v3617, 8.507059e+37
        %v3619 = vand.u32 %v3534, 2147483648
        %v3620 = vor.u32 1.1754944e-38, %v3619
        %v3621 = vsel %vm3618, %v3620, %v3616
        %v3622 = vmul.f32 1.0, %v3621
        %v3623 = vrcp.pop %v3535
        %v3624 = vmul.f32 %v3535, %v3623
        %v3625 = vsub.f32 1.0, %v3624
        %v3626 = vmul.f32 %v3623, %v3625
        %v3627 = vadd.f32 %v3623, %v3626
        %vm3628 = vweird.f32 %v3535
        %vm3629 = vweird.f32 %v3623
        %vm3630 = vmor %vm3628, %vm3629
        %v3631 = vsel %vm3630, %v3623, %v3627
        %v3632 = vand.u32 2147483647, %v3535
        %vm3633 = vcmp.eq.f32.partialorder %v3632, 8.507059e+37
        %v3634 = vand.u32 %v3535, 2147483648
        %v3635 = vor.u32 1.1754944e-38, %v3634
        %v3636 = vsel %vm3633, %v3635, %v3631
        %v3637 = vmul.f32 1.0, %v3636
        %v3638 = vrcp.pop %v3536
        %v3639 = vmul.f32 %v3536, %v3638
        %v3640 = vsub.f32 1.0, %v3639
        %v3641 = vmul.f32 %v3638, %v3640
        %v3642 = vadd.f32 %v3638, %v3641
        %vm3643 = vweird.f32 %v3536
        %vm3644 = vweird.f32 %v3638
        %vm3645 = vmor %vm3643, %vm3644
        %v3646 = vsel %vm3645, %v3638, %v3642
        %v3647 = vand.u32 2147483647, %v3536
        %vm3648 = vcmp.eq.f32.partialorder %v3647, 8.507059e+37
        %v3649 = vand.u32 %v3536, 2147483648
        %v3650 = vor.u32 1.1754944e-38, %v3649
        %v3651 = vsel %vm3648, %v3650, %v3646
        %v3652 = vmul.f32 1.0, %v3651
        %v3653 = vrcp.pop %v3537
        %v3654 = vmul.f32 %v3537, %v3653
        %v3655 = vsub.f32 1.0, %v3654
        %v3656 = vmul.f32 %v3653, %v3655
        %v3657 = vadd.f32 %v3653, %v3656
        %vm3658 = vweird.f32 %v3537
        %vm3659 = vweird.f32 %v3653
        %vm3660 = vmor %vm3658, %vm3659
        %v3661 = vsel %vm3660, %v3653, %v3657
        %v3662 = vand.u32 2147483647, %v3537
        %vm3663 = vcmp.eq.f32.partialorder %v3662, 8.507059e+37
        %v3664 = vand.u32 %v3537, 2147483648
        %v3665 = vor.u32 1.1754944e-38, %v3664
        %v3666 = vsel %vm3663, %v3665, %v3661
        %v3667 = vmul.f32 1.0, %v3666
        %v3668 = vrcp.pop %v3538
        %v3669 = vmul.f32 %v3538, %v3668
        %v3670 = vsub.f32 1.0, %v3669
        %v3671 = vmul.f32 %v3668, %v3670
        %v3672 = vadd.f32 %v3668, %v3671
        %vm3673 = vweird.f32 %v3538
        %vm3674 = vweird.f32 %v3668
        %vm3675 = vmor %vm3673, %vm3674
        %v3676 = vsel %vm3675, %v3668, %v3672
        %v3677 = vand.u32 2147483647, %v3538
        %vm3678 = vcmp.eq.f32.partialorder %v3677, 8.507059e+37
        %v3679 = vand.u32 %v3538, 2147483648
        %v3680 = vor.u32 1.1754944e-38, %v3679
        %v3681 = vsel %vm3678, %v3680, %v3676
        %v3682 = vmul.f32 1.0, %v3681
        %v3683 = vrcp.pop %v3539
        %v3684 = vmul.f32 %v3539, %v3683
        %v3685 = vsub.f32 1.0, %v3684
        %v3686 = vmul.f32 %v3683, %v3685
        %v3687 = vadd.f32 %v3683, %v3686
        %vm3688 = vweird.f32 %v3539
        %vm3689 = vweird.f32 %v3683
        %vm3690 = vmor %vm3688, %vm3689
        %v3691 = vsel %vm3690, %v3683, %v3687
        %v3692 = vand.u32 2147483647, %v3539
        %vm3693 = vcmp.eq.f32.partialorder %v3692, 8.507059e+37
        %v3694 = vand.u32 %v3539, 2147483648
        %v3695 = vor.u32 1.1754944e-38, %v3694
        %v3696 = vsel %vm3693, %v3695, %v3691
        %v3697 = vmul.f32 1.0, %v3696
        %v3698 = vrcp.pop %v3540
        %v3699 = vmul.f32 %v3540, %v3698
        %v3700 = vsub.f32 1.0, %v3699
        %v3701 = vmul.f32 %v3698, %v3700
        %v3702 = vadd.f32 %v3698, %v3701
        %vm3703 = vweird.f32 %v3540
        %vm3704 = vweird.f32 %v3698
        %vm3705 = vmor %vm3703, %vm3704
        %v3706 = vsel %vm3705, %v3698, %v3702
        %v3707 = vand.u32 2147483647, %v3540
        %vm3708 = vcmp.eq.f32.partialorder %v3707, 8.507059e+37
        %v3709 = vand.u32 %v3540, 2147483648
        %v3710 = vor.u32 1.1754944e-38, %v3709
        %v3711 = vsel %vm3708, %v3710, %v3706
        %v3712 = vmul.f32 1.0, %v3711
        %v3713 = vrcp.pop %v3541
        %v3714 = vmul.f32 %v3541, %v3713
        %v3715 = vsub.f32 1.0, %v3714
        %v3716 = vmul.f32 %v3713, %v3715
        %v3717 = vadd.f32 %v3713, %v3716
        %vm3718 = vweird.f32 %v3541
        %vm3719 = vweird.f32 %v3713
        %vm3720 = vmor %vm3718, %vm3719
        %v3721 = vsel %vm3720, %v3713, %v3717
        %v3722 = vand.u32 2147483647, %v3541
        %vm3723 = vcmp.eq.f32.partialorder %v3722, 8.507059e+37
        %v3724 = vand.u32 %v3541, 2147483648
        %v3725 = vor.u32 1.1754944e-38, %v3724
        %v3726 = vsel %vm3723, %v3725, %v3721
        %v3727 = vmul.f32 1.0, %v3726
        %v3728 = vrcp.pop %v3542
        %v3729 = vmul.f32 %v3542, %v3728
        %v3730 = vsub.f32 1.0, %v3729
        %v3731 = vmul.f32 %v3728, %v3730
        %v3732 = vadd.f32 %v3728, %v3731
        %vm3733 = vweird.f32 %v3542
        %vm3734 = vweird.f32 %v3728
        %vm3735 = vmor %vm3733, %vm3734
        %v3736 = vsel %vm3735, %v3728, %v3732
        %v3737 = vand.u32 2147483647, %v3542
        %vm3738 = vcmp.eq.f32.partialorder %v3737, 8.507059e+37
        %v3739 = vand.u32 %v3542, 2147483648
        %v3740 = vor.u32 1.1754944e-38, %v3739
        %v3741 = vsel %vm3738, %v3740, %v3736
        %v3742 = vmul.f32 1.0, %v3741
        %v3743 = vrcp.pop %v3543
        %v3744 = vmul.f32 %v3543, %v3743
        %v3745 = vsub.f32 1.0, %v3744
        %v3746 = vmul.f32 %v3743, %v3745
        %v3747 = vadd.f32 %v3743, %v3746
        %vm3748 = vweird.f32 %v3543
        %vm3749 = vweird.f32 %v3743
        %vm3750 = vmor %vm3748, %vm3749
        %v3751 = vsel %vm3750, %v3743, %v3747
        %v3752 = vand.u32 2147483647, %v3543
        %vm3753 = vcmp.eq.f32.partialorder %v3752, 8.507059e+37
        %v3754 = vand.u32 %v3543, 2147483648
        %v3755 = vor.u32 1.1754944e-38, %v3754
        %v3756 = vsel %vm3753, %v3755, %v3751
        %v3757 = vmul.f32 1.0, %v3756
        %v3758 = vrcp.pop %v3544
        %v3759 = vmul.f32 %v3544, %v3758
        %v3760 = vsub.f32 1.0, %v3759
        %v3761 = vmul.f32 %v3758, %v3760
        %v3762 = vadd.f32 %v3758, %v3761
        %vm3763 = vweird.f32 %v3544
        %vm3764 = vweird.f32 %v3758
        %vm3765 = vmor %vm3763, %vm3764
        %v3766 = vsel %vm3765, %v3758, %v3762
        %v3767 = vand.u32 2147483647, %v3544
        %vm3768 = vcmp.eq.f32.partialorder %v3767, 8.507059e+37
        %v3769 = vand.u32 %v3544, 2147483648
        %v3770 = vor.u32 1.1754944e-38, %v3769
        %v3771 = vsel %vm3768, %v3770, %v3766
        %v3772 = vmul.f32 1.0, %v3771
        %v3773 = vrcp.pop %v3545
        %v3774 = vmul.f32 %v3545, %v3773
        %v3775 = vsub.f32 1.0, %v3774
        %v3776 = vmul.f32 %v3773, %v3775
        %v3777 = vadd.f32 %v3773, %v3776
        %vm3778 = vweird.f32 %v3545
        %vm3779 = vweird.f32 %v3773
        %vm3780 = vmor %vm3778, %vm3779
        %v3781 = vsel %vm3780, %v3773, %v3777
        %v3782 = vand.u32 2147483647, %v3545
        %vm3783 = vcmp.eq.f32.partialorder %v3782, 8.507059e+37
        %v3784 = vand.u32 %v3545, 2147483648
        %v3785 = vor.u32 1.1754944e-38, %v3784
        %v3786 = vsel %vm3783, %v3785, %v3781
        %v3787 = vmul.f32 1.0, %v3786
        %v3788 = vrcp.pop %v3546
        %v3789 = vmul.f32 %v3546, %v3788
        %v3790 = vsub.f32 1.0, %v3789
        %v3791 = vmul.f32 %v3788, %v3790
        %v3792 = vadd.f32 %v3788, %v3791
        %vm3793 = vweird.f32 %v3546
        %vm3794 = vweird.f32 %v3788
        %vm3795 = vmor %vm3793, %vm3794
        %v3796 = vsel %vm3795, %v3788, %v3792
        %v3797 = vand.u32 2147483647, %v3546
        %vm3798 = vcmp.eq.f32.partialorder %v3797, 8.507059e+37
        %v3799 = vand.u32 %v3546, 2147483648
        %v3800 = vor.u32 1.1754944e-38, %v3799
        %v3801 = vsel %vm3798, %v3800, %v3796
        %v3802 = vmul.f32 1.0, %v3801
        %v3803 = vrcp.pop %v3547
        %v3804 = vmul.f32 %v3547, %v3803
        %v3805 = vsub.f32 1.0, %v3804
        %v3806 = vmul.f32 %v3803, %v3805
        %v3807 = vadd.f32 %v3803, %v3806
        %vm3808 = vweird.f32 %v3547
        %vm3809 = vweird.f32 %v3803
        %vm3810 = vmor %vm3808, %vm3809
        %v3811 = vsel %vm3810, %v3803, %v3807
        %v3812 = vand.u32 2147483647, %v3547
        %vm3813 = vcmp.eq.f32.partialorder %v3812, 8.507059e+37
        %v3814 = vand.u32 %v3547, 2147483648
        %v3815 = vor.u32 1.1754944e-38, %v3814
        %v3816 = vsel %vm3813, %v3815, %v3811
        %v3817 = vmul.f32 1.0, %v3816
        %v3818 = vrcp.pop %v3548
        %v3819 = vmul.f32 %v3548, %v3818
        %v3820 = vsub.f32 1.0, %v3819
        %v3821 = vmul.f32 %v3818, %v3820
        %v3822 = vadd.f32 %v3818, %v3821
        %vm3823 = vweird.f32 %v3548
        %vm3824 = vweird.f32 %v3818
        %vm3825 = vmor %vm3823, %vm3824
        %v3826 = vsel %vm3825, %v3818, %v3822
        %v3827 = vand.u32 2147483647, %v3548
        %vm3828 = vcmp.eq.f32.partialorder %v3827, 8.507059e+37
        %v3829 = vand.u32 %v3548, 2147483648
        %v3830 = vor.u32 1.1754944e-38, %v3829
        %v3831 = vsel %vm3828, %v3830, %v3826
        %v3832 = vmul.f32 1.0, %v3831
        %v3833 = vrcp.pop %v3549
        %v3834 = vmul.f32 %v3549, %v3833
        %v3835 = vsub.f32 1.0, %v3834
        %v3836 = vmul.f32 %v3833, %v3835
        %v3837 = vadd.f32 %v3833, %v3836
        %vm3838 = vweird.f32 %v3549
        %vm3839 = vweird.f32 %v3833
        %vm3840 = vmor %vm3838, %vm3839
        %v3841 = vsel %vm3840, %v3833, %v3837
        %v3842 = vand.u32 2147483647, %v3549
        %vm3843 = vcmp.eq.f32.partialorder %v3842, 8.507059e+37
        %v3844 = vand.u32 %v3549, 2147483648
        %v3845 = vor.u32 1.1754944e-38, %v3844
        %v3846 = vsel %vm3843, %v3845, %v3841
        %v3847 = vmul.f32 1.0, %v3846
        %v3848 = vrcp.pop %v3550
        %v3849 = vmul.f32 %v3550, %v3848
        %v3850 = vsub.f32 1.0, %v3849
        %v3851 = vmul.f32 %v3848, %v3850
        %v3852 = vadd.f32 %v3848, %v3851
        %vm3853 = vweird.f32 %v3550
        %vm3854 = vweird.f32 %v3848
        %vm3855 = vmor %vm3853, %vm3854
        %v3856 = vsel %vm3855, %v3848, %v3852
        %v3857 = vand.u32 2147483647, %v3550
        %vm3858 = vcmp.eq.f32.partialorder %v3857, 8.507059e+37
        %v3859 = vand.u32 %v3550, 2147483648
        %v3860 = vor.u32 1.1754944e-38, %v3859
        %v3861 = vsel %vm3858, %v3860, %v3856
        %v3862 = vmul.f32 1.0, %v3861
        %v3863 = vrcp.pop %v3551
        %v3864 = vmul.f32 %v3551, %v3863
        %v3865 = vsub.f32 1.0, %v3864
        %v3866 = vmul.f32 %v3863, %v3865
        %v3867 = vadd.f32 %v3863, %v3866
        %vm3868 = vweird.f32 %v3551
        %vm3869 = vweird.f32 %v3863
        %vm3870 = vmor %vm3868, %vm3869
        %v3871 = vsel %vm3870, %v3863, %v3867
        %v3872 = vand.u32 2147483647, %v3551
        %vm3873 = vcmp.eq.f32.partialorder %v3872, 8.507059e+37
        %v3874 = vand.u32 %v3551, 2147483648
        %v3875 = vor.u32 1.1754944e-38, %v3874
        %v3876 = vsel %vm3873, %v3875, %v3871
        %v3877 = vmul.f32 1.0, %v3876
        %v3878 = vrcp.pop %v3552
        %v3879 = vmul.f32 %v3552, %v3878
        %v3880 = vsub.f32 1.0, %v3879
        %v3881 = vmul.f32 %v3878, %v3880
        %v3882 = vadd.f32 %v3878, %v3881
        %vm3883 = vweird.f32 %v3552
        %vm3884 = vweird.f32 %v3878
        %vm3885 = vmor %vm3883, %vm3884
        %v3886 = vsel %vm3885, %v3878, %v3882
        %v3887 = vand.u32 2147483647, %v3552
        %vm3888 = vcmp.eq.f32.partialorder %v3887, 8.507059e+37
        %v3889 = vand.u32 %v3552, 2147483648
        %v3890 = vor.u32 1.1754944e-38, %v3889
        %v3891 = vsel %vm3888, %v3890, %v3886
        %v3892 = vmul.f32 1.0, %v3891
        %v3893 = vrcp.pop %v3553
        %v3894 = vmul.f32 %v3553, %v3893
        %v3895 = vsub.f32 1.0, %v3894
        %v3896 = vmul.f32 %v3893, %v3895
        %v3897 = vadd.f32 %v3893, %v3896
        %vm3898 = vweird.f32 %v3553
        %vm3899 = vweird.f32 %v3893
        %vm3900 = vmor %vm3898, %vm3899
        %v3901 = vsel %vm3900, %v3893, %v3897
        %v3902 = vand.u32 2147483647, %v3553
        %vm3903 = vcmp.eq.f32.partialorder %v3902, 8.507059e+37
        %v3904 = vand.u32 %v3553, 2147483648
        %v3905 = vor.u32 1.1754944e-38, %v3904
        %v3906 = vsel %vm3903, %v3905, %v3901
        %v3907 = vmul.f32 1.0, %v3906
        %v3908 = vrcp.pop %v3554
        %v3909 = vmul.f32 %v3554, %v3908
        %v3910 = vsub.f32 1.0, %v3909
        %v3911 = vmul.f32 %v3908, %v3910
        %v3912 = vadd.f32 %v3908, %v3911
        %vm3913 = vweird.f32 %v3554
        %vm3914 = vweird.f32 %v3908
        %vm3915 = vmor %vm3913, %vm3914
        %v3916 = vsel %vm3915, %v3908, %v3912
        %v3917 = vand.u32 2147483647, %v3554
        %vm3918 = vcmp.eq.f32.partialorder %v3917, 8.507059e+37
        %v3919 = vand.u32 %v3554, 2147483648
        %v3920 = vor.u32 1.1754944e-38, %v3919
        %v3921 = vsel %vm3918, %v3920, %v3916
        %v3922 = vmul.f32 1.0, %v3921
        %v3923 = vrcp.pop %v3555
        %v3924 = vmul.f32 %v3555, %v3923
        %v3925 = vsub.f32 1.0, %v3924
        %v3926 = vmul.f32 %v3923, %v3925
        %v3927 = vadd.f32 %v3923, %v3926
        %vm3928 = vweird.f32 %v3555
        %vm3929 = vweird.f32 %v3923
        %vm3930 = vmor %vm3928, %vm3929
        %v3931 = vsel %vm3930, %v3923, %v3927
        %v3932 = vand.u32 2147483647, %v3555
        %vm3933 = vcmp.eq.f32.partialorder %v3932, 8.507059e+37
        %v3934 = vand.u32 %v3555, 2147483648
        %v3935 = vor.u32 1.1754944e-38, %v3934
        %v3936 = vsel %vm3933, %v3935, %v3931
        %v3937 = vmul.f32 1.0, %v3936
        %v3938 = vrcp.pop %v3556
        %v3939 = vmul.f32 %v3556, %v3938
        %v3940 = vsub.f32 1.0, %v3939
        %v3941 = vmul.f32 %v3938, %v3940
        %v3942 = vadd.f32 %v3938, %v3941
        %vm3943 = vweird.f32 %v3556
        %vm3944 = vweird.f32 %v3938
        %vm3945 = vmor %vm3943, %vm3944
        %v3946 = vsel %vm3945, %v3938, %v3942
        %v3947 = vand.u32 2147483647, %v3556
        %vm3948 = vcmp.eq.f32.partialorder %v3947, 8.507059e+37
        %v3949 = vand.u32 %v3556, 2147483648
        %v3950 = vor.u32 1.1754944e-38, %v3949
        %v3951 = vsel %vm3948, %v3950, %v3946
        %v3952 = vmul.f32 1.0, %v3951
        %v3953 = vrcp.pop %v3557
        %v3954 = vmul.f32 %v3557, %v3953
        %v3955 = vsub.f32 1.0, %v3954
        %v3956 = vmul.f32 %v3953, %v3955
        %v3957 = vadd.f32 %v3953, %v3956
        %vm3958 = vweird.f32 %v3557
        %vm3959 = vweird.f32 %v3953
        %vm3960 = vmor %vm3958, %vm3959
        %v3961 = vsel %vm3960, %v3953, %v3957
        %v3962 = vand.u32 2147483647, %v3557
        %vm3963 = vcmp.eq.f32.partialorder %v3962, 8.507059e+37
        %v3964 = vand.u32 %v3557, 2147483648
        %v3965 = vor.u32 1.1754944e-38, %v3964
        %v3966 = vsel %vm3963, %v3965, %v3961
        %v3967 = vmul.f32 1.0, %v3966
        %v3968 = vrcp.pop %v3558
        %v3969 = vmul.f32 %v3558, %v3968
        %v3970 = vsub.f32 1.0, %v3969
        %v3971 = vmul.f32 %v3968, %v3970
        %v3972 = vadd.f32 %v3968, %v3971
        %vm3973 = vweird.f32 %v3558
        %vm3974 = vweird.f32 %v3968
        %vm3975 = vmor %vm3973, %vm3974
        %v3976 = vsel %vm3975, %v3968, %v3972
        %v3977 = vand.u32 2147483647, %v3558
        %vm3978 = vcmp.eq.f32.partialorder %v3977, 8.507059e+37
        %v3979 = vand.u32 %v3558, 2147483648
        %v3980 = vor.u32 1.1754944e-38, %v3979
        %v3981 = vsel %vm3978, %v3980, %v3976
        %v3982 = vmul.f32 1.0, %v3981
        %v3983 = vrcp.pop %v3559
        %v3984 = vmul.f32 %v3559, %v3983
        %v3985 = vsub.f32 1.0, %v3984
        %v3986 = vmul.f32 %v3983, %v3985
        %v3987 = vadd.f32 %v3983, %v3986
        %vm3988 = vweird.f32 %v3559
        %vm3989 = vweird.f32 %v3983
        %vm3990 = vmor %vm3988, %vm3989
        %v3991 = vsel %vm3990, %v3983, %v3987
        %v3992 = vand.u32 2147483647, %v3559
        %vm3993 = vcmp.eq.f32.partialorder %v3992, 8.507059e+37
        %v3994 = vand.u32 %v3559, 2147483648
        %v3995 = vor.u32 1.1754944e-38, %v3994
        %v3996 = vsel %vm3993, %v3995, %v3991
        %v3997 = vmul.f32 1.0, %v3996
        %v3998 = vrcp.pop %v3560
        %v3999 = vmul.f32 %v3560, %v3998
        %v4000 = vsub.f32 1.0, %v3999
        %v4001 = vmul.f32 %v3998, %v4000
        %v4002 = vadd.f32 %v3998, %v4001
        %vm4003 = vweird.f32 %v3560
        %vm4004 = vweird.f32 %v3998
        %vm4005 = vmor %vm4003, %vm4004
        %v4006 = vsel %vm4005, %v3998, %v4002
        %v4007 = vand.u32 2147483647, %v3560
        %vm4008 = vcmp.eq.f32.partialorder %v4007, 8.507059e+37
        %v4009 = vand.u32 %v3560, 2147483648
        %v4010 = vor.u32 1.1754944e-38, %v4009
        %v4011 = vsel %vm4008, %v4010, %v4006
        %v4012 = vmul.f32 1.0, %v4011
        %v4013 = vrcp.pop %v3561
        %v4014 = vmul.f32 %v3561, %v4013
        %v4015 = vsub.f32 1.0, %v4014
        %v4016 = vmul.f32 %v4013, %v4015
        %v4017 = vadd.f32 %v4013, %v4016
        %vm4018 = vweird.f32 %v3561
        %vm4019 = vweird.f32 %v4013
        %vm4020 = vmor %vm4018, %vm4019
        %v4021 = vsel %vm4020, %v4013, %v4017
        %v4022 = vand.u32 2147483647, %v3561
        %vm4023 = vcmp.eq.f32.partialorder %v4022, 8.507059e+37
        %v4024 = vand.u32 %v3561, 2147483648
        %v4025 = vor.u32 1.1754944e-38, %v4024
        %v4026 = vsel %vm4023, %v4025, %v4021
        %v4027 = vmul.f32 1.0, %v4026
        %v4028 = vrcp.pop %v3562
        %v4029 = vmul.f32 %v3562, %v4028
        %v4030 = vsub.f32 1.0, %v4029
        %v4031 = vmul.f32 %v4028, %v4030
        %v4032 = vadd.f32 %v4028, %v4031
        %vm4033 = vweird.f32 %v3562
        %vm4034 = vweird.f32 %v4028
        %vm4035 = vmor %vm4033, %vm4034
        %v4036 = vsel %vm4035, %v4028, %v4032
        %v4037 = vand.u32 2147483647, %v3562
        %vm4038 = vcmp.eq.f32.partialorder %v4037, 8.507059e+37
        %v4039 = vand.u32 %v3562, 2147483648
        %v4040 = vor.u32 1.1754944e-38, %v4039
        %v4041 = vsel %vm4038, %v4040, %v4036
        %v4042 = vmul.f32 1.0, %v4041
        %v4043 = vmul.f32 %v3577, 1.0614054
        %v4044 = vmul.f32 %v3592, 1.0614054
        %v4045 = vmul.f32 %v3607, 1.0614054
        %v4046 = vmul.f32 %v3622, 1.0614054
        %v4047 = vmul.f32 %v3637, 1.0614054
        %v4048 = vmul.f32 %v3652, 1.0614054
        %v4049 = vmul.f32 %v3667, 1.0614054
        %v4050 = vmul.f32 %v3682, 1.0614054
        %v4051 = vmul.f32 %v3697, 1.0614054
        %v4052 = vmul.f32 %v3712, 1.0614054
        %v4053 = vmul.f32 %v3727, 1.0614054
        %v4054 = vmul.f32 %v3742, 1.0614054
        %v4055 = vmul.f32 %v3757, 1.0614054
        %v4056 = vmul.f32 %v3772, 1.0614054
        %v4057 = vmul.f32 %v3787, 1.0614054
        %v4058 = vmul.f32 %v3802, 1.0614054
        %v4059 = vmul.f32 %v3817, 1.0614054
        %v4060 = vmul.f32 %v3832, 1.0614054
        %v4061 = vmul.f32 %v3847, 1.0614054
        %v4062 = vmul.f32 %v3862, 1.0614054
        %v4063 = vmul.f32 %v3877, 1.0614054
        %v4064 = vmul.f32 %v3892, 1.0614054
        %v4065 = vmul.f32 %v3907, 1.0614054
        %v4066 = vmul.f32 %v3922, 1.0614054
        %v4067 = vmul.f32 %v3937, 1.0614054
        %v4068 = vmul.f32 %v3952, 1.0614054
        %v4069 = vmul.f32 %v3967, 1.0614054
        %v4070 = vmul.f32 %v3982, 1.0614054
        %v4071 = vmul.f32 %v3997, 1.0614054
        %v4072 = vmul.f32 %v4012, 1.0614054
        %v4073 = vmul.f32 %v4027, 1.0614054
        %v4074 = vmul.f32 %v4042, 1.0614054
        %v4075 = vadd.f32 %v4043, -1.4531521
        %v4076 = vadd.f32 %v4044, -1.4531521
        %v4077 = vadd.f32 %v4045, -1.4531521
        %v4078 = vadd.f32 %v4046, -1.4531521
        %v4079 = vadd.f32 %v4047, -1.4531521
        %v4080 = vadd.f32 %v4048, -1.4531521
        %v4081 = vadd.f32 %v4049, -1.4531521
        %v4082 = vadd.f32 %v4050, -1.4531521
        %v4083 = vadd.f32 %v4051, -1.4531521
        %v4084 = vadd.f32 %v4052, -1.4531521
        %v4085 = vadd.f32 %v4053, -1.4531521
        %v4086 = vadd.f32 %v4054, -1.4531521
        %v4087 = vadd.f32 %v4055, -1.4531521
        %v4088 = vadd.f32 %v4056, -1.4531521
        %v4089 = vadd.f32 %v4057, -1.4531521
        %v4090 = vadd.f32 %v4058, -1.4531521
        %v4091 = vadd.f32 %v4059, -1.4531521
        %v4092 = vadd.f32 %v4060, -1.4531521
        %v4093 = vadd.f32 %v4061, -1.4531521
        %v4094 = vadd.f32 %v4062, -1.4531521
        %v4095 = vadd.f32 %v4063, -1.4531521
        %v4096 = vadd.f32 %v4064, -1.4531521
        %v4097 = vadd.f32 %v4065, -1.4531521
        %v4098 = vadd.f32 %v4066, -1.4531521
        %v4099 = vadd.f32 %v4067, -1.4531521
        %v4100 = vadd.f32 %v4068, -1.4531521
        %v4101 = vadd.f32 %v4069, -1.4531521
        %v4102 = vadd.f32 %v4070, -1.4531521
        %v4103 = vadd.f32 %v4071, -1.4531521
        %v4104 = vadd.f32 %v4072, -1.4531521
        %v4105 = vadd.f32 %v4073, -1.4531521
        %v4106 = vadd.f32 %v4074, -1.4531521
        %v4107 = vmul.f32 %v4075, %v3577
        %v4108 = vmul.f32 %v4076, %v3592
        %v4109 = vmul.f32 %v4077, %v3607
        %v4110 = vmul.f32 %v4078, %v3622
        %v4111 = vmul.f32 %v4079, %v3637
        %v4112 = vmul.f32 %v4080, %v3652
        %v4113 = vmul.f32 %v4081, %v3667
        %v4114 = vmul.f32 %v4082, %v3682
        %v4115 = vmul.f32 %v4083, %v3697
        %v4116 = vmul.f32 %v4084, %v3712
        %v4117 = vmul.f32 %v4085, %v3727
        %v4118 = vmul.f32 %v4086, %v3742
        %v4119 = vmul.f32 %v4087, %v3757
        %v4120 = vmul.f32 %v4088, %v3772
        %v4121 = vmul.f32 %v4089, %v3787
        %v4122 = vmul.f32 %v4090, %v3802
        %v4123 = vmul.f32 %v4091, %v3817
        %v4124 = vmul.f32 %v4092, %v3832
        %v4125 = vmul.f32 %v4093, %v3847
        %v4126 = vmul.f32 %v4094, %v3862
        %v4127 = vmul.f32 %v4095, %v3877
        %v4128 = vmul.f32 %v4096, %v3892
        %v4129 = vmul.f32 %v4097, %v3907
        %v4130 = vmul.f32 %v4098, %v3922
        %v4131 = vmul.f32 %v4099, %v3937
        %v4132 = vmul.f32 %v4100, %v3952
        %v4133 = vmul.f32 %v4101, %v3967
        %v4134 = vmul.f32 %v4102, %v3982
        %v4135 = vmul.f32 %v4103, %v3997
        %v4136 = vmul.f32 %v4104, %v4012
        %v4137 = vmul.f32 %v4105, %v4027
        %v4138 = vmul.f32 %v4106, %v4042
        %v4139 = vadd.f32 %v4107, 1.4214138
        %v4140 = vadd.f32 %v4108, 1.4214138
        %v4141 = vadd.f32 %v4109, 1.4214138
        %v4142 = vadd.f32 %v4110, 1.4214138
        %v4143 = vadd.f32 %v4111, 1.4214138
        %v4144 = vadd.f32 %v4112, 1.4214138
        %v4145 = vadd.f32 %v4113, 1.4214138
        %v4146 = vadd.f32 %v4114, 1.4214138
        %v4147 = vadd.f32 %v4115, 1.4214138
        %v4148 = vadd.f32 %v4116, 1.4214138
        %v4149 = vadd.f32 %v4117, 1.4214138
        %v4150 = vadd.f32 %v4118, 1.4214138
        %v4151 = vadd.f32 %v4119, 1.4214138
        %v4152 = vadd.f32 %v4120, 1.4214138
        %v4153 = vadd.f32 %v4121, 1.4214138
        %v4154 = vadd.f32 %v4122, 1.4214138
        %v4155 = vadd.f32 %v4123, 1.4214138
        %v4156 = vadd.f32 %v4124, 1.4214138
        %v4157 = vadd.f32 %v4125, 1.4214138
        %v4158 = vadd.f32 %v4126, 1.4214138
        %v4159 = vadd.f32 %v4127, 1.4214138
        %v4160 = vadd.f32 %v4128, 1.4214138
        %v4161 = vadd.f32 %v4129, 1.4214138
        %v4162 = vadd.f32 %v4130, 1.4214138
        %v4163 = vadd.f32 %v4131, 1.4214138
        %v4164 = vadd.f32 %v4132, 1.4214138
        %v4165 = vadd.f32 %v4133, 1.4214138
        %v4166 = vadd.f32 %v4134, 1.4214138
        %v4167 = vadd.f32 %v4135, 1.4214138
        %v4168 = vadd.f32 %v4136, 1.4214138
        %v4169 = vadd.f32 %v4137, 1.4214138
        %v4170 = vadd.f32 %v4138, 1.4214138
        %v4171 = vmul.f32 %v4139, %v3577
        %v4172 = vmul.f32 %v4140, %v3592
        %v4173 = vmul.f32 %v4141, %v3607
        %v4174 = vmul.f32 %v4142, %v3622
        %v4175 = vmul.f32 %v4143, %v3637
        %v4176 = vmul.f32 %v4144, %v3652
        %v4177 = vmul.f32 %v4145, %v3667
        %v4178 = vmul.f32 %v4146, %v3682
        %v4179 = vmul.f32 %v4147, %v3697
        %v4180 = vmul.f32 %v4148, %v3712
        %v4181 = vmul.f32 %v4149, %v3727
        %v4182 = vmul.f32 %v4150, %v3742
        %v4183 = vmul.f32 %v4151, %v3757
        %v4184 = vmul.f32 %v4152, %v3772
        %v4185 = vmul.f32 %v4153, %v3787
        %v4186 = vmul.f32 %v4154, %v3802
        %v4187 = vmul.f32 %v4155, %v3817
        %v4188 = vmul.f32 %v4156, %v3832
        %v4189 = vmul.f32 %v4157, %v3847
        %v4190 = vmul.f32 %v4158, %v3862
        %v4191 = vmul.f32 %v4159, %v3877
        %v4192 = vmul.f32 %v4160, %v3892
        %v4193 = vmul.f32 %v4161, %v3907
        %v4194 = vmul.f32 %v4162, %v3922
        %v4195 = vmul.f32 %v4163, %v3937
        %v4196 = vmul.f32 %v4164, %v3952
        %v4197 = vmul.f32 %v4165, %v3967
        %v4198 = vmul.f32 %v4166, %v3982
        %v4199 = vmul.f32 %v4167, %v3997
        %v4200 = vmul.f32 %v4168, %v4012
        %v4201 = vmul.f32 %v4169, %v4027
        %v4202 = vmul.f32 %v4170, %v4042
        %v4203 = vadd.f32 %v4171, -0.28449672
        %v4204 = vadd.f32 %v4172, -0.28449672
        %v4205 = vadd.f32 %v4173, -0.28449672
        %v4206 = vadd.f32 %v4174, -0.28449672
        %v4207 = vadd.f32 %v4175, -0.28449672
        %v4208 = vadd.f32 %v4176, -0.28449672
        %v4209 = vadd.f32 %v4177, -0.28449672
        %v4210 = vadd.f32 %v4178, -0.28449672
        %v4211 = vadd.f32 %v4179, -0.28449672
        %v4212 = vadd.f32 %v4180, -0.28449672
        %v4213 = vadd.f32 %v4181, -0.28449672
        %v4214 = vadd.f32 %v4182, -0.28449672
        %v4215 = vadd.f32 %v4183, -0.28449672
        %v4216 = vadd.f32 %v4184, -0.28449672
        %v4217 = vadd.f32 %v4185, -0.28449672
        %v4218 = vadd.f32 %v4186, -0.28449672
        %v4219 = vadd.f32 %v4187, -0.28449672
        %v4220 = vadd.f32 %v4188, -0.28449672
        %v4221 = vadd.f32 %v4189, -0.28449672
        %v4222 = vadd.f32 %v4190, -0.28449672
        %v4223 = vadd.f32 %v4191, -0.28449672
        %v4224 = vadd.f32 %v4192, -0.28449672
        %v4225 = vadd.f32 %v4193, -0.28449672
        %v4226 = vadd.f32 %v4194, -0.28449672
        %v4227 = vadd.f32 %v4195, -0.28449672
        %v4228 = vadd.f32 %v4196, -0.28449672
        %v4229 = vadd.f32 %v4197, -0.28449672
        %v4230 = vadd.f32 %v4198, -0.28449672
        %v4231 = vadd.f32 %v4199, -0.28449672
        %v4232 = vadd.f32 %v4200, -0.28449672
        %v4233 = vadd.f32 %v4201, -0.28449672
        %v4234 = vadd.f32 %v4202, -0.28449672
        %v4235 = vmul.f32 %v4203, %v3577
        %v4236 = vmul.f32 %v4204, %v3592
        %v4237 = vmul.f32 %v4205, %v3607
        %v4238 = vmul.f32 %v4206, %v3622
        %v4239 = vmul.f32 %v4207, %v3637
        %v4240 = vmul.f32 %v4208, %v3652
        %v4241 = vmul.f32 %v4209, %v3667
        %v4242 = vmul.f32 %v4210, %v3682
        %v4243 = vmul.f32 %v4211, %v3697
        %v4244 = vmul.f32 %v4212, %v3712
        %v4245 = vmul.f32 %v4213, %v3727
        %v4246 = vmul.f32 %v4214, %v3742
        %v4247 = vmul.f32 %v4215, %v3757
        %v4248 = vmul.f32 %v4216, %v3772
        %v4249 = vmul.f32 %v4217, %v3787
        %v4250 = vmul.f32 %v4218, %v3802
        %v4251 = vmul.f32 %v4219, %v3817
        %v4252 = vmul.f32 %v4220, %v3832
        %v4253 = vmul.f32 %v4221, %v3847
        %v4254 = vmul.f32 %v4222, %v3862
        %v4255 = vmul.f32 %v4223, %v3877
        %v4256 = vmul.f32 %v4224, %v3892
        %v4257 = vmul.f32 %v4225, %v3907
        %v4258 = vmul.f32 %v4226, %v3922
        %v4259 = vmul.f32 %v4227, %v3937
        %v4260 = vmul.f32 %v4228, %v3952
        %v4261 = vmul.f32 %v4229, %v3967
        %v4262 = vmul.f32 %v4230, %v3982
        %v4263 = vmul.f32 %v4231, %v3997
        %v4264 = vmul.f32 %v4232, %v4012
        %v4265 = vmul.f32 %v4233, %v4027
        %v4266 = vmul.f32 %v4234, %v4042
        %v4267 = vadd.f32 %v4235, 0.2548296
        %v4268 = vadd.f32 %v4236, 0.2548296
        %v4269 = vadd.f32 %v4237, 0.2548296
        %v4270 = vadd.f32 %v4238, 0.2548296
        %v4271 = vadd.f32 %v4239, 0.2548296
        %v4272 = vadd.f32 %v4240, 0.2548296
        %v4273 = vadd.f32 %v4241, 0.2548296
        %v4274 = vadd.f32 %v4242, 0.2548296
        %v4275 = vadd.f32 %v4243, 0.2548296
        %v4276 = vadd.f32 %v4244, 0.2548296
        %v4277 = vadd.f32 %v4245, 0.2548296
        %v4278 = vadd.f32 %v4246, 0.2548296
        %v4279 = vadd.f32 %v4247, 0.2548296
        %v4280 = vadd.f32 %v4248, 0.2548296
        %v4281 = vadd.f32 %v4249, 0.2548296
        %v4282 = vadd.f32 %v4250, 0.2548296
        %v4283 = vadd.f32 %v4251, 0.2548296
        %v4284 = vadd.f32 %v4252, 0.2548296
        %v4285 = vadd.f32 %v4253, 0.2548296
        %v4286 = vadd.f32 %v4254, 0.2548296
        %v4287 = vadd.f32 %v4255, 0.2548296
        %v4288 = vadd.f32 %v4256, 0.2548296
        %v4289 = vadd.f32 %v4257, 0.2548296
        %v4290 = vadd.f32 %v4258, 0.2548296
        %v4291 = vadd.f32 %v4259, 0.2548296
        %v4292 = vadd.f32 %v4260, 0.2548296
        %v4293 = vadd.f32 %v4261, 0.2548296
        %v4294 = vadd.f32 %v4262, 0.2548296
        %v4295 = vadd.f32 %v4263, 0.2548296
        %v4296 = vadd.f32 %v4264, 0.2548296
        %v4297 = vadd.f32 %v4265, 0.2548296
        %v4298 = vadd.f32 %v4266, 0.2548296
        %v4299 = vmul.f32 %v4267, %v3577
        %v4300 = vmul.f32 %v4268, %v3592
        %v4301 = vmul.f32 %v4269, %v3607
        %v4302 = vmul.f32 %v4270, %v3622
        %v4303 = vmul.f32 %v4271, %v3637
        %v4304 = vmul.f32 %v4272, %v3652
        %v4305 = vmul.f32 %v4273, %v3667
        %v4306 = vmul.f32 %v4274, %v3682
        %v4307 = vmul.f32 %v4275, %v3697
        %v4308 = vmul.f32 %v4276, %v3712
        %v4309 = vmul.f32 %v4277, %v3727
        %v4310 = vmul.f32 %v4278, %v3742
        %v4311 = vmul.f32 %v4279, %v3757
        %v4312 = vmul.f32 %v4280, %v3772
        %v4313 = vmul.f32 %v4281, %v3787
        %v4314 = vmul.f32 %v4282, %v3802
        %v4315 = vmul.f32 %v4283, %v3817
        %v4316 = vmul.f32 %v4284, %v3832
        %v4317 = vmul.f32 %v4285, %v3847
        %v4318 = vmul.f32 %v4286, %v3862
        %v4319 = vmul.f32 %v4287, %v3877
        %v4320 = vmul.f32 %v4288, %v3892
        %v4321 = vmul.f32 %v4289, %v3907
        %v4322 = vmul.f32 %v4290, %v3922
        %v4323 = vmul.f32 %v4291, %v3937
        %v4324 = vmul.f32 %v4292, %v3952
        %v4325 = vmul.f32 %v4293, %v3967
        %v4326 = vmul.f32 %v4294, %v3982
        %v4327 = vmul.f32 %v4295, %v3997
        %v4328 = vmul.f32 %v4296, %v4012
        %v4329 = vmul.f32 %v4297, %v4027
        %v4330 = vmul.f32 %v4298, %v4042
        %v4331 = vsub.f32 0.0, %v3467
        %v4332 = vsub.f32 0.0, %v3468
        %v4333 = vsub.f32 0.0, %v3469
        %v4334 = vsub.f32 0.0, %v3470
        %v4335 = vsub.f32 0.0, %v3471
        %v4336 = vsub.f32 0.0, %v3472
        %v4337 = vsub.f32 0.0, %v3473
        %v4338 = vsub.f32 0.0, %v3474
        %v4339 = vsub.f32 0.0, %v3475
        %v4340 = vsub.f32 0.0, %v3476
        %v4341 = vsub.f32 0.0, %v3477
        %v4342 = vsub.f32 0.0, %v3478
        %v4343 = vsub.f32 0.0, %v3479
        %v4344 = vsub.f32 0.0, %v3480
        %v4345 = vsub.f32 0.0, %v3481
        %v4346 = vsub.f32 0.0, %v3482
        %v4347 = vsub.f32 0.0, %v3483
        %v4348 = vsub.f32 0.0, %v3484
        %v4349 = vsub.f32 0.0, %v3485
        %v4350 = vsub.f32 0.0, %v3486
        %v4351 = vsub.f32 0.0, %v3487
        %v4352 = vsub.f32 0.0, %v3488
        %v4353 = vsub.f32 0.0, %v3489
        %v4354 = vsub.f32 0.0, %v3490
        %v4355 = vsub.f32 0.0, %v3491
        %v4356 = vsub.f32 0.0, %v3492
        %v4357 = vsub.f32 0.0, %v3493
        %v4358 = vsub.f32 0.0, %v3494
        %v4359 = vsub.f32 0.0, %v3495
        %v4360 = vsub.f32 0.0, %v3496
        %v4361 = vsub.f32 0.0, %v3497
        %v4362 = vsub.f32 0.0, %v3498
        %v4363 = vmul.f32 %v4331, %v3467
        %v4364 = vmul.f32 %v4332, %v3468
        %v4365 = vmul.f32 %v4333, %v3469
        %v4366 = vmul.f32 %v4334, %v3470
        %v4367 = vmul.f32 %v4335, %v3471
        %v4368 = vmul.f32 %v4336, %v3472
        %v4369 = vmul.f32 %v4337, %v3473
        %v4370 = vmul.f32 %v4338, %v3474
        %v4371 = vmul.f32 %v4339, %v3475
        %v4372 = vmul.f32 %v4340, %v3476
        %v4373 = vmul.f32 %v4341, %v3477
        %v4374 = vmul.f32 %v4342, %v3478
        %v4375 = vmul.f32 %v4343, %v3479
        %v4376 = vmul.f32 %v4344, %v3480
        %v4377 = vmul.f32 %v4345, %v3481
        %v4378 = vmul.f32 %v4346, %v3482
        %v4379 = vmul.f32 %v4347, %v3483
        %v4380 = vmul.f32 %v4348, %v3484
        %v4381 = vmul.f32 %v4349, %v3485
        %v4382 = vmul.f32 %v4350, %v3486
        %v4383 = vmul.f32 %v4351, %v3487
        %v4384 = vmul.f32 %v4352, %v3488
        %v4385 = vmul.f32 %v4353, %v3489
        %v4386 = vmul.f32 %v4354, %v3490
        %v4387 = vmul.f32 %v4355, %v3491
        %v4388 = vmul.f32 %v4356, %v3492
        %v4389 = vmul.f32 %v4357, %v3493
        %v4390 = vmul.f32 %v4358, %v3494
        %v4391 = vmul.f32 %v4359, %v3495
        %v4392 = vmul.f32 %v4360, %v3496
        %v4393 = vmul.f32 %v4361, %v3497
        %v4394 = vmul.f32 %v4362, %v3498
        %v4395 = vmul.f32 %v4363, 1.442695
        %v4396 = vpow.pop %v4395
        %v4397 = vmul.f32 %v4364, 1.442695
        %v4398 = vpow.pop %v4397
        %v4399 = vmul.f32 %v4365, 1.442695
        %v4400 = vpow.pop %v4399
        %v4401 = vmul.f32 %v4366, 1.442695
        %v4402 = vpow.pop %v4401
        %v4403 = vmul.f32 %v4367, 1.442695
        %v4404 = vpow.pop %v4403
        %v4405 = vmul.f32 %v4368, 1.442695
        %v4406 = vpow.pop %v4405
        %v4407 = vmul.f32 %v4369, 1.442695
        %v4408 = vpow.pop %v4407
        %v4409 = vmul.f32 %v4370, 1.442695
        %v4410 = vpow.pop %v4409
        %v4411 = vmul.f32 %v4371, 1.442695
        %v4412 = vpow.pop %v4411
        %v4413 = vmul.f32 %v4372, 1.442695
        %v4414 = vpow.pop %v4413
        %v4415 = vmul.f32 %v4373, 1.442695
        %v4416 = vpow.pop %v4415
        %v4417 = vmul.f32 %v4374, 1.442695
        %v4418 = vpow.pop %v4417
        %v4419 = vmul.f32 %v4375, 1.442695
        %v4420 = vpow.pop %v4419
        %v4421 = vmul.f32 %v4376, 1.442695
        %v4422 = vpow.pop %v4421
        %v4423 = vmul.f32 %v4377, 1.442695
        %v4424 = vpow.pop %v4423
        %v4425 = vmul.f32 %v4378, 1.442695
        %v4426 = vpow.pop %v4425
        %v4427 = vmul.f32 %v4379, 1.442695
        %v4428 = vpow.pop %v4427
        %v4429 = vmul.f32 %v4380, 1.442695
        %v4430 = vpow.pop %v4429
        %v4431 = vmul.f32 %v4381, 1.442695
        %v4432 = vpow.pop %v4431
        %v4433 = vmul.f32 %v4382, 1.442695
        %v4434 = vpow.pop %v4433
        %v4435 = vmul.f32 %v4383, 1.442695
        %v4436 = vpow.pop %v4435
        %v4437 = vmul.f32 %v4384, 1.442695
        %v4438 = vpow.pop %v4437
        %v4439 = vmul.f32 %v4385, 1.442695
        %v4440 = vpow.pop %v4439
        %v4441 = vmul.f32 %v4386, 1.442695
        %v4442 = vpow.pop %v4441
        %v4443 = vmul.f32 %v4387, 1.442695
        %v4444 = vpow.pop %v4443
        %v4445 = vmul.f32 %v4388, 1.442695
        %v4446 = vpow.pop %v4445
        %v4447 = vmul.f32 %v4389, 1.442695
        %v4448 = vpow.pop %v4447
        %v4449 = vmul.f32 %v4390, 1.442695
        %v4450 = vpow.pop %v4449
        %v4451 = vmul.f32 %v4391, 1.442695
        %v4452 = vpow.pop %v4451
        %v4453 = vmul.f32 %v4392, 1.442695
        %v4454 = vpow.pop %v4453
        %v4455 = vmul.f32 %v4393, 1.442695
        %v4456 = vpow.pop %v4455
        %v4457 = vmul.f32 %v4394, 1.442695
        %v4458 = vpow.pop %v4457
        %v4459 = vmul.f32 %v4299, %v4396
        %v4460 = vmul.f32 %v4300, %v4398
        %v4461 = vmul.f32 %v4301, %v4400
        %v4462 = vmul.f32 %v4302, %v4402
        %v4463 = vmul.f32 %v4303, %v4404
        %v4464 = vmul.f32 %v4304, %v4406
        %v4465 = vmul.f32 %v4305, %v4408
        %v4466 = vmul.f32 %v4306, %v4410
        %v4467 = vmul.f32 %v4307, %v4412
        %v4468 = vmul.f32 %v4308, %v4414
        %v4469 = vmul.f32 %v4309, %v4416
        %v4470 = vmul.f32 %v4310, %v4418
        %v4471 = vmul.f32 %v4311, %v4420
        %v4472 = vmul.f32 %v4312, %v4422
        %v4473 = vmul.f32 %v4313, %v4424
        %v4474 = vmul.f32 %v4314, %v4426
        %v4475 = vmul.f32 %v4315, %v4428
        %v4476 = vmul.f32 %v4316, %v4430
        %v4477 = vmul.f32 %v4317, %v4432
        %v4478 = vmul.f32 %v4318, %v4434
        %v4479 = vmul.f32 %v4319, %v4436
        %v4480 = vmul.f32 %v4320, %v4438
        %v4481 = vmul.f32 %v4321, %v4440
        %v4482 = vmul.f32 %v4322, %v4442
        %v4483 = vmul.f32 %v4323, %v4444
        %v4484 = vmul.f32 %v4324, %v4446
        %v4485 = vmul.f32 %v4325, %v4448
        %v4486 = vmul.f32 %v4326, %v4450
        %v4487 = vmul.f32 %v4327, %v4452
        %v4488 = vmul.f32 %v4328, %v4454
        %v4489 = vmul.f32 %v4329, %v4456
        %v4490 = vmul.f32 %v4330, %v4458
        %v4491 = vsub.f32 1.0, %v4459
        %v4492 = vsub.f32 1.0, %v4460
        %v4493 = vsub.f32 1.0, %v4461
        %v4494 = vsub.f32 1.0, %v4462
        %v4495 = vsub.f32 1.0, %v4463
        %v4496 = vsub.f32 1.0, %v4464
        %v4497 = vsub.f32 1.0, %v4465
        %v4498 = vsub.f32 1.0, %v4466
        %v4499 = vsub.f32 1.0, %v4467
        %v4500 = vsub.f32 1.0, %v4468
        %v4501 = vsub.f32 1.0, %v4469
        %v4502 = vsub.f32 1.0, %v4470
        %v4503 = vsub.f32 1.0, %v4471
        %v4504 = vsub.f32 1.0, %v4472
        %v4505 = vsub.f32 1.0, %v4473
        %v4506 = vsub.f32 1.0, %v4474
        %v4507 = vsub.f32 1.0, %v4475
        %v4508 = vsub.f32 1.0, %v4476
        %v4509 = vsub.f32 1.0, %v4477
        %v4510 = vsub.f32 1.0, %v4478
        %v4511 = vsub.f32 1.0, %v4479
        %v4512 = vsub.f32 1.0, %v4480
        %v4513 = vsub.f32 1.0, %v4481
        %v4514 = vsub.f32 1.0, %v4482
        %v4515 = vsub.f32 1.0, %v4483
        %v4516 = vsub.f32 1.0, %v4484
        %v4517 = vsub.f32 1.0, %v4485
        %v4518 = vsub.f32 1.0, %v4486
        %v4519 = vsub.f32 1.0, %v4487
        %v4520 = vsub.f32 1.0, %v4488
        %v4521 = vsub.f32 1.0, %v4489
        %v4522 = vsub.f32 1.0, %v4490
        %vm4523 = vcmp.ge.f32.partialorder %v3435, 0.0
        %vm4524 = vcmp.ge.f32.partialorder %v3436, 0.0
        %vm4525 = vcmp.ge.f32.partialorder %v3437, 0.0
        %vm4526 = vcmp.ge.f32.partialorder %v3438, 0.0
        %vm4527 = vcmp.ge.f32.partialorder %v3439, 0.0
        %vm4528 = vcmp.ge.f32.partialorder %v3440, 0.0
        %vm4529 = vcmp.ge.f32.partialorder %v3441, 0.0
        %vm4530 = vcmp.ge.f32.partialorder %v3442, 0.0
        %vm4531 = vcmp.ge.f32.partialorder %v3443, 0.0
        %vm4532 = vcmp.ge.f32.partialorder %v3444, 0.0
        %vm4533 = vcmp.ge.f32.partialorder %v3445, 0.0
        %vm4534 = vcmp.ge.f32.partialorder %v3446, 0.0
        %vm4535 = vcmp.ge.f32.partialorder %v3447, 0.0
        %vm4536 = vcmp.ge.f32.partialorder %v3448, 0.0
        %vm4537 = vcmp.ge.f32.partialorder %v3449, 0.0
        %vm4538 = vcmp.ge.f32.partialorder %v3450, 0.0
        %vm4539 = vcmp.ge.f32.partialorder %v3451, 0.0
        %vm4540 = vcmp.ge.f32.partialorder %v3452, 0.0
        %vm4541 = vcmp.ge.f32.partialorder %v3453, 0.0
        %vm4542 = vcmp.ge.f32.partialorder %v3454, 0.0
        %vm4543 = vcmp.ge.f32.partialorder %v3455, 0.0
        %vm4544 = vcmp.ge.f32.partialorder %v3456, 0.0
        %vm4545 = vcmp.ge.f32.partialorder %v3457, 0.0
        %vm4546 = vcmp.ge.f32.partialorder %v3458, 0.0
        %vm4547 = vcmp.ge.f32.partialorder %v3459, 0.0
        %vm4548 = vcmp.ge.f32.partialorder %v3460, 0.0
        %vm4549 = vcmp.ge.f32.partialorder %v3461, 0.0
        %vm4550 = vcmp.ge.f32.partialorder %v3462, 0.0
        %vm4551 = vcmp.ge.f32.partialorder %v3463, 0.0
        %vm4552 = vcmp.ge.f32.partialorder %v3464, 0.0
        %vm4553 = vcmp.ge.f32.partialorder %v3465, 0.0
        %vm4554 = vcmp.ge.f32.partialorder %v3466, 0.0
        %v4555 = vsub.f32 0.0, %v4491
        %v4556 = vsub.f32 0.0, %v4492
        %v4557 = vsub.f32 0.0, %v4493
        %v4558 = vsub.f32 0.0, %v4494
        %v4559 = vsub.f32 0.0, %v4495
        %v4560 = vsub.f32 0.0, %v4496
        %v4561 = vsub.f32 0.0, %v4497
        %v4562 = vsub.f32 0.0, %v4498
        %v4563 = vsub.f32 0.0, %v4499
        %v4564 = vsub.f32 0.0, %v4500
        %v4565 = vsub.f32 0.0, %v4501
        %v4566 = vsub.f32 0.0, %v4502
        %v4567 = vsub.f32 0.0, %v4503
        %v4568 = vsub.f32 0.0, %v4504
        %v4569 = vsub.f32 0.0, %v4505
        %v4570 = vsub.f32 0.0, %v4506
        %v4571 = vsub.f32 0.0, %v4507
        %v4572 = vsub.f32 0.0, %v4508
        %v4573 = vsub.f32 0.0, %v4509
        %v4574 = vsub.f32 0.0, %v4510
        %v4575 = vsub.f32 0.0, %v4511
        %v4576 = vsub.f32 0.0, %v4512
        %v4577 = vsub.f32 0.0, %v4513
        %v4578 = vsub.f32 0.0, %v4514
        %v4579 = vsub.f32 0.0, %v4515
        %v4580 = vsub.f32 0.0, %v4516
        %v4581 = vsub.f32 0.0, %v4517
        %v4582 = vsub.f32 0.0, %v4518
        %v4583 = vsub.f32 0.0, %v4519
        %v4584 = vsub.f32 0.0, %v4520
        %v4585 = vsub.f32 0.0, %v4521
        %v4586 = vsub.f32 0.0, %v4522
        %v4587 = vsel %vm4523, %v4491, %v4555
        %v4588 = vsel %vm4524, %v4492, %v4556
        %v4589 = vsel %vm4525, %v4493, %v4557
        %v4590 = vsel %vm4526, %v4494, %v4558
        %v4591 = vsel %vm4527, %v4495, %v4559
        %v4592 = vsel %vm4528, %v4496, %v4560
        %v4593 = vsel %vm4529, %v4497, %v4561
        %v4594 = vsel %vm4530, %v4498, %v4562
        %v4595 = vsel %vm4531, %v4499, %v4563
        %v4596 = vsel %vm4532, %v4500, %v4564
        %v4597 = vsel %vm4533, %v4501, %v4565
        %v4598 = vsel %vm4534, %v4502, %v4566
        %v4599 = vsel %vm4535, %v4503, %v4567
        %v4600 = vsel %vm4536, %v4504, %v4568
        %v4601 = vsel %vm4537, %v4505, %v4569
        %v4602 = vsel %vm4538, %v4506, %v4570
        %v4603 = vsel %vm4539, %v4507, %v4571
        %v4604 = vsel %vm4540, %v4508, %v4572
        %v4605 = vsel %vm4541, %v4509, %v4573
        %v4606 = vsel %vm4542, %v4510, %v4574
        %v4607 = vsel %vm4543, %v4511, %v4575
        %v4608 = vsel %vm4544, %v4512, %v4576
        %v4609 = vsel %vm4545, %v4513, %v4577
        %v4610 = vsel %vm4546, %v4514, %v4578
        %v4611 = vsel %vm4547, %v4515, %v4579
        %v4612 = vsel %vm4548, %v4516, %v4580
        %v4613 = vsel %vm4549, %v4517, %v4581
        %v4614 = vsel %vm4550, %v4518, %v4582
        %v4615 = vsel %vm4551, %v4519, %v4583
        %v4616 = vsel %vm4552, %v4520, %v4584
        %v4617 = vsel %vm4553, %v4521, %v4585
        %v4618 = vsel %vm4554, %v4522, %v4586
        %v4619 = vadd.f32 %v4587, 1.0
        %v4620 = vadd.f32 %v4588, 1.0
        %v4621 = vadd.f32 %v4589, 1.0
        %v4622 = vadd.f32 %v4590, 1.0
        %v4623 = vadd.f32 %v4591, 1.0
        %v4624 = vadd.f32 %v4592, 1.0
        %v4625 = vadd.f32 %v4593, 1.0
        %v4626 = vadd.f32 %v4594, 1.0
        %v4627 = vadd.f32 %v4595, 1.0
        %v4628 = vadd.f32 %v4596, 1.0
        %v4629 = vadd.f32 %v4597, 1.0
        %v4630 = vadd.f32 %v4598, 1.0
        %v4631 = vadd.f32 %v4599, 1.0
        %v4632 = vadd.f32 %v4600, 1.0
        %v4633 = vadd.f32 %v4601, 1.0
        %v4634 = vadd.f32 %v4602, 1.0
        %v4635 = vadd.f32 %v4603, 1.0
        %v4636 = vadd.f32 %v4604, 1.0
        %v4637 = vadd.f32 %v4605, 1.0
        %v4638 = vadd.f32 %v4606, 1.0
        %v4639 = vadd.f32 %v4607, 1.0
        %v4640 = vadd.f32 %v4608, 1.0
        %v4641 = vadd.f32 %v4609, 1.0
        %v4642 = vadd.f32 %v4610, 1.0
        %v4643 = vadd.f32 %v4611, 1.0
        %v4644 = vadd.f32 %v4612, 1.0
        %v4645 = vadd.f32 %v4613, 1.0
        %v4646 = vadd.f32 %v4614, 1.0
        %v4647 = vadd.f32 %v4615, 1.0
        %v4648 = vadd.f32 %v4616, 1.0
        %v4649 = vadd.f32 %v4617, 1.0
        %v4650 = vadd.f32 %v4618, 1.0
        %v4651 = vmul.f32 %v3403, %v4619
        %v4652 = vmul.f32 %v3404, %v4620
        %v4653 = vmul.f32 %v3405, %v4621
        %v4654 = vmul.f32 %v3406, %v4622
        %v4655 = vmul.f32 %v3407, %v4623
        %v4656 = vmul.f32 %v3408, %v4624
        %v4657 = vmul.f32 %v3409, %v4625
        %v4658 = vmul.f32 %v3410, %v4626
        %v4659 = vmul.f32 %v3411, %v4627
        %v4660 = vmul.f32 %v3412, %v4628
        %v4661 = vmul.f32 %v3413, %v4629
        %v4662 = vmul.f32 %v3414, %v4630
        %v4663 = vmul.f32 %v3415, %v4631
        %v4664 = vmul.f32 %v3416, %v4632
        %v4665 = vmul.f32 %v3417, %v4633
        %v4666 = vmul.f32 %v3418, %v4634
        %v4667 = vmul.f32 %v3419, %v4635
        %v4668 = vmul.f32 %v3420, %v4636
        %v4669 = vmul.f32 %v3421, %v4637
        %v4670 = vmul.f32 %v3422, %v4638
        %v4671 = vmul.f32 %v3423, %v4639
        %v4672 = vmul.f32 %v3424, %v4640
        %v4673 = vmul.f32 %v3425, %v4641
        %v4674 = vmul.f32 %v3426, %v4642
        %v4675 = vmul.f32 %v3427, %v4643
        %v4676 = vmul.f32 %v3428, %v4644
        %v4677 = vmul.f32 %v3429, %v4645
        %v4678 = vmul.f32 %v3430, %v4646
        %v4679 = vmul.f32 %v3431, %v4647
        %v4680 = vmul.f32 %v3432, %v4648
        %v4681 = vmul.f32 %v3433, %v4649
        %v4682 = vmul.f32 %v3434, %v4650
        %v4683 = vpack.c.bf16 %v4655, %v4651
        %v4684 = vpack.c.bf16 %v4656, %v4652
        %v4685 = vpack.c.bf16 %v4657, %v4653
        %v4686 = vpack.c.bf16 %v4658, %v4654
        %v4687 = vpack.c.bf16 %v4663, %v4659
        %v4688 = vpack.c.bf16 %v4664, %v4660
        %v4689 = vpack.c.bf16 %v4665, %v4661
        %v4690 = vpack.c.bf16 %v4666, %v4662
        %v4691 = vpack.c.bf16 %v4671, %v4667
        %v4692 = vpack.c.bf16 %v4672, %v4668
        %v4693 = vpack.c.bf16 %v4673, %v4669
        %v4694 = vpack.c.bf16 %v4674, %v4670
        %v4695 = vpack.c.bf16 %v4679, %v4675
        %v4696 = vpack.c.bf16 %v4680, %v4676
        %v4697 = vpack.c.bf16 %v4681, %v4677
        %v4698 = vpack.c.bf16 %v4682, %v4678
        %v4699 = vld [vmem:[%s15] sm:$0xf]
        %v4700 = vld [vmem:[%s15 + $0x4] sm:$0xf]
        %v4701 = vld [vmem:[%s15 + $0x8] sm:$0xf]
        %v4702 = vld [vmem:[%s15 + $0xc] sm:$0xf]
        %v4703 = vld [vmem:[%s15 + $0x10] sm:$0xf]
        %v4704 = vld [vmem:[%s15 + $0x14] sm:$0xf]
        %v4705 = vld [vmem:[%s15 + $0x18] sm:$0xf]
        %v4706 = vld [vmem:[%s15 + $0x1c] sm:$0xf]
        %v4707 = vld [vmem:[%s15 + $0x20] sm:$0xf]
        %v4708 = vld [vmem:[%s15 + $0x24] sm:$0xf]
        %v4709 = vld [vmem:[%s15 + $0x28] sm:$0xf]
        %v4710 = vld [vmem:[%s15 + $0x2c] sm:$0xf]
        %v4711 = vld [vmem:[%s15 + $0x30] sm:$0xf]
        %v4712 = vld [vmem:[%s15 + $0x34] sm:$0xf]
        %v4713 = vld [vmem:[%s15 + $0x38] sm:$0xf]
        %v4714 = vld [vmem:[%s15 + $0x3c] sm:$0xf]
        %v4715 = vld [vmem:[%s15 + $0x40] sm:$0xf]
        %v4716 = vld [vmem:[%s15 + $0x44] sm:$0xf]
        %v4717 = vld [vmem:[%s15 + $0x48] sm:$0xf]
        %v4718 = vld [vmem:[%s15 + $0x4c] sm:$0xf]
        %v4719 = vld [vmem:[%s15 + $0x50] sm:$0xf]
        %v4720 = vld [vmem:[%s15 + $0x54] sm:$0xf]
        %v4721 = vld [vmem:[%s15 + $0x58] sm:$0xf]
        %v4722 = vld [vmem:[%s15 + $0x5c] sm:$0xf]
        %v4723 = vld [vmem:[%s15 + $0x60] sm:$0xf]
        %v4724 = vld [vmem:[%s15 + $0x64] sm:$0xf]
        %v4725 = vld [vmem:[%s15 + $0x68] sm:$0xf]
        %v4726 = vld [vmem:[%s15 + $0x6c] sm:$0xf]
        %v4727 = vld [vmem:[%s15 + $0x70] sm:$0xf]
        %v4728 = vld [vmem:[%s15 + $0x74] sm:$0xf]
        %v4729 = vld [vmem:[%s15 + $0x78] sm:$0xf]
        %v4730 = vld [vmem:[%s15 + $0x7c] sm:$0xf]
        %v4731 = vld [vmem:[%s15 + $0x80] sm:$0xf]
        %v4732 = vld [vmem:[%s15 + $0x84] sm:$0xf]
        %v4733 = vld [vmem:[%s15 + $0x88] sm:$0xf]
        %v4734 = vld [vmem:[%s15 + $0x8c] sm:$0xf]
        %v4735 = vld [vmem:[%s15 + $0x90] sm:$0xf]
        %v4736 = vld [vmem:[%s15 + $0x94] sm:$0xf]
        %v4737 = vld [vmem:[%s15 + $0x98] sm:$0xf]
        %v4738 = vld [vmem:[%s15 + $0x9c] sm:$0xf]
        %v4739 = vld [vmem:[%s15 + $0xa0] sm:$0xf]
        %v4740 = vld [vmem:[%s15 + $0xa4] sm:$0xf]
        %v4741 = vld [vmem:[%s15 + $0xa8] sm:$0xf]
        %v4742 = vld [vmem:[%s15 + $0xac] sm:$0xf]
        %v4743 = vld [vmem:[%s15 + $0xb0] sm:$0xf]
        %v4744 = vld [vmem:[%s15 + $0xb4] sm:$0xf]
        %v4745 = vld [vmem:[%s15 + $0xb8] sm:$0xf]
        %v4746 = vld [vmem:[%s15 + $0xbc] sm:$0xf]
        %v4747 = vld [vmem:[%s15 + $0xc0] sm:$0xf]
        %v4748 = vld [vmem:[%s15 + $0xc4] sm:$0xf]
        %v4749 = vld [vmem:[%s15 + $0xc8] sm:$0xf]
        %v4750 = vld [vmem:[%s15 + $0xcc] sm:$0xf]
        %v4751 = vld [vmem:[%s15 + $0xd0] sm:$0xf]
        %v4752 = vld [vmem:[%s15 + $0xd4] sm:$0xf]
        %v4753 = vld [vmem:[%s15 + $0xd8] sm:$0xf]
        %v4754 = vld [vmem:[%s15 + $0xdc] sm:$0xf]
        %v4755 = vld [vmem:[%s15 + $0xe0] sm:$0xf]
        %v4756 = vld [vmem:[%s15 + $0xe4] sm:$0xf]
        %v4757 = vld [vmem:[%s15 + $0xe8] sm:$0xf]
        %v4758 = vld [vmem:[%s15 + $0xec] sm:$0xf]
        %v4759 = vld [vmem:[%s15 + $0xf0] sm:$0xf]
        %v4760 = vld [vmem:[%s15 + $0xf4] sm:$0xf]
        %v4761 = vld [vmem:[%s15 + $0xf8] sm:$0xf]
        %v4762 = vld [vmem:[%s15 + $0xfc] sm:$0xf]
        %v4763 = vld [vmem:[%s16] sm:$0x1]
        %v4765 = vperm.slane %v4763, 0
        %v4831 = vunpack.c.l.b16 %v4699
        %v4832 = vunpack.c.l.b16 %v4700
        %v4833 = vunpack.c.l.b16 %v4701
        %v4834 = vunpack.c.l.b16 %v4702
        %v4835 = vunpack.c.l.b16 %v4703
        %v4836 = vunpack.c.l.b16 %v4704
        %v4837 = vunpack.c.l.b16 %v4705
        %v4838 = vunpack.c.l.b16 %v4706
        %v4839 = vunpack.c.l.b16 %v4707
        %v4840 = vunpack.c.l.b16 %v4708
        %v4841 = vunpack.c.l.b16 %v4709
        %v4842 = vunpack.c.l.b16 %v4710
        %v4843 = vunpack.c.l.b16 %v4711
        %v4844 = vunpack.c.l.b16 %v4712
        %v4845 = vunpack.c.l.b16 %v4713
        %v4846 = vunpack.c.l.b16 %v4714
        %v4847 = vunpack.c.l.b16 %v4715
        %v4848 = vunpack.c.l.b16 %v4716
        %v4849 = vunpack.c.l.b16 %v4717
        %v4850 = vunpack.c.l.b16 %v4718
        %v4851 = vunpack.c.l.b16 %v4719
        %v4852 = vunpack.c.l.b16 %v4720
        %v4853 = vunpack.c.l.b16 %v4721
        %v4854 = vunpack.c.l.b16 %v4722
        %v4855 = vunpack.c.l.b16 %v4723
        %v4856 = vunpack.c.l.b16 %v4724
        %v4857 = vunpack.c.l.b16 %v4725
        %v4858 = vunpack.c.l.b16 %v4726
        %v4859 = vunpack.c.l.b16 %v4727
        %v4860 = vunpack.c.l.b16 %v4728
        %v4861 = vunpack.c.l.b16 %v4729
        %v4862 = vunpack.c.l.b16 %v4730
        %v4863 = vunpack.c.l.b16 %v4731
        %v4864 = vunpack.c.l.b16 %v4732
        %v4865 = vunpack.c.l.b16 %v4733
        %v4866 = vunpack.c.l.b16 %v4734
        %v4867 = vunpack.c.l.b16 %v4735
        %v4868 = vunpack.c.l.b16 %v4736
        %v4869 = vunpack.c.l.b16 %v4737
        %v4870 = vunpack.c.l.b16 %v4738
        %v4871 = vunpack.c.l.b16 %v4739
        %v4872 = vunpack.c.l.b16 %v4740
        %v4873 = vunpack.c.l.b16 %v4741
        %v4874 = vunpack.c.l.b16 %v4742
        %v4875 = vunpack.c.l.b16 %v4743
        %v4876 = vunpack.c.l.b16 %v4744
        %v4877 = vunpack.c.l.b16 %v4745
        %v4878 = vunpack.c.l.b16 %v4746
        %v4879 = vunpack.c.l.b16 %v4747
        %v4880 = vunpack.c.l.b16 %v4748
        %v4881 = vunpack.c.l.b16 %v4749
        %v4882 = vunpack.c.l.b16 %v4750
        %v4883 = vunpack.c.l.b16 %v4751
        %v4884 = vunpack.c.l.b16 %v4752
        %v4885 = vunpack.c.l.b16 %v4753
        %v4886 = vunpack.c.l.b16 %v4754
        %v4887 = vunpack.c.l.b16 %v4755
        %v4888 = vunpack.c.l.b16 %v4756
        %v4889 = vunpack.c.l.b16 %v4757
        %v4890 = vunpack.c.l.b16 %v4758
        %v4891 = vunpack.c.l.b16 %v4759
        %v4892 = vunpack.c.l.b16 %v4760
        %v4893 = vunpack.c.l.b16 %v4761
        %v4894 = vunpack.c.l.b16 %v4762
        %v4895 = vpack.c.b16 %v4832, %v4831
        %v4896 = vpack.c.b16 %v4834, %v4833
        %v4897 = vpack.c.b16 %v4836, %v4835
        %v4898 = vpack.c.b16 %v4838, %v4837
        %v4899 = vpack.c.b16 %v4840, %v4839
        %v4900 = vpack.c.b16 %v4842, %v4841
        %v4901 = vpack.c.b16 %v4844, %v4843
        %v4902 = vpack.c.b16 %v4846, %v4845
        %v4903 = vpack.c.b16 %v4848, %v4847
        %v4904 = vpack.c.b16 %v4850, %v4849
        %v4905 = vpack.c.b16 %v4852, %v4851
        %v4906 = vpack.c.b16 %v4854, %v4853
        %v4907 = vpack.c.b16 %v4856, %v4855
        %v4908 = vpack.c.b16 %v4858, %v4857
        %v4909 = vpack.c.b16 %v4860, %v4859
        %v4910 = vpack.c.b16 %v4862, %v4861
        %v4911 = vpack.c.b16 %v4864, %v4863
        %v4912 = vpack.c.b16 %v4866, %v4865
        %v4913 = vpack.c.b16 %v4868, %v4867
        %v4914 = vpack.c.b16 %v4870, %v4869
        %v4915 = vpack.c.b16 %v4872, %v4871
        %v4916 = vpack.c.b16 %v4874, %v4873
        %v4917 = vpack.c.b16 %v4876, %v4875
        %v4918 = vpack.c.b16 %v4878, %v4877
        %v4919 = vpack.c.b16 %v4880, %v4879
        %v4920 = vpack.c.b16 %v4882, %v4881
        %v4921 = vpack.c.b16 %v4884, %v4883
        %v4922 = vpack.c.b16 %v4886, %v4885
        %v4923 = vpack.c.b16 %v4888, %v4887
        %v4924 = vpack.c.b16 %v4890, %v4889
        %v4925 = vpack.c.b16 %v4892, %v4891
        %v4926 = vpack.c.b16 %v4894, %v4893
        %4959 = vmatpush.bf16.msra.mxu0 %v4902
        %4960 = vmatpush.bf16.msra.mxu0 %v4901
        %4961 = vmatpush.bf16.msra.mxu0 %v4900
        %4962 = vmatpush.bf16.msra.mxu0 %v4899
        %4963 = vmatpush.bf16.msra.mxu0 %v4898
        %4964 = vmatpush.bf16.msra.mxu0 %v4897
        %4965 = vmatpush.bf16.msra.mxu0 %v4896
        %4966 = vmatpush.bf16.msra.mxu0 %v4895
        %4967 = vmatmul.bf16.gmra.mxu0 %v4683
        %v4968 = vpop.f32.mrf.mxu0
        %v4969 = vadd.f32 %v4765, %v4968
        %v4970 = vpop.f32.mrf.mxu0
        %v4971 = vadd.f32 %v4765, %v4970
        %4972 = vmatmul.bf16.gmra.mxu0 %v4687
        %v4973 = vpop.f32.mrf.mxu0
        %v4974 = vadd.f32 %v4765, %v4973
        %v4975 = vpop.f32.mrf.mxu0
        %v4976 = vadd.f32 %v4765, %v4975
        %4977 = vmatmul.bf16.gmra.mxu0 %v4691
        %v4978 = vpop.f32.mrf.mxu0
        %v4979 = vadd.f32 %v4765, %v4978
        %v4980 = vpop.f32.mrf.mxu0
        %v4981 = vadd.f32 %v4765, %v4980
        %4982 = vmatmul.bf16.gmra.mxu0 %v4695
        %v4983 = vpop.f32.mrf.mxu0
        %v4984 = vadd.f32 %v4765, %v4983
        %v4985 = vpop.f32.mrf.mxu0
        %v4986 = vadd.f32 %v4765, %v4985
        %4987 = vdwg.mxu0
        %4988 = vmatpush.bf16.msra.mxu0 %v4910
        %4989 = vmatpush.bf16.msra.mxu0 %v4909
        %4990 = vmatpush.bf16.msra.mxu0 %v4908
        %4991 = vmatpush.bf16.msra.mxu0 %v4907
        %4992 = vmatpush.bf16.msra.mxu0 %v4906
        %4993 = vmatpush.bf16.msra.mxu0 %v4905
        %4994 = vmatpush.bf16.msra.mxu0 %v4904
        %4995 = vmatpush.bf16.msra.mxu0 %v4903
        %4996 = vmatmul.bf16.gmra.mxu0 %v4684
        %v4997 = vpop.f32.mrf.mxu0
        %v4998 = vadd.f32 %v4969, %v4997
        %v4999 = vpop.f32.mrf.mxu0
        %v5000 = vadd.f32 %v4971, %v4999
        %5001 = vmatmul.bf16.gmra.mxu0 %v4688
        %v5002 = vpop.f32.mrf.mxu0
        %v5003 = vadd.f32 %v4974, %v5002
        %v5004 = vpop.f32.mrf.mxu0
        %v5005 = vadd.f32 %v4976, %v5004
        %5006 = vmatmul.bf16.gmra.mxu0 %v4692
        %v5007 = vpop.f32.mrf.mxu0
        %v5008 = vadd.f32 %v4979, %v5007
        %v5009 = vpop.f32.mrf.mxu0
        %v5010 = vadd.f32 %v4981, %v5009
        %5011 = vmatmul.bf16.gmra.mxu0 %v4696
        %v5012 = vpop.f32.mrf.mxu0
        %v5013 = vadd.f32 %v4984, %v5012
        %v5014 = vpop.f32.mrf.mxu0
        %v5015 = vadd.f32 %v4986, %v5014
        %5016 = vdwg.mxu0
        %5017 = vmatpush.bf16.msra.mxu0 %v4918
        %5018 = vmatpush.bf16.msra.mxu0 %v4917
        %5019 = vmatpush.bf16.msra.mxu0 %v4916
        %5020 = vmatpush.bf16.msra.mxu0 %v4915
        %5021 = vmatpush.bf16.msra.mxu0 %v4914
        %5022 = vmatpush.bf16.msra.mxu0 %v4913
        %5023 = vmatpush.bf16.msra.mxu0 %v4912
        %5024 = vmatpush.bf16.msra.mxu0 %v4911
        %5025 = vmatmul.bf16.gmra.mxu0 %v4685
        %v5026 = vpop.f32.mrf.mxu0
        %v5027 = vadd.f32 %v4998, %v5026
        %v5028 = vpop.f32.mrf.mxu0
        %v5029 = vadd.f32 %v5000, %v5028
        %5030 = vmatmul.bf16.gmra.mxu0 %v4689
        %v5031 = vpop.f32.mrf.mxu0
        %v5032 = vadd.f32 %v5003, %v5031
        %v5033 = vpop.f32.mrf.mxu0
        %v5034 = vadd.f32 %v5005, %v5033
        %5035 = vmatmul.bf16.gmra.mxu0 %v4693
        %v5036 = vpop.f32.mrf.mxu0
        %v5037 = vadd.f32 %v5008, %v5036
        %v5038 = vpop.f32.mrf.mxu0
        %v5039 = vadd.f32 %v5010, %v5038
        %5040 = vmatmul.bf16.gmra.mxu0 %v4697
        %v5041 = vpop.f32.mrf.mxu0
        %v5042 = vadd.f32 %v5013, %v5041
        %v5043 = vpop.f32.mrf.mxu0
        %v5044 = vadd.f32 %v5015, %v5043
        %5045 = vdwg.mxu0
        %5046 = vmatpush.bf16.msra.mxu0 %v4926
        %5047 = vmatpush.bf16.msra.mxu0 %v4925
        %5048 = vmatpush.bf16.msra.mxu0 %v4924
        %5049 = vmatpush.bf16.msra.mxu0 %v4923
        %5050 = vmatpush.bf16.msra.mxu0 %v4922
        %5051 = vmatpush.bf16.msra.mxu0 %v4921
        %5052 = vmatpush.bf16.msra.mxu0 %v4920
        %5053 = vmatpush.bf16.msra.mxu0 %v4919
        %5054 = vmatmul.bf16.gmra.mxu0 %v4686
        %v5055 = vpop.f32.mrf.mxu0
        %v5056 = vadd.f32 %v5027, %v5055
        %v5057 = vpop.f32.mrf.mxu0
        %v5058 = vadd.f32 %v5029, %v5057
        %5059 = vmatmul.bf16.gmra.mxu0 %v4690
        %v5060 = vpop.f32.mrf.mxu0
        %v5061 = vadd.f32 %v5032, %v5060
        %v5062 = vpop.f32.mrf.mxu0
        %v5063 = vadd.f32 %v5034, %v5062
        %5064 = vmatmul.bf16.gmra.mxu0 %v4694
        %v5065 = vpop.f32.mrf.mxu0
        %v5066 = vadd.f32 %v5037, %v5065
        %v5067 = vpop.f32.mrf.mxu0
        %v5068 = vadd.f32 %v5039, %v5067
        %5069 = vmatmul.bf16.gmra.mxu0 %v4698
        %v5070 = vpop.f32.mrf.mxu0
        %v5071 = vadd.f32 %v5042, %v5070
        %v5072 = vpop.f32.mrf.mxu0
        %v5073 = vadd.f32 %v5044, %v5072
        %5074 = vdwg.mxu0
        %v5075 = vadd.f32 %v2882, %v5056
        %v5076 = vadd.f32 %v2883, %v5058
        %v5077 = vadd.f32 %v2884, %v5061
        %v5078 = vadd.f32 %v2885, %v5063
        %v5079 = vadd.f32 %v2886, %v5066
        %v5080 = vadd.f32 %v2887, %v5068
        %v5081 = vadd.f32 %v2888, %v5071
        %v5082 = vadd.f32 %v2889, %v5073
        %5083 = vst [vmem:[%s735] sm:$0xff] %v5075
        %5084 = vst [vmem:[%s735 + $0x8] sm:$0xff] %v5076
        %5085 = vst [vmem:[%s735 + $0x10] sm:$0xff] %v5077
        %5086 = vst [vmem:[%s735 + $0x18] sm:$0xff] %v5078
        %5087 = vst [vmem:[%s735 + $0x20] sm:$0xff] %v5079
        %5088 = vst [vmem:[%s735 + $0x28] sm:$0xff] %v5080
        %5089 = vst [vmem:[%s735 + $0x30] sm:$0xff] %v5081
        %5090 = vst [vmem:[%s735 + $0x38] sm:$0xff] %v5082
        %s5091 = sand.u32 %s423, 1
        %s5092 = scalar_lea.sflag [#allocation7], %s5091
        %s5093 = sand.u32 %s423, 1
        %s5094 = smul.addr %s5093, 64
        %s5095 = scalar_lea.vmem [#allocation23], %s5094
        // Predicated region
        $region137: #{tpu_custom_call.1} parent=87 // pred_check
          %p5096 = pneg %p433
        $region138: #{tpu_custom_call.1} parent=87 // pred_check_branch
          %5098 = sbr.rel (%p5096) target = $region140
        $region139: #{tpu_custom_call.1} parent=87 // pred_region
          %s5099 = smul.u32 8, %s44
          %5101 = vsyncadd %s5092, 0
          %s5102 = smul.addr %s43, 16
          %s5103 = sadd.s32 %s5099, %s5102
          %s5104 = smul.addr %s5103, 8
          %s5105 = scalar_lea.hbm %s17, %s5104
          %s5106 = sshll.u32 %s5095, 4
          %s5107 = int_to_ptr.vmem [resolvable:$true] %s5106
          %s5108 = sshll.u32 %s5105, 4
          %s5109 = int_to_ptr.hbm [resolvable:$true] %s5108
          %5114 = dma.vmem_to_hbm [thread:$0]  %s5107, 1024, %s5109, %s5092, 128, 128, 8
        $region140: #{tpu_custom_call.1} parent=87 // pred_fallthru
          _
      $region88: #{tpu_custom_call.1} parent=5 // pred_fallthru
        _
      %p5115 = scmp.le.s32.totalorder 2, %s34
      // Predicated region
      $region141: #{tpu_custom_call.1} parent=5 // pred_check
        %p5116 = pneg %p5115
      $region142: #{tpu_custom_call.1} parent=5 // pred_check_branch
        %5118 = sbr.rel (%p5116) target = $region144
      $region143: #{tpu_custom_call.1} parent=5 // pred_region
        %s5119 = ssub.s32 %s34, 2
        // Predicated region
        $region145: #{tpu_custom_call.1} parent=143 // pred_check
          %p5120 = pneg %p439
        $region146: #{tpu_custom_call.1} parent=143 // pred_check_branch
          %5122 = sbr.rel (%p5120) target = $region148
        $region147: #{tpu_custom_call.1} parent=143 // pred_region
          %s5123 = sand.u32 %s424, 1
          %s5124 = scalar_lea.sflag [#allocation7], %s5123
          %s5125 = sand.u32 %s424, 1
          %s5126 = smul.addr %s5125, 64
          %s5127 = scalar_lea.vmem [#allocation23], %s5126
          %5129 = dma.done %s5124, 1024
        $region148: #{tpu_custom_call.1} parent=143 // pred_fallthru
          _
      $region144: #{tpu_custom_call.1} parent=5 // pred_fallthru
        _
    $region6: #{tpu_custom_call.1} parent=1 // loop_footer
      %s38 = sadd.s32 1, %s34
    $region7: #{tpu_custom_call.1} parent=1 // loop_footer_branch
      %33 = sbr.rel target = $region3
    $region8: #{tpu_custom_call.1} parent=1 // loop_exit
      _
    %5130 = vsyncpa [#allocation6], 1
    %s5131 = scalar_lea.sflag [#allocation6], 1
    %5132 = vsyncpa %s5131, 1
    %5133 = vsyncpa [#allocation9], 1
    %5134 = vsyncpa [#allocation12], 1
    %5135 = vsyncpa [#allocation15], 1
    %5136 = vsyncpa [#allocation18], 1
    %5137 = vsyncpa [#allocation21], 1
    %5138 = vsyncpa [#allocation7], 1
    %s5139 = scalar_lea.sflag [#allocation7], 1
    %5140 = vsyncpa %s5139, 1

</llo_original>
